<compile_context>
chip_gen: v7x
topology: tpu7x:2x2x1
jax: 0.10.0
libtpu: 0.0.40
codegen_flags: <defaults>
</compile_context>

<pallas_src>
import jax
import jax.numpy as jnp
from jax.experimental import pallas as pl
from jax.experimental.pallas import tpu as pltpu

# ----------------------------- model sizes ---------------------------------
B = 8            # batch (power of two: batch mask uses bitwise AND)
TX = 8           # encoder (question) length
TY = 8           # decoder (program) length
N_NODES = 4      # graph nodes (pre-trained embedding rows)
G_DIM = 32       # graph embedding dim
E_DIM = 128      # token embedding dim
H_DIM = 128      # GRU hidden dim
V_DIM = 128      # vocab size (input and output)

assert (B & (B - 1)) == 0, "B must be a power of two (attention batch mask)"

CDT = jnp.bfloat16   # MXU operand dtype (accumulate in f32, gates in f32)


# ----------------------------- GRU cell --------------------------------------
def _gru_step(gi, h, w_hh, b_hh):
    """PyTorch-convention GRU cell with the input projection pre-computed.
    gi: [B, 3H] f32 (= x @ W_ih + b_ih), h: [B, H] f32 -> new h [B, H] f32."""
    gh = jnp.dot(h.astype(w_hh.dtype), w_hh,
                 preferred_element_type=jnp.float32) + b_hh
    i_r, i_z, i_n = gi[:, :H_DIM], gi[:, H_DIM:2 * H_DIM], gi[:, 2 * H_DIM:]
    h_r, h_z, h_n = gh[:, :H_DIM], gh[:, H_DIM:2 * H_DIM], gh[:, 2 * H_DIM:]
    r = jax.nn.sigmoid(i_r + h_r)
    z = jax.nn.sigmoid(i_z + h_z)
    n = jnp.tanh(i_n + r * h_n)
    return (1.0 - z) * n + z * h


# ----------------------------- fused kernel ----------------------------------
def _seq2seq_kernel(ids_ref, g_ref, emb_ref,
                    ew_tok_ref, ew_g_ref, ew_hh_ref, eb_ih_ref, eb_hh_ref,
                    dw_ih_ref, dw_hh_ref, db_ih_ref, db_hh_ref,
                    wo_ref, bo_ref,
                    out_ref):
    f32 = jnp.float32
    neg_big = jnp.float32(-1e30)

    # ---- 0. Fused embedding lookup: one-hot @ stacked table on the MXU ------
    # ids: x tokens in [0, V), y tokens shifted by +V -> one shared table pass.
    ids = ids_ref[...]                                           # [(TX+TY)*B, 1] i32
    vocab_iota = jax.lax.broadcasted_iota(
        jnp.int32, ((TX + TY) * B, 2 * V_DIM), 1)
    onehot = jnp.where(ids == vocab_iota, 1.0, 0.0).astype(CDT)  # [(TX+TY)*B, 2V]
    emb = jnp.dot(onehot, emb_ref[...],
                  preferred_element_type=f32).astype(CDT)        # [(TX+TY)*B, E]
    emb_x = emb[: TX * B]                                        # [TX*B, E] bf16
    emb_y = emb[TX * B:]                                         # [TY*B, E] bf16

    # ---- 1. GNN pre-trained path: g_embd = mean(g_data, dim=1) --------------
    g_embd = jnp.mean(g_ref[...].astype(f32), axis=1)            # [B, G]

    # ---- 2. Encoder ----------------------------------------------------------
    # Hoisted input projection for ALL timesteps plus one graph-embedding
    # projection — equivalent to concat([emb; g_embd]) @ W_ih.
    gi_x = jnp.dot(emb_x, ew_tok_ref[...],
                   preferred_element_type=f32)                   # [TX*B, 3H]
    gi_g = jnp.dot(g_embd.astype(CDT), ew_g_ref[...],
                   preferred_element_type=f32)                   # [B, 3H]
    gi_enc = gi_x.reshape(TX, B, 3 * H_DIM) + gi_g + eb_ih_ref[...]

    e_whh = ew_hh_ref[...]
    e_bhh = eb_hh_ref[...]
    h = jnp.zeros((B, H_DIM), f32)
    enc_steps = []                     # per-step hidden states kept in vregs
    for t in range(TX):                # static unroll; only h @ W_hh is serial
        h = _gru_step(gi_enc[t], h, e_whh, e_bhh)
        enc_steps.append(h)
    enc2d = jnp.concatenate(enc_steps, axis=0).astype(CDT)       # [TX*B, H]
    enc_hidden = h                                               # last state

    # ---- 3. Decoder GRU recurrence (input projection hoisted) ---------------
    gi_dec = (jnp.dot(emb_y, dw_ih_ref[...], preferred_element_type=f32)
              .reshape(TY, B, 3 * H_DIM) + db_ih_ref[...])
    d_whh = dw_hh_ref[...]
    d_bhh = db_hh_ref[...]
    h = enc_hidden
    dec_steps = []
    for t in range(TY):
        h = _gru_step(gi_dec[t], h, d_whh, d_bhh)
        dec_steps.append(h)
    hdec2d = jnp.concatenate(dec_steps, axis=0).astype(CDT)      # [TY*B, H]

    # ---- 4. Attention as two masked MXU matmuls ------------------------------
    # Rows are t-major (row = t*B + b); a row/col batch mask keeps only the
    # entries with matching batch index, so the softmax runs lane-dense over
    # TX*B columns and P has exact zeros at invalid columns (ctx stays exact).
    scores = jax.lax.dot_general(hdec2d, enc2d,
                                 (((1,), (1,)), ((), ())),
                                 preferred_element_type=f32)     # [TY*B, TX*B]
    r_idx = jax.lax.broadcasted_iota(jnp.int32, (TY * B, TX * B), 0)
    c_idx = jax.lax.broadcasted_iota(jnp.int32, (TY * B, TX * B), 1)
    same_batch = (r_idx & (B - 1)) == (c_idx & (B - 1))
    scores = jnp.where(same_batch, scores, neg_big)
    m = jnp.max(scores, axis=-1, keepdims=True)
    p = jnp.exp(scores - m)                                      # 0 at masked cols
    denom = jnp.sum(p, axis=-1, keepdims=True)
    attn = p * pl.reciprocal(denom, approx=True)                 # [TY*B, TX*B]
    ctx = jnp.dot(attn.astype(CDT), enc2d,
                  preferred_element_type=f32)                    # [TY*B, H]

    # ---- 5. Output projection + log_softmax ----------------------------------
    feat = jnp.concatenate([hdec2d, ctx.astype(CDT)], axis=1)    # [TY*B, 2H]
    logits = jnp.dot(feat, wo_ref[...],
                     preferred_element_type=f32) + bo_ref[...]   # [TY*B, V]
    lmax = jnp.max(logits, axis=-1, keepdims=True)
    shifted = logits - lmax
    logz = jnp.log(jnp.sum(jnp.exp(shifted), axis=-1, keepdims=True))
    logp = (shifted - logz).reshape(TY, B, V_DIM)

    # Write directly in (B, TY, V) layout: one full [TY, V] = [8, 128]
    # lane-dense tile store per batch element (no wrapper transpose needed).
    for b in range(B):
        out_ref[b] = logp[:, b, :].astype(out_ref.dtype)


# ----------------------------- wrapper ---------------------------------------
@jax.jit
def seq2seq_gnn_forward(x_ids, y_ids, g_data, kp):
    """Mirrors Seq2seqGNN.forward(x, y, g_data).  Returns [B, TY, V] log-probs.

    kp: pre-packed kernel params (see pack_params) — bf16 MXU weights, f32
    biases, stacked embedding table.  Everything else happens in ONE kernel."""
    # Only tiny int32 index plumbing remains outside the kernel.
    ids_x = jnp.transpose(x_ids, (1, 0)).reshape(TX * B)         # t-major
    ids_y = jnp.transpose(y_ids, (1, 0)).reshape(TY * B)
    ids_all = jnp.concatenate([ids_x, ids_y + V_DIM]).astype(jnp.int32)[:, None]

    return pl.pallas_call(
        _seq2seq_kernel,
        out_shape=jax.ShapeDtypeStruct((B, TY, V_DIM), jnp.float32),
    )(ids_all, g_data, kp["emb_cat"],
      kp["enc_w_tok"], kp["enc_w_g"], kp["enc_w_hh"],
      kp["enc_b_ih"], kp["enc_b_hh"],
      kp["dec_w_ih"], kp["dec_w_hh"], kp["dec_b_ih"], kp["dec_b_hh"],
      kp["w_out"], kp["b_out"])


# ----------------------------- parameter init -------------------------------
def init_params(key):
    """Logical (PyTorch-like) parameters, all f32."""
    ks = jax.random.split(key, 13)
    s = 0.05
    f32 = jnp.float32
    return {
        "enc_embed": s * jax.random.normal(ks[0], (V_DIM, E_DIM), f32),
        "dec_embed": s * jax.random.normal(ks[1], (V_DIM, E_DIM), f32),
        # enc W_ih split into token part [E,3H] and graph part [G,3H]
        # (equivalent to the concatenated [E+G, 3H] weight).
        "enc_w_tok": s * jax.random.normal(ks[2], (E_DIM, 3 * H_DIM), f32),
        "enc_w_g":   s * jax.random.normal(ks[3], (G_DIM, 3 * H_DIM), f32),
        "enc_w_hh":  s * jax.random.normal(ks[4], (H_DIM, 3 * H_DIM), f32),
        "enc_b_ih":  s * jax.random.normal(ks[5], (1, 3 * H_DIM), f32),
        "enc_b_hh":  s * jax.random.normal(ks[6], (1, 3 * H_DIM), f32),
        "dec_w_ih":  s * jax.random.normal(ks[7], (E_DIM, 3 * H_DIM), f32),
        "dec_w_hh":  s * jax.random.normal(ks[8], (H_DIM, 3 * H_DIM), f32),
        "dec_b_ih":  s * jax.random.normal(ks[9], (1, 3 * H_DIM), f32),
        "dec_b_hh":  s * jax.random.normal(ks[10], (1, 3 * H_DIM), f32),
        "w_out":     s * jax.random.normal(ks[11], (2 * H_DIM, V_DIM), f32),
        "b_out":     s * jax.random.normal(ks[12], (1, V_DIM), f32),
    }


def pack_params(p):
    """One-time (outside jit) packing/casting into kernel-ready layout:
    bf16 MXU operands, f32 biases, stacked [enc_embed; dec_embed] table."""
    return {
        "emb_cat":   jnp.concatenate([p["enc_embed"], p["dec_embed"]],
                                     axis=0).astype(CDT),        # [2V, E]
        "enc_w_tok": p["enc_w_tok"].astype(CDT),
        "enc_w_g":   p["enc_w_g"].astype(CDT),
        "enc_w_hh":  p["enc_w_hh"].astype(CDT),
        "enc_b_ih":  p["enc_b_ih"],
        "enc_b_hh":  p["enc_b_hh"],
        "dec_w_ih":  p["dec_w_ih"].astype(CDT),
        "dec_w_hh":  p["dec_w_hh"].astype(CDT),
        "dec_b_ih":  p["dec_b_ih"],
        "dec_b_hh":  p["dec_b_hh"],
        "w_out":     p["w_out"].astype(CDT),
        "b_out":     p["b_out"],
    }


# ----------------------------- main ------------------------------------------
if __name__ == "__main__":
    key = jax.random.PRNGKey(0)
    k_p, k_x, k_y, k_g = jax.random.split(key, 4)

    params = init_params(k_p)
    kparams = pack_params(params)          # cast/pack ONCE, outside jit

    x_ids = jax.random.randint(k_x, (B, TX), 0, V_DIM, dtype=jnp.int32)
    y_ids = jax.random.randint(k_y, (B, TY), 0, V_DIM, dtype=jnp.int32)
    g_data = jax.random.normal(k_g, (B, N_NODES, G_DIM), jnp.float32)

    dec_outputs = seq2seq_gnn_forward(x_ids, y_ids, g_data, kparams)
    jax.block_until_ready(dec_outputs)

    assert dec_outputs.shape == (B, TY, V_DIM)
    # rows of log_softmax must (approximately) normalize to 1 in prob space
    probs_sum = jnp.exp(dec_outputs).sum(-1)
    assert jnp.allclose(probs_sum, 1.0, atol=1e-3)
    assert bool(jnp.all(jnp.isfinite(dec_outputs)))

    print("KERNEL_OK")
</pallas_src>

<mosaic_0001>
module attributes {stable_mosaic.version = 11 : i64} {
  func.func @_seq2seq_kernel(%arg0: memref<128x1xi32, #tpu.memory_space<vmem>>, %arg1: memref<8x4x32xf32, #tpu.memory_space<vmem>>, %arg2: memref<256x128xbf16, #tpu.memory_space<vmem>>, %arg3: memref<128x384xbf16, #tpu.memory_space<vmem>>, %arg4: memref<32x384xbf16, #tpu.memory_space<vmem>>, %arg5: memref<128x384xbf16, #tpu.memory_space<vmem>>, %arg6: memref<1x384xf32, #tpu.memory_space<vmem>>, %arg7: memref<1x384xf32, #tpu.memory_space<vmem>>, %arg8: memref<128x384xbf16, #tpu.memory_space<vmem>>, %arg9: memref<128x384xbf16, #tpu.memory_space<vmem>>, %arg10: memref<1x384xf32, #tpu.memory_space<vmem>>, %arg11: memref<1x384xf32, #tpu.memory_space<vmem>>, %arg12: memref<256x128xbf16, #tpu.memory_space<vmem>>, %arg13: memref<1x128xf32, #tpu.memory_space<vmem>>, %arg14: memref<8x8x128xf32, #tpu.memory_space<vmem>>) attributes {dimension_semantics = [], scalar_prefetch = 0 : i64, scratch_operands = 0 : i64, tpu.core_type = #tpu.core_type<tc>} {
    %c0 = arith.constant 0 : index
    %c0_0 = arith.constant 0 : index
    %0 = vector.load %arg0[%c0, %c0_0] : memref<128x1xi32, #tpu.memory_space<vmem>>, vector<128x1xi32>
    %1 = tpu.iota {dimensions = array<i32: 1>} : vector<128x256xi32>
    %2 = vector.broadcast %0 : vector<128x1xi32> to vector<128x256xi32>
    %3 = arith.cmpi eq, %2, %1 : vector<128x256xi32>
    %cst = arith.constant 1.000000e+00 : f32
    %cst_1 = arith.constant 0.000000e+00 : f32
    %4 = vector.broadcast %cst : f32 to vector<128x256xf32>
    %5 = vector.broadcast %cst_1 : f32 to vector<128x256xf32>
    %6 = arith.select %3, %4, %5 : vector<128x256xi1>, vector<128x256xf32>
    %7 = arith.truncf %6 : vector<128x256xf32> to vector<128x256xbf16>
    %c0_2 = arith.constant 0 : index
    %c0_3 = arith.constant 0 : index
    %8 = vector.load %arg2[%c0_2, %c0_3] : memref<256x128xbf16, #tpu.memory_space<vmem>>, vector<256x128xbf16>
    %cst_4 = arith.constant dense<0.000000e+00> : vector<128x128xf32>
    %9 = tpu.matmul %7, %8, %cst_4 {dimension_numbers = #tpu.dot_dimension_numbers<[1], [0], [0], [1], [0, 0, 1, 1], [], []>} : vector<128x256xbf16>, vector<256x128xbf16>, vector<128x128xf32> -> vector<128x128xf32>
    %10 = arith.truncf %9 : vector<128x128xf32> to vector<128x128xbf16>
    %11 = vector.extract_strided_slice %10 {offsets = [0, 0], sizes = [64, 128], strides = [1, 1]} : vector<128x128xbf16> to vector<64x128xbf16>
    %12 = vector.extract_strided_slice %10 {offsets = [64, 0], sizes = [64, 128], strides = [1, 1]} : vector<128x128xbf16> to vector<64x128xbf16>
    %c0_5 = arith.constant 0 : index
    %c0_6 = arith.constant 0 : index
    %c0_7 = arith.constant 0 : index
    %13 = vector.load %arg1[%c0_5, %c0_6, %c0_7] : memref<8x4x32xf32, #tpu.memory_space<vmem>>, vector<8x4x32xf32>
    %cst_8 = arith.constant dense<0.000000e+00> : vector<8x32xf32>
    %14 = vector.multi_reduction <add>, %13, %cst_8 [1] : vector<8x4x32xf32> to vector<8x32xf32>
    %cst_9 = arith.constant 4.000000e+00 : f32
    %15 = vector.broadcast %cst_9 : f32 to vector<8x32xf32>
    %16 = arith.divf %14, %15 : vector<8x32xf32>
    %c0_10 = arith.constant 0 : index
    %c0_11 = arith.constant 0 : index
    %17 = vector.load %arg3[%c0_10, %c0_11] : memref<128x384xbf16, #tpu.memory_space<vmem>>, vector<128x384xbf16>
    %cst_12 = arith.constant dense<0.000000e+00> : vector<64x384xf32>
    %18 = tpu.matmul %11, %17, %cst_12 {dimension_numbers = #tpu.dot_dimension_numbers<[1], [0], [0], [1], [0, 0, 1, 1], [], []>} : vector<64x128xbf16>, vector<128x384xbf16>, vector<64x384xf32> -> vector<64x384xf32>
    %19 = arith.truncf %16 : vector<8x32xf32> to vector<8x32xbf16>
    %c0_13 = arith.constant 0 : index
    %c0_14 = arith.constant 0 : index
    %20 = vector.load %arg4[%c0_13, %c0_14] : memref<32x384xbf16, #tpu.memory_space<vmem>>, vector<32x384xbf16>
    %cst_15 = arith.constant dense<0.000000e+00> : vector<8x384xf32>
    %21 = tpu.matmul %19, %20, %cst_15 {dimension_numbers = #tpu.dot_dimension_numbers<[1], [0], [0], [1], [0, 0, 1, 1], [], []>} : vector<8x32xbf16>, vector<32x384xbf16>, vector<8x384xf32> -> vector<8x384xf32>
    %22 = vector.shape_cast %18 : vector<64x384xf32> to vector<8x8x384xf32>
    %23 = vector.shape_cast %21 : vector<8x384xf32> to vector<1x8x384xf32>
    %24 = vector.broadcast %23 : vector<1x8x384xf32> to vector<8x8x384xf32>
    %25 = arith.addf %22, %24 : vector<8x8x384xf32>
    %c0_16 = arith.constant 0 : index
    %c0_17 = arith.constant 0 : index
    %26 = vector.load %arg6[%c0_16, %c0_17] : memref<1x384xf32, #tpu.memory_space<vmem>>, vector<1x384xf32>
    %27 = vector.shape_cast %26 : vector<1x384xf32> to vector<1x1x384xf32>
    %28 = vector.broadcast %27 : vector<1x1x384xf32> to vector<8x8x384xf32>
    %29 = arith.addf %25, %28 : vector<8x8x384xf32>
    %c0_18 = arith.constant 0 : index
    %c0_19 = arith.constant 0 : index
    %30 = vector.load %arg5[%c0_18, %c0_19] : memref<128x384xbf16, #tpu.memory_space<vmem>>, vector<128x384xbf16>
    %c0_20 = arith.constant 0 : index
    %c0_21 = arith.constant 0 : index
    %31 = vector.load %arg7[%c0_20, %c0_21] : memref<1x384xf32, #tpu.memory_space<vmem>>, vector<1x384xf32>
    %cst_22 = arith.constant 0.000000e+00 : f32
    %32 = vector.broadcast %cst_22 : f32 to vector<8x128xf32>
    %33 = vector.extract_strided_slice %29 {offsets = [0, 0, 0], sizes = [1, 8, 384], strides = [1, 1, 1]} : vector<8x8x384xf32> to vector<1x8x384xf32>
    %34 = vector.shape_cast %33 : vector<1x8x384xf32> to vector<8x384xf32>
    %35 = arith.truncf %32 : vector<8x128xf32> to vector<8x128xbf16>
    %cst_23 = arith.constant dense<0.000000e+00> : vector<8x384xf32>
    %36 = tpu.matmul %35, %30, %cst_23 {dimension_numbers = #tpu.dot_dimension_numbers<[1], [0], [0], [1], [0, 0, 1, 1], [], []>} : vector<8x128xbf16>, vector<128x384xbf16>, vector<8x384xf32> -> vector<8x384xf32>
    %37 = vector.broadcast %31 : vector<1x384xf32> to vector<8x384xf32>
    %38 = arith.addf %36, %37 : vector<8x384xf32>
    %39 = vector.extract_strided_slice %34 {offsets = [0, 0], sizes = [8, 128], strides = [1, 1]} : vector<8x384xf32> to vector<8x128xf32>
    %40 = vector.extract_strided_slice %34 {offsets = [0, 128], sizes = [8, 128], strides = [1, 1]} : vector<8x384xf32> to vector<8x128xf32>
    %41 = vector.extract_strided_slice %34 {offsets = [0, 256], sizes = [8, 128], strides = [1, 1]} : vector<8x384xf32> to vector<8x128xf32>
    %42 = vector.extract_strided_slice %38 {offsets = [0, 0], sizes = [8, 128], strides = [1, 1]} : vector<8x384xf32> to vector<8x128xf32>
    %43 = vector.extract_strided_slice %38 {offsets = [0, 128], sizes = [8, 128], strides = [1, 1]} : vector<8x384xf32> to vector<8x128xf32>
    %44 = vector.extract_strided_slice %38 {offsets = [0, 256], sizes = [8, 128], strides = [1, 1]} : vector<8x384xf32> to vector<8x128xf32>
    %45 = arith.addf %39, %42 : vector<8x128xf32>
    %46 = arith.negf %45 : vector<8x128xf32>
    %47 = math.exp %46 : vector<8x128xf32>
    %cst_24 = arith.constant 1.000000e+00 : f32
    %48 = vector.broadcast %cst_24 : f32 to vector<8x128xf32>
    %49 = arith.addf %48, %47 : vector<8x128xf32>
    %50 = arith.divf %48, %49 : vector<8x128xf32>
    %51 = arith.addf %40, %43 : vector<8x128xf32>
    %52 = arith.negf %51 : vector<8x128xf32>
    %53 = math.exp %52 : vector<8x128xf32>
    %cst_25 = arith.constant 1.000000e+00 : f32
    %54 = vector.broadcast %cst_25 : f32 to vector<8x128xf32>
    %55 = arith.addf %54, %53 : vector<8x128xf32>
    %56 = arith.divf %54, %55 : vector<8x128xf32>
    %57 = arith.mulf %50, %44 : vector<8x128xf32>
    %58 = arith.addf %41, %57 : vector<8x128xf32>
    %59 = math.tanh %58 : vector<8x128xf32>
    %cst_26 = arith.constant 1.000000e+00 : f32
    %60 = vector.broadcast %cst_26 : f32 to vector<8x128xf32>
    %61 = arith.subf %60, %56 : vector<8x128xf32>
    %62 = arith.mulf %61, %59 : vector<8x128xf32>
    %63 = arith.mulf %56, %32 : vector<8x128xf32>
    %64 = arith.addf %62, %63 : vector<8x128xf32>
    %65 = vector.extract_strided_slice %29 {offsets = [1, 0, 0], sizes = [1, 8, 384], strides = [1, 1, 1]} : vector<8x8x384xf32> to vector<1x8x384xf32>
    %66 = vector.shape_cast %65 : vector<1x8x384xf32> to vector<8x384xf32>
    %67 = arith.truncf %64 : vector<8x128xf32> to vector<8x128xbf16>
    %cst_27 = arith.constant dense<0.000000e+00> : vector<8x384xf32>
    %68 = tpu.matmul %67, %30, %cst_27 {dimension_numbers = #tpu.dot_dimension_numbers<[1], [0], [0], [1], [0, 0, 1, 1], [], []>} : vector<8x128xbf16>, vector<128x384xbf16>, vector<8x384xf32> -> vector<8x384xf32>
    %69 = vector.broadcast %31 : vector<1x384xf32> to vector<8x384xf32>
    %70 = arith.addf %68, %69 : vector<8x384xf32>
    %71 = vector.extract_strided_slice %66 {offsets = [0, 0], sizes = [8, 128], strides = [1, 1]} : vector<8x384xf32> to vector<8x128xf32>
    %72 = vector.extract_strided_slice %66 {offsets = [0, 128], sizes = [8, 128], strides = [1, 1]} : vector<8x384xf32> to vector<8x128xf32>
    %73 = vector.extract_strided_slice %66 {offsets = [0, 256], sizes = [8, 128], strides = [1, 1]} : vector<8x384xf32> to vector<8x128xf32>
    %74 = vector.extract_strided_slice %70 {offsets = [0, 0], sizes = [8, 128], strides = [1, 1]} : vector<8x384xf32> to vector<8x128xf32>
    %75 = vector.extract_strided_slice %70 {offsets = [0, 128], sizes = [8, 128], strides = [1, 1]} : vector<8x384xf32> to vector<8x128xf32>
    %76 = vector.extract_strided_slice %70 {offsets = [0, 256], sizes = [8, 128], strides = [1, 1]} : vector<8x384xf32> to vector<8x128xf32>
    %77 = arith.addf %71, %74 : vector<8x128xf32>
    %78 = arith.negf %77 : vector<8x128xf32>
    %79 = math.exp %78 : vector<8x128xf32>
    %cst_28 = arith.constant 1.000000e+00 : f32
    %80 = vector.broadcast %cst_28 : f32 to vector<8x128xf32>
    %81 = arith.addf %80, %79 : vector<8x128xf32>
    %82 = arith.divf %80, %81 : vector<8x128xf32>
    %83 = arith.addf %72, %75 : vector<8x128xf32>
    %84 = arith.negf %83 : vector<8x128xf32>
    %85 = math.exp %84 : vector<8x128xf32>
    %cst_29 = arith.constant 1.000000e+00 : f32
    %86 = vector.broadcast %cst_29 : f32 to vector<8x128xf32>
    %87 = arith.addf %86, %85 : vector<8x128xf32>
    %88 = arith.divf %86, %87 : vector<8x128xf32>
    %89 = arith.mulf %82, %76 : vector<8x128xf32>
    %90 = arith.addf %73, %89 : vector<8x128xf32>
    %91 = math.tanh %90 : vector<8x128xf32>
    %cst_30 = arith.constant 1.000000e+00 : f32
    %92 = vector.broadcast %cst_30 : f32 to vector<8x128xf32>
    %93 = arith.subf %92, %88 : vector<8x128xf32>
    %94 = arith.mulf %93, %91 : vector<8x128xf32>
    %95 = arith.mulf %88, %64 : vector<8x128xf32>
    %96 = arith.addf %94, %95 : vector<8x128xf32>
    %97 = vector.extract_strided_slice %29 {offsets = [2, 0, 0], sizes = [1, 8, 384], strides = [1, 1, 1]} : vector<8x8x384xf32> to vector<1x8x384xf32>
    %98 = vector.shape_cast %97 : vector<1x8x384xf32> to vector<8x384xf32>
    %99 = arith.truncf %96 : vector<8x128xf32> to vector<8x128xbf16>
    %cst_31 = arith.constant dense<0.000000e+00> : vector<8x384xf32>
    %100 = tpu.matmul %99, %30, %cst_31 {dimension_numbers = #tpu.dot_dimension_numbers<[1], [0], [0], [1], [0, 0, 1, 1], [], []>} : vector<8x128xbf16>, vector<128x384xbf16>, vector<8x384xf32> -> vector<8x384xf32>
    %101 = vector.broadcast %31 : vector<1x384xf32> to vector<8x384xf32>
    %102 = arith.addf %100, %101 : vector<8x384xf32>
    %103 = vector.extract_strided_slice %98 {offsets = [0, 0], sizes = [8, 128], strides = [1, 1]} : vector<8x384xf32> to vector<8x128xf32>
    %104 = vector.extract_strided_slice %98 {offsets = [0, 128], sizes = [8, 128], strides = [1, 1]} : vector<8x384xf32> to vector<8x128xf32>
    %105 = vector.extract_strided_slice %98 {offsets = [0, 256], sizes = [8, 128], strides = [1, 1]} : vector<8x384xf32> to vector<8x128xf32>
    %106 = vector.extract_strided_slice %102 {offsets = [0, 0], sizes = [8, 128], strides = [1, 1]} : vector<8x384xf32> to vector<8x128xf32>
    %107 = vector.extract_strided_slice %102 {offsets = [0, 128], sizes = [8, 128], strides = [1, 1]} : vector<8x384xf32> to vector<8x128xf32>
    %108 = vector.extract_strided_slice %102 {offsets = [0, 256], sizes = [8, 128], strides = [1, 1]} : vector<8x384xf32> to vector<8x128xf32>
    %109 = arith.addf %103, %106 : vector<8x128xf32>
    %110 = arith.negf %109 : vector<8x128xf32>
    %111 = math.exp %110 : vector<8x128xf32>
    %cst_32 = arith.constant 1.000000e+00 : f32
    %112 = vector.broadcast %cst_32 : f32 to vector<8x128xf32>
    %113 = arith.addf %112, %111 : vector<8x128xf32>
    %114 = arith.divf %112, %113 : vector<8x128xf32>
    %115 = arith.addf %104, %107 : vector<8x128xf32>
    %116 = arith.negf %115 : vector<8x128xf32>
    %117 = math.exp %116 : vector<8x128xf32>
    %cst_33 = arith.constant 1.000000e+00 : f32
    %118 = vector.broadcast %cst_33 : f32 to vector<8x128xf32>
    %119 = arith.addf %118, %117 : vector<8x128xf32>
    %120 = arith.divf %118, %119 : vector<8x128xf32>
    %121 = arith.mulf %114, %108 : vector<8x128xf32>
    %122 = arith.addf %105, %121 : vector<8x128xf32>
    %123 = math.tanh %122 : vector<8x128xf32>
    %cst_34 = arith.constant 1.000000e+00 : f32
    %124 = vector.broadcast %cst_34 : f32 to vector<8x128xf32>
    %125 = arith.subf %124, %120 : vector<8x128xf32>
    %126 = arith.mulf %125, %123 : vector<8x128xf32>
    %127 = arith.mulf %120, %96 : vector<8x128xf32>
    %128 = arith.addf %126, %127 : vector<8x128xf32>
    %129 = vector.extract_strided_slice %29 {offsets = [3, 0, 0], sizes = [1, 8, 384], strides = [1, 1, 1]} : vector<8x8x384xf32> to vector<1x8x384xf32>
    %130 = vector.shape_cast %129 : vector<1x8x384xf32> to vector<8x384xf32>
    %131 = arith.truncf %128 : vector<8x128xf32> to vector<8x128xbf16>
    %cst_35 = arith.constant dense<0.000000e+00> : vector<8x384xf32>
    %132 = tpu.matmul %131, %30, %cst_35 {dimension_numbers = #tpu.dot_dimension_numbers<[1], [0], [0], [1], [0, 0, 1, 1], [], []>} : vector<8x128xbf16>, vector<128x384xbf16>, vector<8x384xf32> -> vector<8x384xf32>
    %133 = vector.broadcast %31 : vector<1x384xf32> to vector<8x384xf32>
    %134 = arith.addf %132, %133 : vector<8x384xf32>
    %135 = vector.extract_strided_slice %130 {offsets = [0, 0], sizes = [8, 128], strides = [1, 1]} : vector<8x384xf32> to vector<8x128xf32>
    %136 = vector.extract_strided_slice %130 {offsets = [0, 128], sizes = [8, 128], strides = [1, 1]} : vector<8x384xf32> to vector<8x128xf32>
    %137 = vector.extract_strided_slice %130 {offsets = [0, 256], sizes = [8, 128], strides = [1, 1]} : vector<8x384xf32> to vector<8x128xf32>
    %138 = vector.extract_strided_slice %134 {offsets = [0, 0], sizes = [8, 128], strides = [1, 1]} : vector<8x384xf32> to vector<8x128xf32>
    %139 = vector.extract_strided_slice %134 {offsets = [0, 128], sizes = [8, 128], strides = [1, 1]} : vector<8x384xf32> to vector<8x128xf32>
    %140 = vector.extract_strided_slice %134 {offsets = [0, 256], sizes = [8, 128], strides = [1, 1]} : vector<8x384xf32> to vector<8x128xf32>
    %141 = arith.addf %135, %138 : vector<8x128xf32>
    %142 = arith.negf %141 : vector<8x128xf32>
    %143 = math.exp %142 : vector<8x128xf32>
    %cst_36 = arith.constant 1.000000e+00 : f32
    %144 = vector.broadcast %cst_36 : f32 to vector<8x128xf32>
    %145 = arith.addf %144, %143 : vector<8x128xf32>
    %146 = arith.divf %144, %145 : vector<8x128xf32>
    %147 = arith.addf %136, %139 : vector<8x128xf32>
    %148 = arith.negf %147 : vector<8x128xf32>
    %149 = math.exp %148 : vector<8x128xf32>
    %cst_37 = arith.constant 1.000000e+00 : f32
    %150 = vector.broadcast %cst_37 : f32 to vector<8x128xf32>
    %151 = arith.addf %150, %149 : vector<8x128xf32>
    %152 = arith.divf %150, %151 : vector<8x128xf32>
    %153 = arith.mulf %146, %140 : vector<8x128xf32>
    %154 = arith.addf %137, %153 : vector<8x128xf32>
    %155 = math.tanh %154 : vector<8x128xf32>
    %cst_38 = arith.constant 1.000000e+00 : f32
    %156 = vector.broadcast %cst_38 : f32 to vector<8x128xf32>
    %157 = arith.subf %156, %152 : vector<8x128xf32>
    %158 = arith.mulf %157, %155 : vector<8x128xf32>
    %159 = arith.mulf %152, %128 : vector<8x128xf32>
    %160 = arith.addf %158, %159 : vector<8x128xf32>
    %161 = vector.extract_strided_slice %29 {offsets = [4, 0, 0], sizes = [1, 8, 384], strides = [1, 1, 1]} : vector<8x8x384xf32> to vector<1x8x384xf32>
    %162 = vector.shape_cast %161 : vector<1x8x384xf32> to vector<8x384xf32>
    %163 = arith.truncf %160 : vector<8x128xf32> to vector<8x128xbf16>
    %cst_39 = arith.constant dense<0.000000e+00> : vector<8x384xf32>
    %164 = tpu.matmul %163, %30, %cst_39 {dimension_numbers = #tpu.dot_dimension_numbers<[1], [0], [0], [1], [0, 0, 1, 1], [], []>} : vector<8x128xbf16>, vector<128x384xbf16>, vector<8x384xf32> -> vector<8x384xf32>
    %165 = vector.broadcast %31 : vector<1x384xf32> to vector<8x384xf32>
    %166 = arith.addf %164, %165 : vector<8x384xf32>
    %167 = vector.extract_strided_slice %162 {offsets = [0, 0], sizes = [8, 128], strides = [1, 1]} : vector<8x384xf32> to vector<8x128xf32>
    %168 = vector.extract_strided_slice %162 {offsets = [0, 128], sizes = [8, 128], strides = [1, 1]} : vector<8x384xf32> to vector<8x128xf32>
    %169 = vector.extract_strided_slice %162 {offsets = [0, 256], sizes = [8, 128], strides = [1, 1]} : vector<8x384xf32> to vector<8x128xf32>
    %170 = vector.extract_strided_slice %166 {offsets = [0, 0], sizes = [8, 128], strides = [1, 1]} : vector<8x384xf32> to vector<8x128xf32>
    %171 = vector.extract_strided_slice %166 {offsets = [0, 128], sizes = [8, 128], strides = [1, 1]} : vector<8x384xf32> to vector<8x128xf32>
    %172 = vector.extract_strided_slice %166 {offsets = [0, 256], sizes = [8, 128], strides = [1, 1]} : vector<8x384xf32> to vector<8x128xf32>
    %173 = arith.addf %167, %170 : vector<8x128xf32>
    %174 = arith.negf %173 : vector<8x128xf32>
    %175 = math.exp %174 : vector<8x128xf32>
    %cst_40 = arith.constant 1.000000e+00 : f32
    %176 = vector.broadcast %cst_40 : f32 to vector<8x128xf32>
    %177 = arith.addf %176, %175 : vector<8x128xf32>
    %178 = arith.divf %176, %177 : vector<8x128xf32>
    %179 = arith.addf %168, %171 : vector<8x128xf32>
    %180 = arith.negf %179 : vector<8x128xf32>
    %181 = math.exp %180 : vector<8x128xf32>
    %cst_41 = arith.constant 1.000000e+00 : f32
    %182 = vector.broadcast %cst_41 : f32 to vector<8x128xf32>
    %183 = arith.addf %182, %181 : vector<8x128xf32>
    %184 = arith.divf %182, %183 : vector<8x128xf32>
    %185 = arith.mulf %178, %172 : vector<8x128xf32>
    %186 = arith.addf %169, %185 : vector<8x128xf32>
    %187 = math.tanh %186 : vector<8x128xf32>
    %cst_42 = arith.constant 1.000000e+00 : f32
    %188 = vector.broadcast %cst_42 : f32 to vector<8x128xf32>
    %189 = arith.subf %188, %184 : vector<8x128xf32>
    %190 = arith.mulf %189, %187 : vector<8x128xf32>
    %191 = arith.mulf %184, %160 : vector<8x128xf32>
    %192 = arith.addf %190, %191 : vector<8x128xf32>
    %193 = vector.extract_strided_slice %29 {offsets = [5, 0, 0], sizes = [1, 8, 384], strides = [1, 1, 1]} : vector<8x8x384xf32> to vector<1x8x384xf32>
    %194 = vector.shape_cast %193 : vector<1x8x384xf32> to vector<8x384xf32>
    %195 = arith.truncf %192 : vector<8x128xf32> to vector<8x128xbf16>
    %cst_43 = arith.constant dense<0.000000e+00> : vector<8x384xf32>
    %196 = tpu.matmul %195, %30, %cst_43 {dimension_numbers = #tpu.dot_dimension_numbers<[1], [0], [0], [1], [0, 0, 1, 1], [], []>} : vector<8x128xbf16>, vector<128x384xbf16>, vector<8x384xf32> -> vector<8x384xf32>
    %197 = vector.broadcast %31 : vector<1x384xf32> to vector<8x384xf32>
    %198 = arith.addf %196, %197 : vector<8x384xf32>
    %199 = vector.extract_strided_slice %194 {offsets = [0, 0], sizes = [8, 128], strides = [1, 1]} : vector<8x384xf32> to vector<8x128xf32>
    %200 = vector.extract_strided_slice %194 {offsets = [0, 128], sizes = [8, 128], strides = [1, 1]} : vector<8x384xf32> to vector<8x128xf32>
    %201 = vector.extract_strided_slice %194 {offsets = [0, 256], sizes = [8, 128], strides = [1, 1]} : vector<8x384xf32> to vector<8x128xf32>
    %202 = vector.extract_strided_slice %198 {offsets = [0, 0], sizes = [8, 128], strides = [1, 1]} : vector<8x384xf32> to vector<8x128xf32>
    %203 = vector.extract_strided_slice %198 {offsets = [0, 128], sizes = [8, 128], strides = [1, 1]} : vector<8x384xf32> to vector<8x128xf32>
    %204 = vector.extract_strided_slice %198 {offsets = [0, 256], sizes = [8, 128], strides = [1, 1]} : vector<8x384xf32> to vector<8x128xf32>
    %205 = arith.addf %199, %202 : vector<8x128xf32>
    %206 = arith.negf %205 : vector<8x128xf32>
    %207 = math.exp %206 : vector<8x128xf32>
    %cst_44 = arith.constant 1.000000e+00 : f32
    %208 = vector.broadcast %cst_44 : f32 to vector<8x128xf32>
    %209 = arith.addf %208, %207 : vector<8x128xf32>
    %210 = arith.divf %208, %209 : vector<8x128xf32>
    %211 = arith.addf %200, %203 : vector<8x128xf32>
    %212 = arith.negf %211 : vector<8x128xf32>
    %213 = math.exp %212 : vector<8x128xf32>
    %cst_45 = arith.constant 1.000000e+00 : f32
    %214 = vector.broadcast %cst_45 : f32 to vector<8x128xf32>
    %215 = arith.addf %214, %213 : vector<8x128xf32>
    %216 = arith.divf %214, %215 : vector<8x128xf32>
    %217 = arith.mulf %210, %204 : vector<8x128xf32>
    %218 = arith.addf %201, %217 : vector<8x128xf32>
    %219 = math.tanh %218 : vector<8x128xf32>
    %cst_46 = arith.constant 1.000000e+00 : f32
    %220 = vector.broadcast %cst_46 : f32 to vector<8x128xf32>
    %221 = arith.subf %220, %216 : vector<8x128xf32>
    %222 = arith.mulf %221, %219 : vector<8x128xf32>
    %223 = arith.mulf %216, %192 : vector<8x128xf32>
    %224 = arith.addf %222, %223 : vector<8x128xf32>
    %225 = vector.extract_strided_slice %29 {offsets = [6, 0, 0], sizes = [1, 8, 384], strides = [1, 1, 1]} : vector<8x8x384xf32> to vector<1x8x384xf32>
    %226 = vector.shape_cast %225 : vector<1x8x384xf32> to vector<8x384xf32>
    %227 = arith.truncf %224 : vector<8x128xf32> to vector<8x128xbf16>
    %cst_47 = arith.constant dense<0.000000e+00> : vector<8x384xf32>
    %228 = tpu.matmul %227, %30, %cst_47 {dimension_numbers = #tpu.dot_dimension_numbers<[1], [0], [0], [1], [0, 0, 1, 1], [], []>} : vector<8x128xbf16>, vector<128x384xbf16>, vector<8x384xf32> -> vector<8x384xf32>
    %229 = vector.broadcast %31 : vector<1x384xf32> to vector<8x384xf32>
    %230 = arith.addf %228, %229 : vector<8x384xf32>
    %231 = vector.extract_strided_slice %226 {offsets = [0, 0], sizes = [8, 128], strides = [1, 1]} : vector<8x384xf32> to vector<8x128xf32>
    %232 = vector.extract_strided_slice %226 {offsets = [0, 128], sizes = [8, 128], strides = [1, 1]} : vector<8x384xf32> to vector<8x128xf32>
    %233 = vector.extract_strided_slice %226 {offsets = [0, 256], sizes = [8, 128], strides = [1, 1]} : vector<8x384xf32> to vector<8x128xf32>
    %234 = vector.extract_strided_slice %230 {offsets = [0, 0], sizes = [8, 128], strides = [1, 1]} : vector<8x384xf32> to vector<8x128xf32>
    %235 = vector.extract_strided_slice %230 {offsets = [0, 128], sizes = [8, 128], strides = [1, 1]} : vector<8x384xf32> to vector<8x128xf32>
    %236 = vector.extract_strided_slice %230 {offsets = [0, 256], sizes = [8, 128], strides = [1, 1]} : vector<8x384xf32> to vector<8x128xf32>
    %237 = arith.addf %231, %234 : vector<8x128xf32>
    %238 = arith.negf %237 : vector<8x128xf32>
    %239 = math.exp %238 : vector<8x128xf32>
    %cst_48 = arith.constant 1.000000e+00 : f32
    %240 = vector.broadcast %cst_48 : f32 to vector<8x128xf32>
    %241 = arith.addf %240, %239 : vector<8x128xf32>
    %242 = arith.divf %240, %241 : vector<8x128xf32>
    %243 = arith.addf %232, %235 : vector<8x128xf32>
    %244 = arith.negf %243 : vector<8x128xf32>
    %245 = math.exp %244 : vector<8x128xf32>
    %cst_49 = arith.constant 1.000000e+00 : f32
    %246 = vector.broadcast %cst_49 : f32 to vector<8x128xf32>
    %247 = arith.addf %246, %245 : vector<8x128xf32>
    %248 = arith.divf %246, %247 : vector<8x128xf32>
    %249 = arith.mulf %242, %236 : vector<8x128xf32>
    %250 = arith.addf %233, %249 : vector<8x128xf32>
    %251 = math.tanh %250 : vector<8x128xf32>
    %cst_50 = arith.constant 1.000000e+00 : f32
    %252 = vector.broadcast %cst_50 : f32 to vector<8x128xf32>
    %253 = arith.subf %252, %248 : vector<8x128xf32>
    %254 = arith.mulf %253, %251 : vector<8x128xf32>
    %255 = arith.mulf %248, %224 : vector<8x128xf32>
    %256 = arith.addf %254, %255 : vector<8x128xf32>
    %257 = vector.extract_strided_slice %29 {offsets = [7, 0, 0], sizes = [1, 8, 384], strides = [1, 1, 1]} : vector<8x8x384xf32> to vector<1x8x384xf32>
    %258 = vector.shape_cast %257 : vector<1x8x384xf32> to vector<8x384xf32>
    %259 = arith.truncf %256 : vector<8x128xf32> to vector<8x128xbf16>
    %cst_51 = arith.constant dense<0.000000e+00> : vector<8x384xf32>
    %260 = tpu.matmul %259, %30, %cst_51 {dimension_numbers = #tpu.dot_dimension_numbers<[1], [0], [0], [1], [0, 0, 1, 1], [], []>} : vector<8x128xbf16>, vector<128x384xbf16>, vector<8x384xf32> -> vector<8x384xf32>
    %261 = vector.broadcast %31 : vector<1x384xf32> to vector<8x384xf32>
    %262 = arith.addf %260, %261 : vector<8x384xf32>
    %263 = vector.extract_strided_slice %258 {offsets = [0, 0], sizes = [8, 128], strides = [1, 1]} : vector<8x384xf32> to vector<8x128xf32>
    %264 = vector.extract_strided_slice %258 {offsets = [0, 128], sizes = [8, 128], strides = [1, 1]} : vector<8x384xf32> to vector<8x128xf32>
    %265 = vector.extract_strided_slice %258 {offsets = [0, 256], sizes = [8, 128], strides = [1, 1]} : vector<8x384xf32> to vector<8x128xf32>
    %266 = vector.extract_strided_slice %262 {offsets = [0, 0], sizes = [8, 128], strides = [1, 1]} : vector<8x384xf32> to vector<8x128xf32>
    %267 = vector.extract_strided_slice %262 {offsets = [0, 128], sizes = [8, 128], strides = [1, 1]} : vector<8x384xf32> to vector<8x128xf32>
    %268 = vector.extract_strided_slice %262 {offsets = [0, 256], sizes = [8, 128], strides = [1, 1]} : vector<8x384xf32> to vector<8x128xf32>
    %269 = arith.addf %263, %266 : vector<8x128xf32>
    %270 = arith.negf %269 : vector<8x128xf32>
    %271 = math.exp %270 : vector<8x128xf32>
    %cst_52 = arith.constant 1.000000e+00 : f32
    %272 = vector.broadcast %cst_52 : f32 to vector<8x128xf32>
    %273 = arith.addf %272, %271 : vector<8x128xf32>
    %274 = arith.divf %272, %273 : vector<8x128xf32>
    %275 = arith.addf %264, %267 : vector<8x128xf32>
    %276 = arith.negf %275 : vector<8x128xf32>
    %277 = math.exp %276 : vector<8x128xf32>
    %cst_53 = arith.constant 1.000000e+00 : f32
    %278 = vector.broadcast %cst_53 : f32 to vector<8x128xf32>
    %279 = arith.addf %278, %277 : vector<8x128xf32>
    %280 = arith.divf %278, %279 : vector<8x128xf32>
    %281 = arith.mulf %274, %268 : vector<8x128xf32>
    %282 = arith.addf %265, %281 : vector<8x128xf32>
    %283 = math.tanh %282 : vector<8x128xf32>
    %cst_54 = arith.constant 1.000000e+00 : f32
    %284 = vector.broadcast %cst_54 : f32 to vector<8x128xf32>
    %285 = arith.subf %284, %280 : vector<8x128xf32>
    %286 = arith.mulf %285, %283 : vector<8x128xf32>
    %287 = arith.mulf %280, %256 : vector<8x128xf32>
    %288 = arith.addf %286, %287 : vector<8x128xf32>
    %289 = tpu.concatenate %64, %96, %128, %160, %192, %224, %256, %288 in 0 : vector<8x128xf32>, vector<8x128xf32>, vector<8x128xf32>, vector<8x128xf32>, vector<8x128xf32>, vector<8x128xf32>, vector<8x128xf32>, vector<8x128xf32> -> vector<64x128xf32>
    %290 = arith.truncf %289 : vector<64x128xf32> to vector<64x128xbf16>
    %c0_55 = arith.constant 0 : index
    %c0_56 = arith.constant 0 : index
    %291 = vector.load %arg8[%c0_55, %c0_56] : memref<128x384xbf16, #tpu.memory_space<vmem>>, vector<128x384xbf16>
    %cst_57 = arith.constant dense<0.000000e+00> : vector<64x384xf32>
    %292 = tpu.matmul %12, %291, %cst_57 {dimension_numbers = #tpu.dot_dimension_numbers<[1], [0], [0], [1], [0, 0, 1, 1], [], []>} : vector<64x128xbf16>, vector<128x384xbf16>, vector<64x384xf32> -> vector<64x384xf32>
    %293 = vector.shape_cast %292 : vector<64x384xf32> to vector<8x8x384xf32>
    %c0_58 = arith.constant 0 : index
    %c0_59 = arith.constant 0 : index
    %294 = vector.load %arg10[%c0_58, %c0_59] : memref<1x384xf32, #tpu.memory_space<vmem>>, vector<1x384xf32>
    %295 = vector.shape_cast %294 : vector<1x384xf32> to vector<1x1x384xf32>
    %296 = vector.broadcast %295 : vector<1x1x384xf32> to vector<8x8x384xf32>
    %297 = arith.addf %293, %296 : vector<8x8x384xf32>
    %c0_60 = arith.constant 0 : index
    %c0_61 = arith.constant 0 : index
    %298 = vector.load %arg9[%c0_60, %c0_61] : memref<128x384xbf16, #tpu.memory_space<vmem>>, vector<128x384xbf16>
    %c0_62 = arith.constant 0 : index
    %c0_63 = arith.constant 0 : index
    %299 = vector.load %arg11[%c0_62, %c0_63] : memref<1x384xf32, #tpu.memory_space<vmem>>, vector<1x384xf32>
    %300 = vector.extract_strided_slice %297 {offsets = [0, 0, 0], sizes = [1, 8, 384], strides = [1, 1, 1]} : vector<8x8x384xf32> to vector<1x8x384xf32>
    %301 = vector.shape_cast %300 : vector<1x8x384xf32> to vector<8x384xf32>
    %302 = arith.truncf %288 : vector<8x128xf32> to vector<8x128xbf16>
    %cst_64 = arith.constant dense<0.000000e+00> : vector<8x384xf32>
    %303 = tpu.matmul %302, %298, %cst_64 {dimension_numbers = #tpu.dot_dimension_numbers<[1], [0], [0], [1], [0, 0, 1, 1], [], []>} : vector<8x128xbf16>, vector<128x384xbf16>, vector<8x384xf32> -> vector<8x384xf32>
    %304 = vector.broadcast %299 : vector<1x384xf32> to vector<8x384xf32>
    %305 = arith.addf %303, %304 : vector<8x384xf32>
    %306 = vector.extract_strided_slice %301 {offsets = [0, 0], sizes = [8, 128], strides = [1, 1]} : vector<8x384xf32> to vector<8x128xf32>
    %307 = vector.extract_strided_slice %301 {offsets = [0, 128], sizes = [8, 128], strides = [1, 1]} : vector<8x384xf32> to vector<8x128xf32>
    %308 = vector.extract_strided_slice %301 {offsets = [0, 256], sizes = [8, 128], strides = [1, 1]} : vector<8x384xf32> to vector<8x128xf32>
    %309 = vector.extract_strided_slice %305 {offsets = [0, 0], sizes = [8, 128], strides = [1, 1]} : vector<8x384xf32> to vector<8x128xf32>
    %310 = vector.extract_strided_slice %305 {offsets = [0, 128], sizes = [8, 128], strides = [1, 1]} : vector<8x384xf32> to vector<8x128xf32>
    %311 = vector.extract_strided_slice %305 {offsets = [0, 256], sizes = [8, 128], strides = [1, 1]} : vector<8x384xf32> to vector<8x128xf32>
    %312 = arith.addf %306, %309 : vector<8x128xf32>
    %313 = arith.negf %312 : vector<8x128xf32>
    %314 = math.exp %313 : vector<8x128xf32>
    %cst_65 = arith.constant 1.000000e+00 : f32
    %315 = vector.broadcast %cst_65 : f32 to vector<8x128xf32>
    %316 = arith.addf %315, %314 : vector<8x128xf32>
    %317 = arith.divf %315, %316 : vector<8x128xf32>
    %318 = arith.addf %307, %310 : vector<8x128xf32>
    %319 = arith.negf %318 : vector<8x128xf32>
    %320 = math.exp %319 : vector<8x128xf32>
    %cst_66 = arith.constant 1.000000e+00 : f32
    %321 = vector.broadcast %cst_66 : f32 to vector<8x128xf32>
    %322 = arith.addf %321, %320 : vector<8x128xf32>
    %323 = arith.divf %321, %322 : vector<8x128xf32>
    %324 = arith.mulf %317, %311 : vector<8x128xf32>
    %325 = arith.addf %308, %324 : vector<8x128xf32>
    %326 = math.tanh %325 : vector<8x128xf32>
    %cst_67 = arith.constant 1.000000e+00 : f32
    %327 = vector.broadcast %cst_67 : f32 to vector<8x128xf32>
    %328 = arith.subf %327, %323 : vector<8x128xf32>
    %329 = arith.mulf %328, %326 : vector<8x128xf32>
    %330 = arith.mulf %323, %288 : vector<8x128xf32>
    %331 = arith.addf %329, %330 : vector<8x128xf32>
    %332 = vector.extract_strided_slice %297 {offsets = [1, 0, 0], sizes = [1, 8, 384], strides = [1, 1, 1]} : vector<8x8x384xf32> to vector<1x8x384xf32>
    %333 = vector.shape_cast %332 : vector<1x8x384xf32> to vector<8x384xf32>
    %334 = arith.truncf %331 : vector<8x128xf32> to vector<8x128xbf16>
    %cst_68 = arith.constant dense<0.000000e+00> : vector<8x384xf32>
    %335 = tpu.matmul %334, %298, %cst_68 {dimension_numbers = #tpu.dot_dimension_numbers<[1], [0], [0], [1], [0, 0, 1, 1], [], []>} : vector<8x128xbf16>, vector<128x384xbf16>, vector<8x384xf32> -> vector<8x384xf32>
    %336 = vector.broadcast %299 : vector<1x384xf32> to vector<8x384xf32>
    %337 = arith.addf %335, %336 : vector<8x384xf32>
    %338 = vector.extract_strided_slice %333 {offsets = [0, 0], sizes = [8, 128], strides = [1, 1]} : vector<8x384xf32> to vector<8x128xf32>
    %339 = vector.extract_strided_slice %333 {offsets = [0, 128], sizes = [8, 128], strides = [1, 1]} : vector<8x384xf32> to vector<8x128xf32>
    %340 = vector.extract_strided_slice %333 {offsets = [0, 256], sizes = [8, 128], strides = [1, 1]} : vector<8x384xf32> to vector<8x128xf32>
    %341 = vector.extract_strided_slice %337 {offsets = [0, 0], sizes = [8, 128], strides = [1, 1]} : vector<8x384xf32> to vector<8x128xf32>
    %342 = vector.extract_strided_slice %337 {offsets = [0, 128], sizes = [8, 128], strides = [1, 1]} : vector<8x384xf32> to vector<8x128xf32>
    %343 = vector.extract_strided_slice %337 {offsets = [0, 256], sizes = [8, 128], strides = [1, 1]} : vector<8x384xf32> to vector<8x128xf32>
    %344 = arith.addf %338, %341 : vector<8x128xf32>
    %345 = arith.negf %344 : vector<8x128xf32>
    %346 = math.exp %345 : vector<8x128xf32>
    %cst_69 = arith.constant 1.000000e+00 : f32
    %347 = vector.broadcast %cst_69 : f32 to vector<8x128xf32>
    %348 = arith.addf %347, %346 : vector<8x128xf32>
    %349 = arith.divf %347, %348 : vector<8x128xf32>
    %350 = arith.addf %339, %342 : vector<8x128xf32>
    %351 = arith.negf %350 : vector<8x128xf32>
    %352 = math.exp %351 : vector<8x128xf32>
    %cst_70 = arith.constant 1.000000e+00 : f32
    %353 = vector.broadcast %cst_70 : f32 to vector<8x128xf32>
    %354 = arith.addf %353, %352 : vector<8x128xf32>
    %355 = arith.divf %353, %354 : vector<8x128xf32>
    %356 = arith.mulf %349, %343 : vector<8x128xf32>
    %357 = arith.addf %340, %356 : vector<8x128xf32>
    %358 = math.tanh %357 : vector<8x128xf32>
    %cst_71 = arith.constant 1.000000e+00 : f32
    %359 = vector.broadcast %cst_71 : f32 to vector<8x128xf32>
    %360 = arith.subf %359, %355 : vector<8x128xf32>
    %361 = arith.mulf %360, %358 : vector<8x128xf32>
    %362 = arith.mulf %355, %331 : vector<8x128xf32>
    %363 = arith.addf %361, %362 : vector<8x128xf32>
    %364 = vector.extract_strided_slice %297 {offsets = [2, 0, 0], sizes = [1, 8, 384], strides = [1, 1, 1]} : vector<8x8x384xf32> to vector<1x8x384xf32>
    %365 = vector.shape_cast %364 : vector<1x8x384xf32> to vector<8x384xf32>
    %366 = arith.truncf %363 : vector<8x128xf32> to vector<8x128xbf16>
    %cst_72 = arith.constant dense<0.000000e+00> : vector<8x384xf32>
    %367 = tpu.matmul %366, %298, %cst_72 {dimension_numbers = #tpu.dot_dimension_numbers<[1], [0], [0], [1], [0, 0, 1, 1], [], []>} : vector<8x128xbf16>, vector<128x384xbf16>, vector<8x384xf32> -> vector<8x384xf32>
    %368 = vector.broadcast %299 : vector<1x384xf32> to vector<8x384xf32>
    %369 = arith.addf %367, %368 : vector<8x384xf32>
    %370 = vector.extract_strided_slice %365 {offsets = [0, 0], sizes = [8, 128], strides = [1, 1]} : vector<8x384xf32> to vector<8x128xf32>
    %371 = vector.extract_strided_slice %365 {offsets = [0, 128], sizes = [8, 128], strides = [1, 1]} : vector<8x384xf32> to vector<8x128xf32>
    %372 = vector.extract_strided_slice %365 {offsets = [0, 256], sizes = [8, 128], strides = [1, 1]} : vector<8x384xf32> to vector<8x128xf32>
    %373 = vector.extract_strided_slice %369 {offsets = [0, 0], sizes = [8, 128], strides = [1, 1]} : vector<8x384xf32> to vector<8x128xf32>
    %374 = vector.extract_strided_slice %369 {offsets = [0, 128], sizes = [8, 128], strides = [1, 1]} : vector<8x384xf32> to vector<8x128xf32>
    %375 = vector.extract_strided_slice %369 {offsets = [0, 256], sizes = [8, 128], strides = [1, 1]} : vector<8x384xf32> to vector<8x128xf32>
    %376 = arith.addf %370, %373 : vector<8x128xf32>
    %377 = arith.negf %376 : vector<8x128xf32>
    %378 = math.exp %377 : vector<8x128xf32>
    %cst_73 = arith.constant 1.000000e+00 : f32
    %379 = vector.broadcast %cst_73 : f32 to vector<8x128xf32>
    %380 = arith.addf %379, %378 : vector<8x128xf32>
    %381 = arith.divf %379, %380 : vector<8x128xf32>
    %382 = arith.addf %371, %374 : vector<8x128xf32>
    %383 = arith.negf %382 : vector<8x128xf32>
    %384 = math.exp %383 : vector<8x128xf32>
    %cst_74 = arith.constant 1.000000e+00 : f32
    %385 = vector.broadcast %cst_74 : f32 to vector<8x128xf32>
    %386 = arith.addf %385, %384 : vector<8x128xf32>
    %387 = arith.divf %385, %386 : vector<8x128xf32>
    %388 = arith.mulf %381, %375 : vector<8x128xf32>
    %389 = arith.addf %372, %388 : vector<8x128xf32>
    %390 = math.tanh %389 : vector<8x128xf32>
    %cst_75 = arith.constant 1.000000e+00 : f32
    %391 = vector.broadcast %cst_75 : f32 to vector<8x128xf32>
    %392 = arith.subf %391, %387 : vector<8x128xf32>
    %393 = arith.mulf %392, %390 : vector<8x128xf32>
    %394 = arith.mulf %387, %363 : vector<8x128xf32>
    %395 = arith.addf %393, %394 : vector<8x128xf32>
    %396 = vector.extract_strided_slice %297 {offsets = [3, 0, 0], sizes = [1, 8, 384], strides = [1, 1, 1]} : vector<8x8x384xf32> to vector<1x8x384xf32>
    %397 = vector.shape_cast %396 : vector<1x8x384xf32> to vector<8x384xf32>
    %398 = arith.truncf %395 : vector<8x128xf32> to vector<8x128xbf16>
    %cst_76 = arith.constant dense<0.000000e+00> : vector<8x384xf32>
    %399 = tpu.matmul %398, %298, %cst_76 {dimension_numbers = #tpu.dot_dimension_numbers<[1], [0], [0], [1], [0, 0, 1, 1], [], []>} : vector<8x128xbf16>, vector<128x384xbf16>, vector<8x384xf32> -> vector<8x384xf32>
    %400 = vector.broadcast %299 : vector<1x384xf32> to vector<8x384xf32>
    %401 = arith.addf %399, %400 : vector<8x384xf32>
    %402 = vector.extract_strided_slice %397 {offsets = [0, 0], sizes = [8, 128], strides = [1, 1]} : vector<8x384xf32> to vector<8x128xf32>
    %403 = vector.extract_strided_slice %397 {offsets = [0, 128], sizes = [8, 128], strides = [1, 1]} : vector<8x384xf32> to vector<8x128xf32>
    %404 = vector.extract_strided_slice %397 {offsets = [0, 256], sizes = [8, 128], strides = [1, 1]} : vector<8x384xf32> to vector<8x128xf32>
    %405 = vector.extract_strided_slice %401 {offsets = [0, 0], sizes = [8, 128], strides = [1, 1]} : vector<8x384xf32> to vector<8x128xf32>
    %406 = vector.extract_strided_slice %401 {offsets = [0, 128], sizes = [8, 128], strides = [1, 1]} : vector<8x384xf32> to vector<8x128xf32>
    %407 = vector.extract_strided_slice %401 {offsets = [0, 256], sizes = [8, 128], strides = [1, 1]} : vector<8x384xf32> to vector<8x128xf32>
    %408 = arith.addf %402, %405 : vector<8x128xf32>
    %409 = arith.negf %408 : vector<8x128xf32>
    %410 = math.exp %409 : vector<8x128xf32>
    %cst_77 = arith.constant 1.000000e+00 : f32
    %411 = vector.broadcast %cst_77 : f32 to vector<8x128xf32>
    %412 = arith.addf %411, %410 : vector<8x128xf32>
    %413 = arith.divf %411, %412 : vector<8x128xf32>
    %414 = arith.addf %403, %406 : vector<8x128xf32>
    %415 = arith.negf %414 : vector<8x128xf32>
    %416 = math.exp %415 : vector<8x128xf32>
    %cst_78 = arith.constant 1.000000e+00 : f32
    %417 = vector.broadcast %cst_78 : f32 to vector<8x128xf32>
    %418 = arith.addf %417, %416 : vector<8x128xf32>
    %419 = arith.divf %417, %418 : vector<8x128xf32>
    %420 = arith.mulf %413, %407 : vector<8x128xf32>
    %421 = arith.addf %404, %420 : vector<8x128xf32>
    %422 = math.tanh %421 : vector<8x128xf32>
    %cst_79 = arith.constant 1.000000e+00 : f32
    %423 = vector.broadcast %cst_79 : f32 to vector<8x128xf32>
    %424 = arith.subf %423, %419 : vector<8x128xf32>
    %425 = arith.mulf %424, %422 : vector<8x128xf32>
    %426 = arith.mulf %419, %395 : vector<8x128xf32>
    %427 = arith.addf %425, %426 : vector<8x128xf32>
    %428 = vector.extract_strided_slice %297 {offsets = [4, 0, 0], sizes = [1, 8, 384], strides = [1, 1, 1]} : vector<8x8x384xf32> to vector<1x8x384xf32>
    %429 = vector.shape_cast %428 : vector<1x8x384xf32> to vector<8x384xf32>
    %430 = arith.truncf %427 : vector<8x128xf32> to vector<8x128xbf16>
    %cst_80 = arith.constant dense<0.000000e+00> : vector<8x384xf32>
    %431 = tpu.matmul %430, %298, %cst_80 {dimension_numbers = #tpu.dot_dimension_numbers<[1], [0], [0], [1], [0, 0, 1, 1], [], []>} : vector<8x128xbf16>, vector<128x384xbf16>, vector<8x384xf32> -> vector<8x384xf32>
    %432 = vector.broadcast %299 : vector<1x384xf32> to vector<8x384xf32>
    %433 = arith.addf %431, %432 : vector<8x384xf32>
    %434 = vector.extract_strided_slice %429 {offsets = [0, 0], sizes = [8, 128], strides = [1, 1]} : vector<8x384xf32> to vector<8x128xf32>
    %435 = vector.extract_strided_slice %429 {offsets = [0, 128], sizes = [8, 128], strides = [1, 1]} : vector<8x384xf32> to vector<8x128xf32>
    %436 = vector.extract_strided_slice %429 {offsets = [0, 256], sizes = [8, 128], strides = [1, 1]} : vector<8x384xf32> to vector<8x128xf32>
    %437 = vector.extract_strided_slice %433 {offsets = [0, 0], sizes = [8, 128], strides = [1, 1]} : vector<8x384xf32> to vector<8x128xf32>
    %438 = vector.extract_strided_slice %433 {offsets = [0, 128], sizes = [8, 128], strides = [1, 1]} : vector<8x384xf32> to vector<8x128xf32>
    %439 = vector.extract_strided_slice %433 {offsets = [0, 256], sizes = [8, 128], strides = [1, 1]} : vector<8x384xf32> to vector<8x128xf32>
    %440 = arith.addf %434, %437 : vector<8x128xf32>
    %441 = arith.negf %440 : vector<8x128xf32>
    %442 = math.exp %441 : vector<8x128xf32>
    %cst_81 = arith.constant 1.000000e+00 : f32
    %443 = vector.broadcast %cst_81 : f32 to vector<8x128xf32>
    %444 = arith.addf %443, %442 : vector<8x128xf32>
    %445 = arith.divf %443, %444 : vector<8x128xf32>
    %446 = arith.addf %435, %438 : vector<8x128xf32>
    %447 = arith.negf %446 : vector<8x128xf32>
    %448 = math.exp %447 : vector<8x128xf32>
    %cst_82 = arith.constant 1.000000e+00 : f32
    %449 = vector.broadcast %cst_82 : f32 to vector<8x128xf32>
    %450 = arith.addf %449, %448 : vector<8x128xf32>
    %451 = arith.divf %449, %450 : vector<8x128xf32>
    %452 = arith.mulf %445, %439 : vector<8x128xf32>
    %453 = arith.addf %436, %452 : vector<8x128xf32>
    %454 = math.tanh %453 : vector<8x128xf32>
    %cst_83 = arith.constant 1.000000e+00 : f32
    %455 = vector.broadcast %cst_83 : f32 to vector<8x128xf32>
    %456 = arith.subf %455, %451 : vector<8x128xf32>
    %457 = arith.mulf %456, %454 : vector<8x128xf32>
    %458 = arith.mulf %451, %427 : vector<8x128xf32>
    %459 = arith.addf %457, %458 : vector<8x128xf32>
    %460 = vector.extract_strided_slice %297 {offsets = [5, 0, 0], sizes = [1, 8, 384], strides = [1, 1, 1]} : vector<8x8x384xf32> to vector<1x8x384xf32>
    %461 = vector.shape_cast %460 : vector<1x8x384xf32> to vector<8x384xf32>
    %462 = arith.truncf %459 : vector<8x128xf32> to vector<8x128xbf16>
    %cst_84 = arith.constant dense<0.000000e+00> : vector<8x384xf32>
    %463 = tpu.matmul %462, %298, %cst_84 {dimension_numbers = #tpu.dot_dimension_numbers<[1], [0], [0], [1], [0, 0, 1, 1], [], []>} : vector<8x128xbf16>, vector<128x384xbf16>, vector<8x384xf32> -> vector<8x384xf32>
    %464 = vector.broadcast %299 : vector<1x384xf32> to vector<8x384xf32>
    %465 = arith.addf %463, %464 : vector<8x384xf32>
    %466 = vector.extract_strided_slice %461 {offsets = [0, 0], sizes = [8, 128], strides = [1, 1]} : vector<8x384xf32> to vector<8x128xf32>
    %467 = vector.extract_strided_slice %461 {offsets = [0, 128], sizes = [8, 128], strides = [1, 1]} : vector<8x384xf32> to vector<8x128xf32>
    %468 = vector.extract_strided_slice %461 {offsets = [0, 256], sizes = [8, 128], strides = [1, 1]} : vector<8x384xf32> to vector<8x128xf32>
    %469 = vector.extract_strided_slice %465 {offsets = [0, 0], sizes = [8, 128], strides = [1, 1]} : vector<8x384xf32> to vector<8x128xf32>
    %470 = vector.extract_strided_slice %465 {offsets = [0, 128], sizes = [8, 128], strides = [1, 1]} : vector<8x384xf32> to vector<8x128xf32>
    %471 = vector.extract_strided_slice %465 {offsets = [0, 256], sizes = [8, 128], strides = [1, 1]} : vector<8x384xf32> to vector<8x128xf32>
    %472 = arith.addf %466, %469 : vector<8x128xf32>
    %473 = arith.negf %472 : vector<8x128xf32>
    %474 = math.exp %473 : vector<8x128xf32>
    %cst_85 = arith.constant 1.000000e+00 : f32
    %475 = vector.broadcast %cst_85 : f32 to vector<8x128xf32>
    %476 = arith.addf %475, %474 : vector<8x128xf32>
    %477 = arith.divf %475, %476 : vector<8x128xf32>
    %478 = arith.addf %467, %470 : vector<8x128xf32>
    %479 = arith.negf %478 : vector<8x128xf32>
    %480 = math.exp %479 : vector<8x128xf32>
    %cst_86 = arith.constant 1.000000e+00 : f32
    %481 = vector.broadcast %cst_86 : f32 to vector<8x128xf32>
    %482 = arith.addf %481, %480 : vector<8x128xf32>
    %483 = arith.divf %481, %482 : vector<8x128xf32>
    %484 = arith.mulf %477, %471 : vector<8x128xf32>
    %485 = arith.addf %468, %484 : vector<8x128xf32>
    %486 = math.tanh %485 : vector<8x128xf32>
    %cst_87 = arith.constant 1.000000e+00 : f32
    %487 = vector.broadcast %cst_87 : f32 to vector<8x128xf32>
    %488 = arith.subf %487, %483 : vector<8x128xf32>
    %489 = arith.mulf %488, %486 : vector<8x128xf32>
    %490 = arith.mulf %483, %459 : vector<8x128xf32>
    %491 = arith.addf %489, %490 : vector<8x128xf32>
    %492 = vector.extract_strided_slice %297 {offsets = [6, 0, 0], sizes = [1, 8, 384], strides = [1, 1, 1]} : vector<8x8x384xf32> to vector<1x8x384xf32>
    %493 = vector.shape_cast %492 : vector<1x8x384xf32> to vector<8x384xf32>
    %494 = arith.truncf %491 : vector<8x128xf32> to vector<8x128xbf16>
    %cst_88 = arith.constant dense<0.000000e+00> : vector<8x384xf32>
    %495 = tpu.matmul %494, %298, %cst_88 {dimension_numbers = #tpu.dot_dimension_numbers<[1], [0], [0], [1], [0, 0, 1, 1], [], []>} : vector<8x128xbf16>, vector<128x384xbf16>, vector<8x384xf32> -> vector<8x384xf32>
    %496 = vector.broadcast %299 : vector<1x384xf32> to vector<8x384xf32>
    %497 = arith.addf %495, %496 : vector<8x384xf32>
    %498 = vector.extract_strided_slice %493 {offsets = [0, 0], sizes = [8, 128], strides = [1, 1]} : vector<8x384xf32> to vector<8x128xf32>
    %499 = vector.extract_strided_slice %493 {offsets = [0, 128], sizes = [8, 128], strides = [1, 1]} : vector<8x384xf32> to vector<8x128xf32>
    %500 = vector.extract_strided_slice %493 {offsets = [0, 256], sizes = [8, 128], strides = [1, 1]} : vector<8x384xf32> to vector<8x128xf32>
    %501 = vector.extract_strided_slice %497 {offsets = [0, 0], sizes = [8, 128], strides = [1, 1]} : vector<8x384xf32> to vector<8x128xf32>
    %502 = vector.extract_strided_slice %497 {offsets = [0, 128], sizes = [8, 128], strides = [1, 1]} : vector<8x384xf32> to vector<8x128xf32>
    %503 = vector.extract_strided_slice %497 {offsets = [0, 256], sizes = [8, 128], strides = [1, 1]} : vector<8x384xf32> to vector<8x128xf32>
    %504 = arith.addf %498, %501 : vector<8x128xf32>
    %505 = arith.negf %504 : vector<8x128xf32>
    %506 = math.exp %505 : vector<8x128xf32>
    %cst_89 = arith.constant 1.000000e+00 : f32
    %507 = vector.broadcast %cst_89 : f32 to vector<8x128xf32>
    %508 = arith.addf %507, %506 : vector<8x128xf32>
    %509 = arith.divf %507, %508 : vector<8x128xf32>
    %510 = arith.addf %499, %502 : vector<8x128xf32>
    %511 = arith.negf %510 : vector<8x128xf32>
    %512 = math.exp %511 : vector<8x128xf32>
    %cst_90 = arith.constant 1.000000e+00 : f32
    %513 = vector.broadcast %cst_90 : f32 to vector<8x128xf32>
    %514 = arith.addf %513, %512 : vector<8x128xf32>
    %515 = arith.divf %513, %514 : vector<8x128xf32>
    %516 = arith.mulf %509, %503 : vector<8x128xf32>
    %517 = arith.addf %500, %516 : vector<8x128xf32>
    %518 = math.tanh %517 : vector<8x128xf32>
    %cst_91 = arith.constant 1.000000e+00 : f32
    %519 = vector.broadcast %cst_91 : f32 to vector<8x128xf32>
    %520 = arith.subf %519, %515 : vector<8x128xf32>
    %521 = arith.mulf %520, %518 : vector<8x128xf32>
    %522 = arith.mulf %515, %491 : vector<8x128xf32>
    %523 = arith.addf %521, %522 : vector<8x128xf32>
    %524 = vector.extract_strided_slice %297 {offsets = [7, 0, 0], sizes = [1, 8, 384], strides = [1, 1, 1]} : vector<8x8x384xf32> to vector<1x8x384xf32>
    %525 = vector.shape_cast %524 : vector<1x8x384xf32> to vector<8x384xf32>
    %526 = arith.truncf %523 : vector<8x128xf32> to vector<8x128xbf16>
    %cst_92 = arith.constant dense<0.000000e+00> : vector<8x384xf32>
    %527 = tpu.matmul %526, %298, %cst_92 {dimension_numbers = #tpu.dot_dimension_numbers<[1], [0], [0], [1], [0, 0, 1, 1], [], []>} : vector<8x128xbf16>, vector<128x384xbf16>, vector<8x384xf32> -> vector<8x384xf32>
    %528 = vector.broadcast %299 : vector<1x384xf32> to vector<8x384xf32>
    %529 = arith.addf %527, %528 : vector<8x384xf32>
    %530 = vector.extract_strided_slice %525 {offsets = [0, 0], sizes = [8, 128], strides = [1, 1]} : vector<8x384xf32> to vector<8x128xf32>
    %531 = vector.extract_strided_slice %525 {offsets = [0, 128], sizes = [8, 128], strides = [1, 1]} : vector<8x384xf32> to vector<8x128xf32>
    %532 = vector.extract_strided_slice %525 {offsets = [0, 256], sizes = [8, 128], strides = [1, 1]} : vector<8x384xf32> to vector<8x128xf32>
    %533 = vector.extract_strided_slice %529 {offsets = [0, 0], sizes = [8, 128], strides = [1, 1]} : vector<8x384xf32> to vector<8x128xf32>
    %534 = vector.extract_strided_slice %529 {offsets = [0, 128], sizes = [8, 128], strides = [1, 1]} : vector<8x384xf32> to vector<8x128xf32>
    %535 = vector.extract_strided_slice %529 {offsets = [0, 256], sizes = [8, 128], strides = [1, 1]} : vector<8x384xf32> to vector<8x128xf32>
    %536 = arith.addf %530, %533 : vector<8x128xf32>
    %537 = arith.negf %536 : vector<8x128xf32>
    %538 = math.exp %537 : vector<8x128xf32>
    %cst_93 = arith.constant 1.000000e+00 : f32
    %539 = vector.broadcast %cst_93 : f32 to vector<8x128xf32>
    %540 = arith.addf %539, %538 : vector<8x128xf32>
    %541 = arith.divf %539, %540 : vector<8x128xf32>
    %542 = arith.addf %531, %534 : vector<8x128xf32>
    %543 = arith.negf %542 : vector<8x128xf32>
    %544 = math.exp %543 : vector<8x128xf32>
    %cst_94 = arith.constant 1.000000e+00 : f32
    %545 = vector.broadcast %cst_94 : f32 to vector<8x128xf32>
    %546 = arith.addf %545, %544 : vector<8x128xf32>
    %547 = arith.divf %545, %546 : vector<8x128xf32>
    %548 = arith.mulf %541, %535 : vector<8x128xf32>
    %549 = arith.addf %532, %548 : vector<8x128xf32>
    %550 = math.tanh %549 : vector<8x128xf32>
    %cst_95 = arith.constant 1.000000e+00 : f32
    %551 = vector.broadcast %cst_95 : f32 to vector<8x128xf32>
    %552 = arith.subf %551, %547 : vector<8x128xf32>
    %553 = arith.mulf %552, %550 : vector<8x128xf32>
    %554 = arith.mulf %547, %523 : vector<8x128xf32>
    %555 = arith.addf %553, %554 : vector<8x128xf32>
    %556 = tpu.concatenate %331, %363, %395, %427, %459, %491, %523, %555 in 0 : vector<8x128xf32>, vector<8x128xf32>, vector<8x128xf32>, vector<8x128xf32>, vector<8x128xf32>, vector<8x128xf32>, vector<8x128xf32>, vector<8x128xf32> -> vector<64x128xf32>
    %557 = arith.truncf %556 : vector<64x128xf32> to vector<64x128xbf16>
    %cst_96 = arith.constant dense<0.000000e+00> : vector<64x64xf32>
    %558 = tpu.matmul %557, %290, %cst_96 {dimension_numbers = #tpu.dot_dimension_numbers<[1], [1], [0], [0], [0, 0, 1, 0], [], []>} : vector<64x128xbf16>, vector<64x128xbf16>, vector<64x64xf32> -> vector<64x64xf32>
    %559 = tpu.iota {dimensions = array<i32: 0>} : vector<64x64xi32>
    %560 = tpu.iota {dimensions = array<i32: 1>} : vector<64x64xi32>
    %c7_i32 = arith.constant 7 : i32
    %561 = vector.broadcast %c7_i32 : i32 to vector<64x64xi32>
    %562 = arith.andi %559, %561 : vector<64x64xi32>
    %c7_i32_97 = arith.constant 7 : i32
    %563 = vector.broadcast %c7_i32_97 : i32 to vector<64x64xi32>
    %564 = arith.andi %560, %563 : vector<64x64xi32>
    %565 = arith.cmpi eq, %562, %564 : vector<64x64xi32>
    %cst_98 = arith.constant -1.000000e+30 : f32
    %566 = vector.broadcast %cst_98 : f32 to vector<64x64xf32>
    %567 = arith.select %565, %558, %566 : vector<64x64xi1>, vector<64x64xf32>
    %cst_99 = arith.constant dense<0xFF800000> : vector<64xf32>
    %568 = vector.multi_reduction <maximumf>, %567, %cst_99 [1] : vector<64x64xf32> to vector<64xf32>
    %569 = vector.shape_cast %568 : vector<64xf32> to vector<64x1xf32>
    %570 = vector.broadcast %569 : vector<64x1xf32> to vector<64x64xf32>
    %571 = arith.subf %567, %570 : vector<64x64xf32>
    %572 = math.exp %571 : vector<64x64xf32>
    %cst_100 = arith.constant dense<0.000000e+00> : vector<64xf32>
    %573 = vector.multi_reduction <add>, %572, %cst_100 [1] : vector<64x64xf32> to vector<64xf32>
    %574 = vector.shape_cast %573 : vector<64xf32> to vector<64x1xf32>
    %575 = tpu.reciprocal %574 {approx = true} : vector<64x1xf32> -> vector<64x1xf32>
    %576 = vector.broadcast %575 : vector<64x1xf32> to vector<64x64xf32>
    %577 = arith.mulf %572, %576 : vector<64x64xf32>
    %578 = arith.truncf %577 : vector<64x64xf32> to vector<64x64xbf16>
    %cst_101 = arith.constant dense<0.000000e+00> : vector<64x128xf32>
    %579 = tpu.matmul %578, %290, %cst_101 {dimension_numbers = #tpu.dot_dimension_numbers<[1], [0], [0], [1], [0, 0, 1, 1], [], []>} : vector<64x64xbf16>, vector<64x128xbf16>, vector<64x128xf32> -> vector<64x128xf32>
    %580 = arith.truncf %579 : vector<64x128xf32> to vector<64x128xbf16>
    %581 = tpu.concatenate %557, %580 in 1 : vector<64x128xbf16>, vector<64x128xbf16> -> vector<64x256xbf16>
    %c0_102 = arith.constant 0 : index
    %c0_103 = arith.constant 0 : index
    %582 = vector.load %arg12[%c0_102, %c0_103] : memref<256x128xbf16, #tpu.memory_space<vmem>>, vector<256x128xbf16>
    %cst_104 = arith.constant dense<0.000000e+00> : vector<64x128xf32>
    %583 = tpu.matmul %581, %582, %cst_104 {dimension_numbers = #tpu.dot_dimension_numbers<[1], [0], [0], [1], [0, 0, 1, 1], [], []>} : vector<64x256xbf16>, vector<256x128xbf16>, vector<64x128xf32> -> vector<64x128xf32>
    %c0_105 = arith.constant 0 : index
    %c0_106 = arith.constant 0 : index
    %584 = vector.load %arg13[%c0_105, %c0_106] : memref<1x128xf32, #tpu.memory_space<vmem>>, vector<1x128xf32>
    %585 = vector.broadcast %584 : vector<1x128xf32> to vector<64x128xf32>
    %586 = arith.addf %583, %585 : vector<64x128xf32>
    %cst_107 = arith.constant dense<0xFF800000> : vector<64xf32>
    %587 = vector.multi_reduction <maximumf>, %586, %cst_107 [1] : vector<64x128xf32> to vector<64xf32>
    %588 = vector.shape_cast %587 : vector<64xf32> to vector<64x1xf32>
    %589 = vector.broadcast %588 : vector<64x1xf32> to vector<64x128xf32>
    %590 = arith.subf %586, %589 : vector<64x128xf32>
    %591 = math.exp %590 : vector<64x128xf32>
    %cst_108 = arith.constant dense<0.000000e+00> : vector<64xf32>
    %592 = vector.multi_reduction <add>, %591, %cst_108 [1] : vector<64x128xf32> to vector<64xf32>
    %593 = vector.shape_cast %592 : vector<64xf32> to vector<64x1xf32>
    %594 = math.log %593 : vector<64x1xf32>
    %595 = vector.broadcast %594 : vector<64x1xf32> to vector<64x128xf32>
    %596 = arith.subf %590, %595 : vector<64x128xf32>
    %597 = vector.shape_cast %596 : vector<64x128xf32> to vector<8x8x128xf32>
    %598 = vector.extract_strided_slice %597 {offsets = [0, 0, 0], sizes = [8, 1, 128], strides = [1, 1, 1]} : vector<8x8x128xf32> to vector<8x1x128xf32>
    %599 = vector.shape_cast %598 : vector<8x1x128xf32> to vector<8x128xf32>
    %c0_109 = arith.constant 0 : index
    %c0_110 = arith.constant 0 : index
    %c0_111 = arith.constant 0 : index
    %600 = vector.load %arg14[%c0_109, %c0_110, %c0_111] : memref<8x8x128xf32, #tpu.memory_space<vmem>>, vector<1x8x128xf32>
    %601 = vector.shape_cast %600 : vector<1x8x128xf32> to vector<8x128xf32>
    %602 = vector.shape_cast %599 : vector<8x128xf32> to vector<1x8x128xf32>
    tpu.vector_store %arg14[%c0_109, %c0_110, %c0_111], %602 {strides = array<i32>} : memref<8x8x128xf32, #tpu.memory_space<vmem>>, vector<1x8x128xf32>,
    %603 = vector.extract_strided_slice %597 {offsets = [0, 1, 0], sizes = [8, 1, 128], strides = [1, 1, 1]} : vector<8x8x128xf32> to vector<8x1x128xf32>
    %604 = vector.shape_cast %603 : vector<8x1x128xf32> to vector<8x128xf32>
    %c1 = arith.constant 1 : index
    %c0_112 = arith.constant 0 : index
    %c0_113 = arith.constant 0 : index
    %605 = vector.load %arg14[%c1, %c0_112, %c0_113] : memref<8x8x128xf32, #tpu.memory_space<vmem>>, vector<1x8x128xf32>
    %606 = vector.shape_cast %605 : vector<1x8x128xf32> to vector<8x128xf32>
    %607 = vector.shape_cast %604 : vector<8x128xf32> to vector<1x8x128xf32>
    tpu.vector_store %arg14[%c1, %c0_112, %c0_113], %607 {strides = array<i32>} : memref<8x8x128xf32, #tpu.memory_space<vmem>>, vector<1x8x128xf32>,
    %608 = vector.extract_strided_slice %597 {offsets = [0, 2, 0], sizes = [8, 1, 128], strides = [1, 1, 1]} : vector<8x8x128xf32> to vector<8x1x128xf32>
    %609 = vector.shape_cast %608 : vector<8x1x128xf32> to vector<8x128xf32>
    %c2 = arith.constant 2 : index
    %c0_114 = arith.constant 0 : index
    %c0_115 = arith.constant 0 : index
    %610 = vector.load %arg14[%c2, %c0_114, %c0_115] : memref<8x8x128xf32, #tpu.memory_space<vmem>>, vector<1x8x128xf32>
    %611 = vector.shape_cast %610 : vector<1x8x128xf32> to vector<8x128xf32>
    %612 = vector.shape_cast %609 : vector<8x128xf32> to vector<1x8x128xf32>
    tpu.vector_store %arg14[%c2, %c0_114, %c0_115], %612 {strides = array<i32>} : memref<8x8x128xf32, #tpu.memory_space<vmem>>, vector<1x8x128xf32>,
    %613 = vector.extract_strided_slice %597 {offsets = [0, 3, 0], sizes = [8, 1, 128], strides = [1, 1, 1]} : vector<8x8x128xf32> to vector<8x1x128xf32>
    %614 = vector.shape_cast %613 : vector<8x1x128xf32> to vector<8x128xf32>
    %c3 = arith.constant 3 : index
    %c0_116 = arith.constant 0 : index
    %c0_117 = arith.constant 0 : index
    %615 = vector.load %arg14[%c3, %c0_116, %c0_117] : memref<8x8x128xf32, #tpu.memory_space<vmem>>, vector<1x8x128xf32>
    %616 = vector.shape_cast %615 : vector<1x8x128xf32> to vector<8x128xf32>
    %617 = vector.shape_cast %614 : vector<8x128xf32> to vector<1x8x128xf32>
    tpu.vector_store %arg14[%c3, %c0_116, %c0_117], %617 {strides = array<i32>} : memref<8x8x128xf32, #tpu.memory_space<vmem>>, vector<1x8x128xf32>,
    %618 = vector.extract_strided_slice %597 {offsets = [0, 4, 0], sizes = [8, 1, 128], strides = [1, 1, 1]} : vector<8x8x128xf32> to vector<8x1x128xf32>
    %619 = vector.shape_cast %618 : vector<8x1x128xf32> to vector<8x128xf32>
    %c4 = arith.constant 4 : index
    %c0_118 = arith.constant 0 : index
    %c0_119 = arith.constant 0 : index
    %620 = vector.load %arg14[%c4, %c0_118, %c0_119] : memref<8x8x128xf32, #tpu.memory_space<vmem>>, vector<1x8x128xf32>
    %621 = vector.shape_cast %620 : vector<1x8x128xf32> to vector<8x128xf32>
    %622 = vector.shape_cast %619 : vector<8x128xf32> to vector<1x8x128xf32>
    tpu.vector_store %arg14[%c4, %c0_118, %c0_119], %622 {strides = array<i32>} : memref<8x8x128xf32, #tpu.memory_space<vmem>>, vector<1x8x128xf32>,
    %623 = vector.extract_strided_slice %597 {offsets = [0, 5, 0], sizes = [8, 1, 128], strides = [1, 1, 1]} : vector<8x8x128xf32> to vector<8x1x128xf32>
    %624 = vector.shape_cast %623 : vector<8x1x128xf32> to vector<8x128xf32>
    %c5 = arith.constant 5 : index
    %c0_120 = arith.constant 0 : index
    %c0_121 = arith.constant 0 : index
    %625 = vector.load %arg14[%c5, %c0_120, %c0_121] : memref<8x8x128xf32, #tpu.memory_space<vmem>>, vector<1x8x128xf32>
    %626 = vector.shape_cast %625 : vector<1x8x128xf32> to vector<8x128xf32>
    %627 = vector.shape_cast %624 : vector<8x128xf32> to vector<1x8x128xf32>
    tpu.vector_store %arg14[%c5, %c0_120, %c0_121], %627 {strides = array<i32>} : memref<8x8x128xf32, #tpu.memory_space<vmem>>, vector<1x8x128xf32>,
    %628 = vector.extract_strided_slice %597 {offsets = [0, 6, 0], sizes = [8, 1, 128], strides = [1, 1, 1]} : vector<8x8x128xf32> to vector<8x1x128xf32>
    %629 = vector.shape_cast %628 : vector<8x1x128xf32> to vector<8x128xf32>
    %c6 = arith.constant 6 : index
    %c0_122 = arith.constant 0 : index
    %c0_123 = arith.constant 0 : index
    %630 = vector.load %arg14[%c6, %c0_122, %c0_123] : memref<8x8x128xf32, #tpu.memory_space<vmem>>, vector<1x8x128xf32>
    %631 = vector.shape_cast %630 : vector<1x8x128xf32> to vector<8x128xf32>
    %632 = vector.shape_cast %629 : vector<8x128xf32> to vector<1x8x128xf32>
    tpu.vector_store %arg14[%c6, %c0_122, %c0_123], %632 {strides = array<i32>} : memref<8x8x128xf32, #tpu.memory_space<vmem>>, vector<1x8x128xf32>,
    %633 = vector.extract_strided_slice %597 {offsets = [0, 7, 0], sizes = [8, 1, 128], strides = [1, 1, 1]} : vector<8x8x128xf32> to vector<8x1x128xf32>
    %634 = vector.shape_cast %633 : vector<8x1x128xf32> to vector<8x128xf32>
    %c7 = arith.constant 7 : index
    %c0_124 = arith.constant 0 : index
    %c0_125 = arith.constant 0 : index
    %635 = vector.load %arg14[%c7, %c0_124, %c0_125] : memref<8x8x128xf32, #tpu.memory_space<vmem>>, vector<1x8x128xf32>
    %636 = vector.shape_cast %635 : vector<1x8x128xf32> to vector<8x128xf32>
    %637 = vector.shape_cast %634 : vector<8x128xf32> to vector<1x8x128xf32>
    tpu.vector_store %arg14[%c7, %c0_124, %c0_125], %637 {strides = array<i32>} : memref<8x8x128xf32, #tpu.memory_space<vmem>>, vector<1x8x128xf32>,
    return
  }
}

</mosaic_0001>

<llo_original>
// kernel: seq2seq_gnn_forward.1
$region0: #{seq2seq_gnn_forward.1}
  #allocation0 [shape = 'u32[]', space=smem, size = 0x4, offset = 0x4, fixed_abs, tag = 'smem constant byte address 0x4 - core index']
  #allocation1 [shape = 'u32[144,128]{1,0:T(1,128)}', space=vmem, size = 0x12000, scoped, tag = 'internal scratch']
  %s0 = inlined_call_operand.vmem [shape: s32[128,1], index: 0, kind: input, shape index: {}]
  %s1 = inlined_call_operand.hbm [shape: f32[8,4,32], index: 1, kind: input, shape index: {}]
  %s2 = inlined_call_operand.hbm [shape: bf16[256,128], index: 2, kind: input, shape index: {}]
  %s3 = inlined_call_operand.vmem [shape: bf16[128,384], index: 3, kind: input, shape index: {}]
  %s4 = inlined_call_operand.vmem [shape: bf16[32,384], index: 4, kind: input, shape index: {}]
  %s5 = inlined_call_operand.hbm [shape: bf16[128,384], index: 5, kind: input, shape index: {}]
  %s6 = inlined_call_operand.vmem [shape: f32[1,384], index: 6, kind: input, shape index: {}]
  %s7 = inlined_call_operand.vmem [shape: f32[1,384], index: 7, kind: input, shape index: {}]
  %s8 = inlined_call_operand.hbm [shape: bf16[128,384], index: 8, kind: input, shape index: {}]
  %s9 = inlined_call_operand.hbm [shape: bf16[128,384], index: 9, kind: input, shape index: {}]
  %s10 = inlined_call_operand.vmem [shape: f32[1,384], index: 10, kind: input, shape index: {}]
  %s11 = inlined_call_operand.hbm [shape: f32[1,384], index: 11, kind: input, shape index: {}]
  %s12 = inlined_call_operand.hbm [shape: bf16[256,128], index: 12, kind: input, shape index: {}]
  %s13 = inlined_call_operand.vmem [shape: f32[1,128], index: 13, kind: input, shape index: {}]
  %s14 = inlined_call_operand.hbm [shape: f32[8,8,128], index: 14, kind: output, shape index: {}]
  %s15 = sld [smem:[#allocation0]]
  $region94: #{seq2seq_gnn_forward.1} parent=0
    _
  %s17 = ssub.s32 1, %s15
  %s18 = scalar_select 0, %s17, %s15
  $region1: #{seq2seq_gnn_forward.1} parent=0
    #allocation2 [shape = 'u8[16384]{0}', space=vmem, size = 0x4000, scoped, tag = 'input window, operand 1, single buffered']
    #allocation3 [shape = 's32[1]{0}', space=sflag, size = 0x4, scoped, tag = 'scoped memory for seq2seq_gnn_forward.1']
    #allocation4 [shape = 's32[1]{0}', space=sflag, size = 0x4, scoped, tag = 'scoped memory for seq2seq_gnn_forward.1']
    #allocation5 [shape = 'u8[65536]{0}', space=vmem, size = 0x10000, scoped, tag = 'input window, operand 2, single buffered']
    #allocation6 [shape = 's32[1]{0}', space=sflag, size = 0x4, scoped, tag = 'scoped memory for seq2seq_gnn_forward.1']
    #allocation7 [shape = 'u8[98304]{0}', space=vmem, size = 0x18000, scoped, tag = 'input window, operand 5, single buffered']
    #allocation8 [shape = 'u8[98304]{0}', space=vmem, size = 0x18000, scoped, tag = 'input window, operand 8, single buffered']
    #allocation9 [shape = 's32[1]{0}', space=sflag, size = 0x4, scoped, tag = 'scoped memory for seq2seq_gnn_forward.1']
    #allocation10 [shape = 'u8[98304]{0}', space=vmem, size = 0x18000, scoped, tag = 'input window, operand 9, single buffered']
    #allocation11 [shape = 'u8[1536]{0}', space=vmem, size = 0x800, scoped, tag = 'input window, operand 11, single buffered']
    #allocation12 [shape = 's32[1]{0}', space=sflag, size = 0x4, scoped, tag = 'scoped memory for seq2seq_gnn_forward.1']
    #allocation13 [shape = 'u8[65536]{0}', space=vmem, size = 0x10000, scoped, tag = 'input window, operand 12, single buffered']
    #allocation14 [shape = 'u8[32768]{0}', space=vmem, size = 0x8000, scoped, tag = 'output window, operand 0, single buffered']
    %19 = vsyncpa [#allocation3], 0
    %20 = vsyncpa [#allocation6], 0
    %21 = vsyncpa [#allocation9], 0
    %22 = vsyncpa [#allocation12], 0
    %23 = vsyncpa [#allocation4], 0
    // Predicated region
    $region2: #{seq2seq_gnn_forward.1} parent=1 // pred_check
      _
    $region3: #{seq2seq_gnn_forward.1} parent=1 // pred_check_branch
      %25 = sbr.rel (0) target = $region5
    $region4: #{seq2seq_gnn_forward.1} parent=1 // pred_region
      _
    $region5: #{seq2seq_gnn_forward.1} parent=1 // pred_fallthru
      _
    // Predicated region
    $region6: #{seq2seq_gnn_forward.1} parent=1 // pred_check
      _
    $region7: #{seq2seq_gnn_forward.1} parent=1 // pred_check_branch
      %27 = sbr.rel (0) target = $region9
    $region8: #{seq2seq_gnn_forward.1} parent=1 // pred_region
      %s29 = ssub.s32 512, 512
      %30 = vsyncadd [#allocation3], %s29
      %s31 = sshll.u32 [#allocation2], 4
      %s32 = int_to_ptr.vmem [resolvable:$true] %s31
      %37 = dma.hbm_to_vmem [thread:$0]  %s1, 512, %s32, [#allocation3], 64, 64, 4
    $region9: #{seq2seq_gnn_forward.1} parent=1 // pred_fallthru
      _
    // Predicated region
    $region10: #{seq2seq_gnn_forward.1} parent=1 // pred_check
      _
    $region11: #{seq2seq_gnn_forward.1} parent=1 // pred_check_branch
      %39 = sbr.rel (0) target = $region13
    $region12: #{seq2seq_gnn_forward.1} parent=1 // pred_region
      %s41 = ssub.s32 2048, 2048
      %42 = vsyncadd [#allocation6], %s41
      %s43 = sshll.u32 [#allocation5], 4
      %s44 = int_to_ptr.vmem [resolvable:$true] %s43
      %49 = dma.hbm_to_vmem [thread:$0]  %s2, 2048, %s44, [#allocation6], 64, 64, 4
    $region13: #{seq2seq_gnn_forward.1} parent=1 // pred_fallthru
      _
    // Predicated region
    $region14: #{seq2seq_gnn_forward.1} parent=1 // pred_check
      _
    $region15: #{seq2seq_gnn_forward.1} parent=1 // pred_check_branch
      %51 = sbr.rel (0) target = $region17
    $region16: #{seq2seq_gnn_forward.1} parent=1 // pred_region
      _
    $region17: #{seq2seq_gnn_forward.1} parent=1 // pred_fallthru
      _
    // Predicated region
    $region18: #{seq2seq_gnn_forward.1} parent=1 // pred_check
      _
    $region19: #{seq2seq_gnn_forward.1} parent=1 // pred_check_branch
      %53 = sbr.rel (0) target = $region21
    $region20: #{seq2seq_gnn_forward.1} parent=1 // pred_region
      _
    $region21: #{seq2seq_gnn_forward.1} parent=1 // pred_fallthru
      _
    // Predicated region
    $region22: #{seq2seq_gnn_forward.1} parent=1 // pred_check
      _
    $region23: #{seq2seq_gnn_forward.1} parent=1 // pred_check_branch
      %55 = sbr.rel (0) target = $region25
    $region24: #{seq2seq_gnn_forward.1} parent=1 // pred_region
      %s57 = ssub.s32 3072, 3072
      %58 = vsyncadd [#allocation6], %s57
      %s59 = sshll.u32 [#allocation7], 4
      %s60 = int_to_ptr.vmem [resolvable:$true] %s59
      %65 = dma.hbm_to_vmem [thread:$0]  %s5, 3072, %s60, [#allocation6], 192, 192, 12
    $region25: #{seq2seq_gnn_forward.1} parent=1 // pred_fallthru
      _
    // Predicated region
    $region26: #{seq2seq_gnn_forward.1} parent=1 // pred_check
      _
    $region27: #{seq2seq_gnn_forward.1} parent=1 // pred_check_branch
      %67 = sbr.rel (0) target = $region29
    $region28: #{seq2seq_gnn_forward.1} parent=1 // pred_region
      _
    $region29: #{seq2seq_gnn_forward.1} parent=1 // pred_fallthru
      _
    // Predicated region
    $region30: #{seq2seq_gnn_forward.1} parent=1 // pred_check
      _
    $region31: #{seq2seq_gnn_forward.1} parent=1 // pred_check_branch
      %69 = sbr.rel (0) target = $region33
    $region32: #{seq2seq_gnn_forward.1} parent=1 // pred_region
      _
    $region33: #{seq2seq_gnn_forward.1} parent=1 // pred_fallthru
      _
    // Predicated region
    $region34: #{seq2seq_gnn_forward.1} parent=1 // pred_check
      _
    $region35: #{seq2seq_gnn_forward.1} parent=1 // pred_check_branch
      %71 = sbr.rel (0) target = $region37
    $region36: #{seq2seq_gnn_forward.1} parent=1 // pred_region
      %s73 = ssub.s32 3072, 3072
      %74 = vsyncadd [#allocation9], %s73
      %s75 = sshll.u32 [#allocation8], 4
      %s76 = int_to_ptr.vmem [resolvable:$true] %s75
      %81 = dma.hbm_to_vmem [thread:$0]  %s8, 3072, %s76, [#allocation9], 192, 192, 12
    $region37: #{seq2seq_gnn_forward.1} parent=1 // pred_fallthru
      _
    // Predicated region
    $region38: #{seq2seq_gnn_forward.1} parent=1 // pred_check
      _
    $region39: #{seq2seq_gnn_forward.1} parent=1 // pred_check_branch
      %83 = sbr.rel (0) target = $region41
    $region40: #{seq2seq_gnn_forward.1} parent=1 // pred_region
      %s85 = ssub.s32 3072, 3072
      %86 = vsyncadd [#allocation9], %s85
      %s87 = sshll.u32 [#allocation10], 4
      %s88 = int_to_ptr.vmem [resolvable:$true] %s87
      %93 = dma.hbm_to_vmem [thread:$0]  %s9, 3072, %s88, [#allocation9], 192, 192, 12
    $region41: #{seq2seq_gnn_forward.1} parent=1 // pred_fallthru
      _
    // Predicated region
    $region42: #{seq2seq_gnn_forward.1} parent=1 // pred_check
      _
    $region43: #{seq2seq_gnn_forward.1} parent=1 // pred_check_branch
      %95 = sbr.rel (0) target = $region45
    $region44: #{seq2seq_gnn_forward.1} parent=1 // pred_region
      _
    $region45: #{seq2seq_gnn_forward.1} parent=1 // pred_fallthru
      _
    // Predicated region
    $region46: #{seq2seq_gnn_forward.1} parent=1 // pred_check
      _
    $region47: #{seq2seq_gnn_forward.1} parent=1 // pred_check_branch
      %97 = sbr.rel (0) target = $region49
    $region48: #{seq2seq_gnn_forward.1} parent=1 // pred_region
      %s99 = ssub.s32 48, 48
      %100 = vsyncadd [#allocation12], %s99
      %s102 = sshll.u32 [#allocation11], 4
      %s103 = int_to_ptr.vmem [resolvable:$true] %s102
      %105 = dma.hbm_to_vmem [thread:$0]  %s11, 48, %s103, [#allocation12]
    $region49: #{seq2seq_gnn_forward.1} parent=1 // pred_fallthru
      _
    // Predicated region
    $region50: #{seq2seq_gnn_forward.1} parent=1 // pred_check
      _
    $region51: #{seq2seq_gnn_forward.1} parent=1 // pred_check_branch
      %107 = sbr.rel (0) target = $region53
    $region52: #{seq2seq_gnn_forward.1} parent=1 // pred_region
      %s109 = ssub.s32 2048, 2048
      %110 = vsyncadd [#allocation12], %s109
      %s111 = sshll.u32 [#allocation13], 4
      %s112 = int_to_ptr.vmem [resolvable:$true] %s111
      %117 = dma.hbm_to_vmem [thread:$0]  %s12, 2048, %s112, [#allocation12], 64, 64, 4
    $region53: #{seq2seq_gnn_forward.1} parent=1 // pred_fallthru
      _
    // Predicated region
    $region54: #{seq2seq_gnn_forward.1} parent=1 // pred_check
      _
    $region55: #{seq2seq_gnn_forward.1} parent=1 // pred_check_branch
      %119 = sbr.rel (0) target = $region57
    $region56: #{seq2seq_gnn_forward.1} parent=1 // pred_region
      _
    $region57: #{seq2seq_gnn_forward.1} parent=1 // pred_fallthru
      _
    // Predicated region
    $region58: #{seq2seq_gnn_forward.1} parent=1 // pred_check
      _
    $region59: #{seq2seq_gnn_forward.1} parent=1 // pred_check_branch
      %121 = sbr.rel (0) target = $region61
    $region60: #{seq2seq_gnn_forward.1} parent=1 // pred_region
      %122 = dma.done [#allocation3], 512
    $region61: #{seq2seq_gnn_forward.1} parent=1 // pred_fallthru
      _
    // Predicated region
    $region62: #{seq2seq_gnn_forward.1} parent=1 // pred_check
      _
    $region63: #{seq2seq_gnn_forward.1} parent=1 // pred_check_branch
      %124 = sbr.rel (0) target = $region65
    $region64: #{seq2seq_gnn_forward.1} parent=1 // pred_region
      %125 = dma.done [#allocation6], 2048
    $region65: #{seq2seq_gnn_forward.1} parent=1 // pred_fallthru
      _
    // Predicated region
    $region66: #{seq2seq_gnn_forward.1} parent=1 // pred_check
      _
    $region67: #{seq2seq_gnn_forward.1} parent=1 // pred_check_branch
      %127 = sbr.rel (0) target = $region69
    $region68: #{seq2seq_gnn_forward.1} parent=1 // pred_region
      %128 = dma.done [#allocation6], 3072
    $region69: #{seq2seq_gnn_forward.1} parent=1 // pred_fallthru
      _
    // Predicated region
    $region70: #{seq2seq_gnn_forward.1} parent=1 // pred_check
      _
    $region71: #{seq2seq_gnn_forward.1} parent=1 // pred_check_branch
      %130 = sbr.rel (0) target = $region73
    $region72: #{seq2seq_gnn_forward.1} parent=1 // pred_region
      %131 = dma.done [#allocation9], 3072
    $region73: #{seq2seq_gnn_forward.1} parent=1 // pred_fallthru
      _
    // Predicated region
    $region74: #{seq2seq_gnn_forward.1} parent=1 // pred_check
      _
    $region75: #{seq2seq_gnn_forward.1} parent=1 // pred_check_branch
      %133 = sbr.rel (0) target = $region77
    $region76: #{seq2seq_gnn_forward.1} parent=1 // pred_region
      %134 = dma.done [#allocation9], 3072
    $region77: #{seq2seq_gnn_forward.1} parent=1 // pred_fallthru
      _
    // Predicated region
    $region78: #{seq2seq_gnn_forward.1} parent=1 // pred_check
      _
    $region79: #{seq2seq_gnn_forward.1} parent=1 // pred_check_branch
      %136 = sbr.rel (0) target = $region81
    $region80: #{seq2seq_gnn_forward.1} parent=1 // pred_region
      %137 = dma.done [#allocation12], 48
    $region81: #{seq2seq_gnn_forward.1} parent=1 // pred_fallthru
      _
    // Predicated region
    $region82: #{seq2seq_gnn_forward.1} parent=1 // pred_check
      _
    $region83: #{seq2seq_gnn_forward.1} parent=1 // pred_check_branch
      %139 = sbr.rel (0) target = $region85
    $region84: #{seq2seq_gnn_forward.1} parent=1 // pred_region
      %140 = dma.done [#allocation12], 2048
    $region85: #{seq2seq_gnn_forward.1} parent=1 // pred_fallthru
      _
    %v142 = vld [vmem:[%s0] sm:$0xff]
    %v143 = vld [vmem:[%s0 + $0x8] sm:$0xff]
    %v144 = vld [vmem:[%s0 + $0x10] sm:$0xff]
    %v145 = vld [vmem:[%s0 + $0x18] sm:$0xff]
    %v146 = vld [vmem:[%s0 + $0x20] sm:$0xff]
    %v147 = vld [vmem:[%s0 + $0x28] sm:$0xff]
    %v148 = vld [vmem:[%s0 + $0x30] sm:$0xff]
    %v149 = vld [vmem:[%s0 + $0x38] sm:$0xff]
    %v150 = vld [vmem:[%s0 + $0x40] sm:$0xff]
    %v151 = vld [vmem:[%s0 + $0x48] sm:$0xff]
    %v152 = vld [vmem:[%s0 + $0x50] sm:$0xff]
    %v153 = vld [vmem:[%s0 + $0x58] sm:$0xff]
    %v154 = vld [vmem:[%s0 + $0x60] sm:$0xff]
    %v155 = vld [vmem:[%s0 + $0x68] sm:$0xff]
    %v156 = vld [vmem:[%s0 + $0x70] sm:$0xff]
    %v157 = vld [vmem:[%s0 + $0x78] sm:$0xff]
    %v158 = vlaneseq
    %v159 = vand.u32 %v158, 127
    %v160 = vadd.s32 %v159, 128
    %161 = vset.pattern.permute.xlu0 0
    %162 = vperm.xlu0 %161, %v142
    %v163 = vpop.permute.xlu0 %162
    %164 = vset.pattern.permute.xlu0 0
    %165 = vperm.xlu0 %164, %v143
    %v166 = vpop.permute.xlu0 %165
    %167 = vset.pattern.permute.xlu0 0
    %168 = vperm.xlu0 %167, %v144
    %v169 = vpop.permute.xlu0 %168
    %170 = vset.pattern.permute.xlu0 0
    %171 = vperm.xlu0 %170, %v145
    %v172 = vpop.permute.xlu0 %171
    %173 = vset.pattern.permute.xlu0 0
    %174 = vperm.xlu0 %173, %v146
    %v175 = vpop.permute.xlu0 %174
    %176 = vset.pattern.permute.xlu0 0
    %177 = vperm.xlu0 %176, %v147
    %v178 = vpop.permute.xlu0 %177
    %179 = vset.pattern.permute.xlu0 0
    %180 = vperm.xlu0 %179, %v148
    %v181 = vpop.permute.xlu0 %180
    %182 = vset.pattern.permute.xlu0 0
    %183 = vperm.xlu0 %182, %v149
    %v184 = vpop.permute.xlu0 %183
    %185 = vset.pattern.permute.xlu0 0
    %186 = vperm.xlu0 %185, %v150
    %v187 = vpop.permute.xlu0 %186
    %188 = vset.pattern.permute.xlu0 0
    %189 = vperm.xlu0 %188, %v151
    %v190 = vpop.permute.xlu0 %189
    %191 = vset.pattern.permute.xlu0 0
    %192 = vperm.xlu0 %191, %v152
    %v193 = vpop.permute.xlu0 %192
    %194 = vset.pattern.permute.xlu0 0
    %195 = vperm.xlu0 %194, %v153
    %v196 = vpop.permute.xlu0 %195
    %197 = vset.pattern.permute.xlu0 0
    %198 = vperm.xlu0 %197, %v154
    %v199 = vpop.permute.xlu0 %198
    %200 = vset.pattern.permute.xlu0 0
    %201 = vperm.xlu0 %200, %v155
    %v202 = vpop.permute.xlu0 %201
    %203 = vset.pattern.permute.xlu0 0
    %204 = vperm.xlu0 %203, %v156
    %v205 = vpop.permute.xlu0 %204
    %206 = vset.pattern.permute.xlu0 0
    %207 = vperm.xlu0 %206, %v157
    %v208 = vpop.permute.xlu0 %207
    %vm209 = vcmp.eq.s32.totalorder %v163, %v159
    %vm210 = vcmp.eq.s32.totalorder %v163, %v160
    %vm211 = vcmp.eq.s32.totalorder %v166, %v159
    %vm212 = vcmp.eq.s32.totalorder %v166, %v160
    %vm213 = vcmp.eq.s32.totalorder %v169, %v159
    %vm214 = vcmp.eq.s32.totalorder %v169, %v160
    %vm215 = vcmp.eq.s32.totalorder %v172, %v159
    %vm216 = vcmp.eq.s32.totalorder %v172, %v160
    %vm217 = vcmp.eq.s32.totalorder %v175, %v159
    %vm218 = vcmp.eq.s32.totalorder %v175, %v160
    %vm219 = vcmp.eq.s32.totalorder %v178, %v159
    %vm220 = vcmp.eq.s32.totalorder %v178, %v160
    %vm221 = vcmp.eq.s32.totalorder %v181, %v159
    %vm222 = vcmp.eq.s32.totalorder %v181, %v160
    %vm223 = vcmp.eq.s32.totalorder %v184, %v159
    %vm224 = vcmp.eq.s32.totalorder %v184, %v160
    %vm225 = vcmp.eq.s32.totalorder %v187, %v159
    %vm226 = vcmp.eq.s32.totalorder %v187, %v160
    %vm227 = vcmp.eq.s32.totalorder %v190, %v159
    %vm228 = vcmp.eq.s32.totalorder %v190, %v160
    %vm229 = vcmp.eq.s32.totalorder %v193, %v159
    %vm230 = vcmp.eq.s32.totalorder %v193, %v160
    %vm231 = vcmp.eq.s32.totalorder %v196, %v159
    %vm232 = vcmp.eq.s32.totalorder %v196, %v160
    %vm233 = vcmp.eq.s32.totalorder %v199, %v159
    %vm234 = vcmp.eq.s32.totalorder %v199, %v160
    %vm235 = vcmp.eq.s32.totalorder %v202, %v159
    %vm236 = vcmp.eq.s32.totalorder %v202, %v160
    %vm237 = vcmp.eq.s32.totalorder %v205, %v159
    %vm238 = vcmp.eq.s32.totalorder %v205, %v160
    %vm239 = vcmp.eq.s32.totalorder %v208, %v159
    %vm240 = vcmp.eq.s32.totalorder %v208, %v160
    %v241 = vsel %vm209, 1.0, 0.0
    %v242 = vsel %vm210, 1.0, 0.0
    %v243 = vsel %vm211, 1.0, 0.0
    %v244 = vsel %vm212, 1.0, 0.0
    %v245 = vsel %vm213, 1.0, 0.0
    %v246 = vsel %vm214, 1.0, 0.0
    %v247 = vsel %vm215, 1.0, 0.0
    %v248 = vsel %vm216, 1.0, 0.0
    %v249 = vsel %vm217, 1.0, 0.0
    %v250 = vsel %vm218, 1.0, 0.0
    %v251 = vsel %vm219, 1.0, 0.0
    %v252 = vsel %vm220, 1.0, 0.0
    %v253 = vsel %vm221, 1.0, 0.0
    %v254 = vsel %vm222, 1.0, 0.0
    %v255 = vsel %vm223, 1.0, 0.0
    %v256 = vsel %vm224, 1.0, 0.0
    %v257 = vsel %vm225, 1.0, 0.0
    %v258 = vsel %vm226, 1.0, 0.0
    %v259 = vsel %vm227, 1.0, 0.0
    %v260 = vsel %vm228, 1.0, 0.0
    %v261 = vsel %vm229, 1.0, 0.0
    %v262 = vsel %vm230, 1.0, 0.0
    %v263 = vsel %vm231, 1.0, 0.0
    %v264 = vsel %vm232, 1.0, 0.0
    %v265 = vsel %vm233, 1.0, 0.0
    %v266 = vsel %vm234, 1.0, 0.0
    %v267 = vsel %vm235, 1.0, 0.0
    %v268 = vsel %vm236, 1.0, 0.0
    %v269 = vsel %vm237, 1.0, 0.0
    %v270 = vsel %vm238, 1.0, 0.0
    %v271 = vsel %vm239, 1.0, 0.0
    %v272 = vsel %vm240, 1.0, 0.0
    %v273 = vpack.c.bf16 %v243, %v241
    %v274 = vpack.c.bf16 %v244, %v242
    %v275 = vpack.c.bf16 %v247, %v245
    %v276 = vpack.c.bf16 %v248, %v246
    %v277 = vpack.c.bf16 %v251, %v249
    %v278 = vpack.c.bf16 %v252, %v250
    %v279 = vpack.c.bf16 %v255, %v253
    %v280 = vpack.c.bf16 %v256, %v254
    %v281 = vpack.c.bf16 %v259, %v257
    %v282 = vpack.c.bf16 %v260, %v258
    %v283 = vpack.c.bf16 %v263, %v261
    %v284 = vpack.c.bf16 %v264, %v262
    %v285 = vpack.c.bf16 %v267, %v265
    %v286 = vpack.c.bf16 %v268, %v266
    %v287 = vpack.c.bf16 %v271, %v269
    %v288 = vpack.c.bf16 %v272, %v270
    %v289 = vld [vmem:[#allocation5] sm:$0xf]
    %v290 = vld [vmem:[#allocation5 + $0x4] sm:$0xf]
    %v291 = vld [vmem:[#allocation5 + $0x8] sm:$0xf]
    %v292 = vld [vmem:[#allocation5 + $0xc] sm:$0xf]
    %v293 = vld [vmem:[#allocation5 + $0x10] sm:$0xf]
    %v294 = vld [vmem:[#allocation5 + $0x14] sm:$0xf]
    %v295 = vld [vmem:[#allocation5 + $0x18] sm:$0xf]
    %v296 = vld [vmem:[#allocation5 + $0x1c] sm:$0xf]
    %v297 = vld [vmem:[#allocation5 + $0x20] sm:$0xf]
    %v298 = vld [vmem:[#allocation5 + $0x24] sm:$0xf]
    %v299 = vld [vmem:[#allocation5 + $0x28] sm:$0xf]
    %v300 = vld [vmem:[#allocation5 + $0x2c] sm:$0xf]
    %v301 = vld [vmem:[#allocation5 + $0x30] sm:$0xf]
    %v302 = vld [vmem:[#allocation5 + $0x34] sm:$0xf]
    %v303 = vld [vmem:[#allocation5 + $0x38] sm:$0xf]
    %v304 = vld [vmem:[#allocation5 + $0x3c] sm:$0xf]
    %v305 = vld [vmem:[#allocation5 + $0x40] sm:$0xf]
    %v306 = vld [vmem:[#allocation5 + $0x44] sm:$0xf]
    %v307 = vld [vmem:[#allocation5 + $0x48] sm:$0xf]
    %v308 = vld [vmem:[#allocation5 + $0x4c] sm:$0xf]
    %v309 = vld [vmem:[#allocation5 + $0x50] sm:$0xf]
    %v310 = vld [vmem:[#allocation5 + $0x54] sm:$0xf]
    %v311 = vld [vmem:[#allocation5 + $0x58] sm:$0xf]
    %v312 = vld [vmem:[#allocation5 + $0x5c] sm:$0xf]
    %v313 = vld [vmem:[#allocation5 + $0x60] sm:$0xf]
    %v314 = vld [vmem:[#allocation5 + $0x64] sm:$0xf]
    %v315 = vld [vmem:[#allocation5 + $0x68] sm:$0xf]
    %v316 = vld [vmem:[#allocation5 + $0x6c] sm:$0xf]
    %v317 = vld [vmem:[#allocation5 + $0x70] sm:$0xf]
    %v318 = vld [vmem:[#allocation5 + $0x74] sm:$0xf]
    %v319 = vld [vmem:[#allocation5 + $0x78] sm:$0xf]
    %v320 = vld [vmem:[#allocation5 + $0x7c] sm:$0xf]
    %v353 = vunpack.c.l.b16 %v289
    %v354 = vunpack.c.l.b16 %v290
    %v355 = vunpack.c.l.b16 %v291
    %v356 = vunpack.c.l.b16 %v292
    %v357 = vunpack.c.l.b16 %v293
    %v358 = vunpack.c.l.b16 %v294
    %v359 = vunpack.c.l.b16 %v295
    %v360 = vunpack.c.l.b16 %v296
    %v361 = vunpack.c.l.b16 %v297
    %v362 = vunpack.c.l.b16 %v298
    %v363 = vunpack.c.l.b16 %v299
    %v364 = vunpack.c.l.b16 %v300
    %v365 = vunpack.c.l.b16 %v301
    %v366 = vunpack.c.l.b16 %v302
    %v367 = vunpack.c.l.b16 %v303
    %v368 = vunpack.c.l.b16 %v304
    %v369 = vunpack.c.l.b16 %v305
    %v370 = vunpack.c.l.b16 %v306
    %v371 = vunpack.c.l.b16 %v307
    %v372 = vunpack.c.l.b16 %v308
    %v373 = vunpack.c.l.b16 %v309
    %v374 = vunpack.c.l.b16 %v310
    %v375 = vunpack.c.l.b16 %v311
    %v376 = vunpack.c.l.b16 %v312
    %v377 = vunpack.c.l.b16 %v313
    %v378 = vunpack.c.l.b16 %v314
    %v379 = vunpack.c.l.b16 %v315
    %v380 = vunpack.c.l.b16 %v316
    %v381 = vunpack.c.l.b16 %v317
    %v382 = vunpack.c.l.b16 %v318
    %v383 = vunpack.c.l.b16 %v319
    %v384 = vunpack.c.l.b16 %v320
    %v385 = vpack.c.b16 %v354, %v353
    %v386 = vpack.c.b16 %v356, %v355
    %v387 = vpack.c.b16 %v358, %v357
    %v388 = vpack.c.b16 %v360, %v359
    %v389 = vpack.c.b16 %v362, %v361
    %v390 = vpack.c.b16 %v364, %v363
    %v391 = vpack.c.b16 %v366, %v365
    %v392 = vpack.c.b16 %v368, %v367
    %v393 = vpack.c.b16 %v370, %v369
    %v394 = vpack.c.b16 %v372, %v371
    %v395 = vpack.c.b16 %v374, %v373
    %v396 = vpack.c.b16 %v376, %v375
    %v397 = vpack.c.b16 %v378, %v377
    %v398 = vpack.c.b16 %v380, %v379
    %v399 = vpack.c.b16 %v382, %v381
    %v400 = vpack.c.b16 %v384, %v383
    %417 = vmatprep.subr.bf16.mxu0 0
    %418 = vmatpush1.bf16.msra.mxu0 %v385
    %419 = vmatprep.subr.bf16.mxu0 0
    %420 = vmatpush1.bf16.msra.mxu0 %v386
    %421 = vmatprep.subr.bf16.mxu0 0
    %422 = vmatpush1.bf16.msra.mxu0 %v387
    %423 = vmatprep.subr.bf16.mxu0 0
    %424 = vmatpush1.bf16.msra.mxu0 %v388
    %425 = vmatprep.subr.bf16.mxu0 0
    %426 = vmatpush1.bf16.msra.mxu0 %v389
    %427 = vmatprep.subr.bf16.mxu0 0
    %428 = vmatpush1.bf16.msra.mxu0 %v390
    %429 = vmatprep.subr.bf16.mxu0 0
    %430 = vmatpush1.bf16.msra.mxu0 %v391
    %431 = vmatprep.subr.bf16.mxu0 0
    %432 = vmatpush1.bf16.msra.mxu0 %v392
    %433 = vmatprep.subr.bf16.mxu0 0
    %434 = vmatpush1.bf16.msra.mxu0 %v393
    %435 = vmatprep.subr.bf16.mxu0 0
    %436 = vmatpush1.bf16.msra.mxu0 %v394
    %437 = vmatprep.subr.bf16.mxu0 0
    %438 = vmatpush1.bf16.msra.mxu0 %v395
    %439 = vmatprep.subr.bf16.mxu0 0
    %440 = vmatpush1.bf16.msra.mxu0 %v396
    %441 = vmatprep.subr.bf16.mxu0 0
    %442 = vmatpush1.bf16.msra.mxu0 %v397
    %443 = vmatprep.subr.bf16.mxu0 0
    %444 = vmatpush1.bf16.msra.mxu0 %v398
    %445 = vmatprep.subr.bf16.mxu0 0
    %446 = vmatpush1.bf16.msra.mxu0 %v399
    %447 = vmatprep.subr.bf16.mxu0 0
    %448 = vmatpush1.bf16.msra.mxu0 %v400
    %449 = vmatprep.mubr.bf16.mxu0 %v274
    %450 = vmatmul.mubr.bf16.gmra.mrb[0].mxu0 %v273
    %v451 = vpop.f32.mrb[0].mxu0
    %v452 = vadd.f32 0.0, %v451
    %v453 = vpop.f32.mrb[0].mxu0
    %v454 = vpop.f32.mrb[0].mxu0
    %v455 = vadd.f32 0.0, %v454
    %v456 = vpop.f32.mrb[0].mxu0
    %457 = vmatprep.mubr.bf16.mxu0 %v276
    %458 = vmatmul.mubr.bf16.gmra.mrb[0].mxu0 %v275
    %v459 = vpop.f32.mrb[0].mxu0
    %v460 = vadd.f32 0.0, %v459
    %v461 = vpop.f32.mrb[0].mxu0
    %v462 = vpop.f32.mrb[0].mxu0
    %v463 = vadd.f32 0.0, %v462
    %v464 = vpop.f32.mrb[0].mxu0
    %465 = vmatprep.mubr.bf16.mxu0 %v278
    %466 = vmatmul.mubr.bf16.gmra.mrb[0].mxu0 %v277
    %v467 = vpop.f32.mrb[0].mxu0
    %v468 = vadd.f32 0.0, %v467
    %v469 = vpop.f32.mrb[0].mxu0
    %v470 = vpop.f32.mrb[0].mxu0
    %v471 = vadd.f32 0.0, %v470
    %v472 = vpop.f32.mrb[0].mxu0
    %473 = vmatprep.mubr.bf16.mxu0 %v280
    %474 = vmatmul.mubr.bf16.gmra.mrb[0].mxu0 %v279
    %v475 = vpop.f32.mrb[0].mxu0
    %v476 = vadd.f32 0.0, %v475
    %v477 = vpop.f32.mrb[0].mxu0
    %v478 = vpop.f32.mrb[0].mxu0
    %v479 = vadd.f32 0.0, %v478
    %v480 = vpop.f32.mrb[0].mxu0
    %481 = vmatprep.mubr.bf16.mxu0 %v282
    %482 = vmatmul.mubr.bf16.gmra.mrb[0].mxu0 %v281
    %v483 = vpop.f32.mrb[0].mxu0
    %v484 = vadd.f32 0.0, %v483
    %v485 = vpop.f32.mrb[0].mxu0
    %v486 = vpop.f32.mrb[0].mxu0
    %v487 = vadd.f32 0.0, %v486
    %v488 = vpop.f32.mrb[0].mxu0
    %489 = vmatprep.mubr.bf16.mxu0 %v284
    %490 = vmatmul.mubr.bf16.gmra.mrb[0].mxu0 %v283
    %v491 = vpop.f32.mrb[0].mxu0
    %v492 = vadd.f32 0.0, %v491
    %v493 = vpop.f32.mrb[0].mxu0
    %v494 = vpop.f32.mrb[0].mxu0
    %v495 = vadd.f32 0.0, %v494
    %v496 = vpop.f32.mrb[0].mxu0
    %497 = vmatprep.mubr.bf16.mxu0 %v286
    %498 = vmatmul.mubr.bf16.gmra.mrb[0].mxu0 %v285
    %v499 = vpop.f32.mrb[0].mxu0
    %v500 = vadd.f32 0.0, %v499
    %v501 = vpop.f32.mrb[0].mxu0
    %v502 = vpop.f32.mrb[0].mxu0
    %v503 = vadd.f32 0.0, %v502
    %v504 = vpop.f32.mrb[0].mxu0
    %505 = vmatprep.mubr.bf16.mxu0 %v288
    %506 = vmatmul.mubr.bf16.gmra.mrb[0].mxu0 %v287
    %v507 = vpop.f32.mrb[0].mxu0
    %v508 = vadd.f32 0.0, %v507
    %v509 = vpop.f32.mrb[0].mxu0
    %v510 = vpop.f32.mrb[0].mxu0
    %v511 = vadd.f32 0.0, %v510
    %v512 = vpop.f32.mrb[0].mxu0
    %513 = vdwg.mxu0
    %v514 = vpack.c.bf16 %v455, %v452
    %v515 = vpack.c.bf16 %v463, %v460
    %v516 = vpack.c.bf16 %v471, %v468
    %v517 = vpack.c.bf16 %v479, %v476
    %v518 = vpack.c.bf16 %v487, %v484
    %v519 = vpack.c.bf16 %v495, %v492
    %v520 = vpack.c.bf16 %v503, %v500
    %v521 = vpack.c.bf16 %v511, %v508
    %v522 = vld [vmem:[#allocation2] sm:$0xf]
    %v523 = vld [vmem:[#allocation2 + $0x4] sm:$0xf]
    %v524 = vld [vmem:[#allocation2 + $0x8] sm:$0xf]
    %v525 = vld [vmem:[#allocation2 + $0xc] sm:$0xf]
    %v526 = vld [vmem:[#allocation2 + $0x10] sm:$0xf]
    %v527 = vld [vmem:[#allocation2 + $0x14] sm:$0xf]
    %v528 = vld [vmem:[#allocation2 + $0x18] sm:$0xf]
    %v529 = vld [vmem:[#allocation2 + $0x1c] sm:$0xf]
    %vm530 = vcmask 257024
    %v531 = vsel %vm530, %v522, 0.0
    %v532 = vrot.slane %v531, 4
    %v533 = vadd.f32 %v531, %v532
    %v534 = vrot.slane %v533, 2
    %v535 = vadd.f32 %v533, %v534
    %v536 = vrot.slane %v535, 1
    %v537 = vadd.f32 %v535, %v536
    %v538 = vsel %vm530, %v523, 0.0
    %v539 = vrot.slane %v538, 4
    %v540 = vadd.f32 %v538, %v539
    %v541 = vrot.slane %v540, 2
    %v542 = vadd.f32 %v540, %v541
    %v543 = vrot.slane %v542, 1
    %v544 = vadd.f32 %v542, %v543
    %v545 = vsel %vm530, %v524, 0.0
    %v546 = vrot.slane %v545, 4
    %v547 = vadd.f32 %v545, %v546
    %v548 = vrot.slane %v547, 2
    %v549 = vadd.f32 %v547, %v548
    %v550 = vrot.slane %v549, 1
    %v551 = vadd.f32 %v549, %v550
    %v552 = vsel %vm530, %v525, 0.0
    %v553 = vrot.slane %v552, 4
    %v554 = vadd.f32 %v552, %v553
    %v555 = vrot.slane %v554, 2
    %v556 = vadd.f32 %v554, %v555
    %v557 = vrot.slane %v556, 1
    %v558 = vadd.f32 %v556, %v557
    %v559 = vsel %vm530, %v526, 0.0
    %v560 = vrot.slane %v559, 4
    %v561 = vadd.f32 %v559, %v560
    %v562 = vrot.slane %v561, 2
    %v563 = vadd.f32 %v561, %v562
    %v564 = vrot.slane %v563, 1
    %v565 = vadd.f32 %v563, %v564
    %v566 = vsel %vm530, %v527, 0.0
    %v567 = vrot.slane %v566, 4
    %v568 = vadd.f32 %v566, %v567
    %v569 = vrot.slane %v568, 2
    %v570 = vadd.f32 %v568, %v569
    %v571 = vrot.slane %v570, 1
    %v572 = vadd.f32 %v570, %v571
    %v573 = vsel %vm530, %v528, 0.0
    %v574 = vrot.slane %v573, 4
    %v575 = vadd.f32 %v573, %v574
    %v576 = vrot.slane %v575, 2
    %v577 = vadd.f32 %v575, %v576
    %v578 = vrot.slane %v577, 1
    %v579 = vadd.f32 %v577, %v578
    %v580 = vsel %vm530, %v529, 0.0
    %v581 = vrot.slane %v580, 4
    %v582 = vadd.f32 %v580, %v581
    %v583 = vrot.slane %v582, 2
    %v584 = vadd.f32 %v582, %v583
    %v585 = vrot.slane %v584, 1
    %v586 = vadd.f32 %v584, %v585
    %v587 = vrcp.pop 4.0
    %v588 = vmul.f32 %v537, %v587
    %v589 = vmul.f32 %v544, %v587
    %v590 = vmul.f32 %v551, %v587
    %v591 = vmul.f32 %v558, %v587
    %v592 = vmul.f32 %v565, %v587
    %v593 = vmul.f32 %v572, %v587
    %v594 = vmul.f32 %v579, %v587
    %v595 = vmul.f32 %v586, %v587
    %v596 = vld [vmem:[%s3] sm:$0xff]
    %v597 = vld [vmem:[%s3 + $0x8] sm:$0xf]
    %v598 = vld [vmem:[%s3 + $0xc] sm:$0xff]
    %v599 = vld [vmem:[%s3 + $0x14] sm:$0xf]
    %v600 = vld [vmem:[%s3 + $0x18] sm:$0xff]
    %v601 = vld [vmem:[%s3 + $0x20] sm:$0xf]
    %v602 = vld [vmem:[%s3 + $0x24] sm:$0xff]
    %v603 = vld [vmem:[%s3 + $0x2c] sm:$0xf]
    %v604 = vld [vmem:[%s3 + $0x30] sm:$0xff]
    %v605 = vld [vmem:[%s3 + $0x38] sm:$0xf]
    %v606 = vld [vmem:[%s3 + $0x3c] sm:$0xff]
    %v607 = vld [vmem:[%s3 + $0x44] sm:$0xf]
    %v608 = vld [vmem:[%s3 + $0x48] sm:$0xff]
    %v609 = vld [vmem:[%s3 + $0x50] sm:$0xf]
    %v610 = vld [vmem:[%s3 + $0x54] sm:$0xff]
    %v611 = vld [vmem:[%s3 + $0x5c] sm:$0xf]
    %v612 = vld [vmem:[%s3 + $0x60] sm:$0xff]
    %v613 = vld [vmem:[%s3 + $0x68] sm:$0xf]
    %v614 = vld [vmem:[%s3 + $0x6c] sm:$0xff]
    %v615 = vld [vmem:[%s3 + $0x74] sm:$0xf]
    %v616 = vld [vmem:[%s3 + $0x78] sm:$0xff]
    %v617 = vld [vmem:[%s3 + $0x80] sm:$0xf]
    %v618 = vld [vmem:[%s3 + $0x84] sm:$0xff]
    %v619 = vld [vmem:[%s3 + $0x8c] sm:$0xf]
    %v620 = vld [vmem:[%s3 + $0x90] sm:$0xff]
    %v621 = vld [vmem:[%s3 + $0x98] sm:$0xf]
    %v622 = vld [vmem:[%s3 + $0x9c] sm:$0xff]
    %v623 = vld [vmem:[%s3 + $0xa4] sm:$0xf]
    %v624 = vld [vmem:[%s3 + $0xa8] sm:$0xff]
    %v625 = vld [vmem:[%s3 + $0xb0] sm:$0xf]
    %v626 = vld [vmem:[%s3 + $0xb4] sm:$0xff]
    %v627 = vld [vmem:[%s3 + $0xbc] sm:$0xf]
    %v660 = vunpack.c.l.b16 %v596
    %v661 = vunpack.c.h.b16 %v596
    %v662 = vunpack.c.l.b16 %v597
    %v663 = vunpack.c.l.b16 %v598
    %v664 = vunpack.c.h.b16 %v598
    %v665 = vunpack.c.l.b16 %v599
    %v666 = vunpack.c.l.b16 %v600
    %v667 = vunpack.c.h.b16 %v600
    %v668 = vunpack.c.l.b16 %v601
    %v669 = vunpack.c.l.b16 %v602
    %v670 = vunpack.c.h.b16 %v602
    %v671 = vunpack.c.l.b16 %v603
    %v672 = vunpack.c.l.b16 %v604
    %v673 = vunpack.c.h.b16 %v604
    %v674 = vunpack.c.l.b16 %v605
    %v675 = vunpack.c.l.b16 %v606
    %v676 = vunpack.c.h.b16 %v606
    %v677 = vunpack.c.l.b16 %v607
    %v678 = vunpack.c.l.b16 %v608
    %v679 = vunpack.c.h.b16 %v608
    %v680 = vunpack.c.l.b16 %v609
    %v681 = vunpack.c.l.b16 %v610
    %v682 = vunpack.c.h.b16 %v610
    %v683 = vunpack.c.l.b16 %v611
    %v684 = vunpack.c.l.b16 %v612
    %v685 = vunpack.c.h.b16 %v612
    %v686 = vunpack.c.l.b16 %v613
    %v687 = vunpack.c.l.b16 %v614
    %v688 = vunpack.c.h.b16 %v614
    %v689 = vunpack.c.l.b16 %v615
    %v690 = vunpack.c.l.b16 %v616
    %v691 = vunpack.c.h.b16 %v616
    %v692 = vunpack.c.l.b16 %v617
    %v693 = vunpack.c.l.b16 %v618
    %v694 = vunpack.c.h.b16 %v618
    %v695 = vunpack.c.l.b16 %v619
    %v696 = vunpack.c.l.b16 %v620
    %v697 = vunpack.c.h.b16 %v620
    %v698 = vunpack.c.l.b16 %v621
    %v699 = vunpack.c.l.b16 %v622
    %v700 = vunpack.c.h.b16 %v622
    %v701 = vunpack.c.l.b16 %v623
    %v702 = vunpack.c.l.b16 %v624
    %v703 = vunpack.c.h.b16 %v624
    %v704 = vunpack.c.l.b16 %v625
    %v705 = vunpack.c.l.b16 %v626
    %v706 = vunpack.c.h.b16 %v626
    %v707 = vunpack.c.l.b16 %v627
    %v708 = vpack.c.b16 %v663, %v660
    %v709 = vpack.c.b16 %v664, %v661
    %v710 = vpack.c.b16 %v665, %v662
    %v711 = vpack.c.b16 %v669, %v666
    %v712 = vpack.c.b16 %v670, %v667
    %v713 = vpack.c.b16 %v671, %v668
    %v714 = vpack.c.b16 %v675, %v672
    %v715 = vpack.c.b16 %v676, %v673
    %v716 = vpack.c.b16 %v677, %v674
    %v717 = vpack.c.b16 %v681, %v678
    %v718 = vpack.c.b16 %v682, %v679
    %v719 = vpack.c.b16 %v683, %v680
    %v720 = vpack.c.b16 %v687, %v684
    %v721 = vpack.c.b16 %v688, %v685
    %v722 = vpack.c.b16 %v689, %v686
    %v723 = vpack.c.b16 %v693, %v690
    %v724 = vpack.c.b16 %v694, %v691
    %v725 = vpack.c.b16 %v695, %v692
    %v726 = vpack.c.b16 %v699, %v696
    %v727 = vpack.c.b16 %v700, %v697
    %v728 = vpack.c.b16 %v701, %v698
    %v729 = vpack.c.b16 %v705, %v702
    %v730 = vpack.c.b16 %v706, %v703
    %v731 = vpack.c.b16 %v707, %v704
    %756 = vmatprep.subr.bf16.mxu0 %v709
    %757 = vmatpush1.bf16.msra.mxu0 %v708
    %758 = vmatprep.subr.bf16.mxu0 %v712
    %759 = vmatpush1.bf16.msra.mxu0 %v711
    %760 = vmatprep.subr.bf16.mxu0 %v715
    %761 = vmatpush1.bf16.msra.mxu0 %v714
    %762 = vmatprep.subr.bf16.mxu0 %v718
    %763 = vmatpush1.bf16.msra.mxu0 %v717
    %764 = vmatprep.subr.bf16.mxu0 %v721
    %765 = vmatpush1.bf16.msra.mxu0 %v720
    %766 = vmatprep.subr.bf16.mxu0 %v724
    %767 = vmatpush1.bf16.msra.mxu0 %v723
    %768 = vmatprep.subr.bf16.mxu0 %v727
    %769 = vmatpush1.bf16.msra.mxu0 %v726
    %770 = vmatprep.subr.bf16.mxu0 %v730
    %771 = vmatpush1.bf16.msra.mxu0 %v729
    %772 = vmatprep.subr.bf16.mxu0 0
    %773 = vmatpush1.bf16.msra.mxu0 0
    %774 = vmatprep.subr.bf16.mxu0 0
    %775 = vmatpush1.bf16.msra.mxu0 0
    %776 = vmatprep.subr.bf16.mxu0 0
    %777 = vmatpush1.bf16.msra.mxu0 0
    %778 = vmatprep.subr.bf16.mxu0 0
    %779 = vmatpush1.bf16.msra.mxu0 0
    %780 = vmatprep.subr.bf16.mxu0 0
    %781 = vmatpush1.bf16.msra.mxu0 0
    %782 = vmatprep.subr.bf16.mxu0 0
    %783 = vmatpush1.bf16.msra.mxu0 0
    %784 = vmatprep.subr.bf16.mxu0 0
    %785 = vmatpush1.bf16.msra.mxu0 0
    %786 = vmatprep.subr.bf16.mxu0 0
    %787 = vmatpush1.bf16.msra.mxu0 0
    %788 = vmatprep.mubr.bf16.mxu0 0
    %789 = vmatmul.mubr.bf16.gmra.mrb[0].mxu0 %v514
    %v790 = vpop.f32.mrb[0].mxu0
    %v791 = vadd.f32 0.0, %v790
    %v792 = vpop.f32.mrb[0].mxu0
    %v793 = vadd.f32 0.0, %v792
    %v794 = vpop.f32.mrb[0].mxu0
    %v795 = vadd.f32 0.0, %v794
    %v796 = vpop.f32.mrb[0].mxu0
    %v797 = vadd.f32 0.0, %v796
    %798 = vmatprep.mubr.bf16.mxu0 0
    %799 = vmatmul.mubr.bf16.gmra.mrb[0].mxu0 %v515
    %v800 = vpop.f32.mrb[0].mxu0
    %v801 = vadd.f32 0.0, %v800
    %v802 = vpop.f32.mrb[0].mxu0
    %v803 = vadd.f32 0.0, %v802
    %v804 = vpop.f32.mrb[0].mxu0
    %v805 = vadd.f32 0.0, %v804
    %v806 = vpop.f32.mrb[0].mxu0
    %v807 = vadd.f32 0.0, %v806
    %808 = vmatprep.mubr.bf16.mxu0 0
    %809 = vmatmul.mubr.bf16.gmra.mrb[0].mxu0 %v516
    %v810 = vpop.f32.mrb[0].mxu0
    %v811 = vadd.f32 0.0, %v810
    %v812 = vpop.f32.mrb[0].mxu0
    %v813 = vadd.f32 0.0, %v812
    %v814 = vpop.f32.mrb[0].mxu0
    %v815 = vadd.f32 0.0, %v814
    %v816 = vpop.f32.mrb[0].mxu0
    %v817 = vadd.f32 0.0, %v816
    %818 = vmatprep.mubr.bf16.mxu0 0
    %819 = vmatmul.mubr.bf16.gmra.mrb[0].mxu0 %v517
    %v820 = vpop.f32.mrb[0].mxu0
    %v821 = vadd.f32 0.0, %v820
    %v822 = vpop.f32.mrb[0].mxu0
    %v823 = vadd.f32 0.0, %v822
    %v824 = vpop.f32.mrb[0].mxu0
    %v825 = vadd.f32 0.0, %v824
    %v826 = vpop.f32.mrb[0].mxu0
    %v827 = vadd.f32 0.0, %v826
    %828 = vdwg.mxu0
    %829 = vmatprep.subr.bf16.mxu0 0
    %830 = vmatpush1.bf16.msra.mxu0 %v710
    %831 = vmatprep.subr.bf16.mxu0 0
    %832 = vmatpush1.bf16.msra.mxu0 %v713
    %833 = vmatprep.subr.bf16.mxu0 0
    %834 = vmatpush1.bf16.msra.mxu0 %v716
    %835 = vmatprep.subr.bf16.mxu0 0
    %836 = vmatpush1.bf16.msra.mxu0 %v719
    %837 = vmatprep.subr.bf16.mxu0 0
    %838 = vmatpush1.bf16.msra.mxu0 %v722
    %839 = vmatprep.subr.bf16.mxu0 0
    %840 = vmatpush1.bf16.msra.mxu0 %v725
    %841 = vmatprep.subr.bf16.mxu0 0
    %842 = vmatpush1.bf16.msra.mxu0 %v728
    %843 = vmatprep.subr.bf16.mxu0 0
    %844 = vmatpush1.bf16.msra.mxu0 %v731
    %845 = vmatprep.subr.bf16.mxu0 0
    %846 = vmatpush1.bf16.msra.mxu0 0
    %847 = vmatprep.subr.bf16.mxu0 0
    %848 = vmatpush1.bf16.msra.mxu0 0
    %849 = vmatprep.subr.bf16.mxu0 0
    %850 = vmatpush1.bf16.msra.mxu0 0
    %851 = vmatprep.subr.bf16.mxu0 0
    %852 = vmatpush1.bf16.msra.mxu0 0
    %853 = vmatprep.subr.bf16.mxu0 0
    %854 = vmatpush1.bf16.msra.mxu0 0
    %855 = vmatprep.subr.bf16.mxu0 0
    %856 = vmatpush1.bf16.msra.mxu0 0
    %857 = vmatprep.subr.bf16.mxu0 0
    %858 = vmatpush1.bf16.msra.mxu0 0
    %859 = vmatprep.subr.bf16.mxu0 0
    %860 = vmatpush1.bf16.msra.mxu0 0
    %861 = vmatprep.mubr.bf16.mxu0 0
    %862 = vmatmul.mubr.bf16.gmra.mrb[0].mxu0 %v514
    %v863 = vpop.f32.mrb[0].mxu0
    %v864 = vadd.f32 0.0, %v863
    %v865 = vpop.f32.mrb[0].mxu0
    %v866 = vpop.f32.mrb[0].mxu0
    %v867 = vadd.f32 0.0, %v866
    %v868 = vpop.f32.mrb[0].mxu0
    %869 = vmatprep.mubr.bf16.mxu0 0
    %870 = vmatmul.mubr.bf16.gmra.mrb[0].mxu0 %v515
    %v871 = vpop.f32.mrb[0].mxu0
    %v872 = vadd.f32 0.0, %v871
    %v873 = vpop.f32.mrb[0].mxu0
    %v874 = vpop.f32.mrb[0].mxu0
    %v875 = vadd.f32 0.0, %v874
    %v876 = vpop.f32.mrb[0].mxu0
    %877 = vmatprep.mubr.bf16.mxu0 0
    %878 = vmatmul.mubr.bf16.gmra.mrb[0].mxu0 %v516
    %v879 = vpop.f32.mrb[0].mxu0
    %v880 = vadd.f32 0.0, %v879
    %v881 = vpop.f32.mrb[0].mxu0
    %v882 = vpop.f32.mrb[0].mxu0
    %v883 = vadd.f32 0.0, %v882
    %v884 = vpop.f32.mrb[0].mxu0
    %885 = vmatprep.mubr.bf16.mxu0 0
    %886 = vmatmul.mubr.bf16.gmra.mrb[0].mxu0 %v517
    %v887 = vpop.f32.mrb[0].mxu0
    %v888 = vadd.f32 0.0, %v887
    %v889 = vpop.f32.mrb[0].mxu0
    %v890 = vpop.f32.mrb[0].mxu0
    %v891 = vadd.f32 0.0, %v890
    %v892 = vpop.f32.mrb[0].mxu0
    %893 = vdwg.mxu0
    %v894 = vpack.c.bf16 %v588, %v588
    %v895 = vpack.c.bf16 %v589, %v589
    %v896 = vpack.c.bf16 %v590, %v590
    %v897 = vpack.c.bf16 %v591, %v591
    %v898 = vpack.c.bf16 %v592, %v592
    %v899 = vpack.c.bf16 %v593, %v593
    %v900 = vpack.c.bf16 %v594, %v594
    %v901 = vpack.c.bf16 %v595, %v595
    %v902 = vld [vmem:[%s4] sm:$0xff]
    %v903 = vld [vmem:[%s4 + $0x8] sm:$0xf]
    %v904 = vld [vmem:[%s4 + $0xc] sm:$0xff]
    %v905 = vld [vmem:[%s4 + $0x14] sm:$0xf]
    %v906 = vld [vmem:[%s4 + $0x18] sm:$0xff]
    %v907 = vld [vmem:[%s4 + $0x20] sm:$0xf]
    %v908 = vld [vmem:[%s4 + $0x24] sm:$0xff]
    %v909 = vld [vmem:[%s4 + $0x2c] sm:$0xf]
    %v918 = vunpack.c.l.b16 %v894
    %v919 = vunpack.c.l.b16 %v895
    %v920 = vunpack.c.l.b16 %v896
    %v921 = vunpack.c.l.b16 %v897
    %v922 = vunpack.c.l.b16 %v898
    %v923 = vunpack.c.l.b16 %v899
    %v924 = vunpack.c.l.b16 %v900
    %v925 = vunpack.c.l.b16 %v901
    %vm926 = vcmask 1041409
    %v927 = vsel %vm926, %v919, %v918
    %vm928 = vcmask 1042434
    %v929 = vsel %vm928, %v920, %v927
    %vm930 = vcmask 1043459
    %v931 = vsel %vm930, %v921, %v929
    %vm932 = vcmask 1044484
    %v933 = vsel %vm932, %v922, %v931
    %vm934 = vcmask 1045509
    %v935 = vsel %vm934, %v923, %v933
    %vm936 = vcmask 1046534
    %v937 = vsel %vm936, %v924, %v935
    %vm938 = vcmask 1047559
    %v939 = vsel %vm938, %v925, %v937
    %v940 = vpack.c.b16 %v939, %v939
    %v949 = vunpack.c.l.b16 %v902
    %v950 = vunpack.c.h.b16 %v902
    %v951 = vunpack.c.l.b16 %v903
    %v952 = vunpack.c.l.b16 %v904
    %v953 = vunpack.c.h.b16 %v904
    %v954 = vunpack.c.l.b16 %v905
    %v955 = vunpack.c.l.b16 %v906
    %v956 = vunpack.c.h.b16 %v906
    %v957 = vunpack.c.l.b16 %v907
    %v958 = vunpack.c.l.b16 %v908
    %v959 = vunpack.c.h.b16 %v908
    %v960 = vunpack.c.l.b16 %v909
    %v961 = vpack.c.b16 %v952, %v949
    %v962 = vpack.c.b16 %v953, %v950
    %v963 = vpack.c.b16 %v954, %v951
    %v964 = vpack.c.b16 %v958, %v955
    %v965 = vpack.c.b16 %v959, %v956
    %v966 = vpack.c.b16 %v960, %v957
    %vm973 = vcmask 261120
    %v975 = vsel %vm973, %v940, 0
    %977 = vmatprep.subr.bf16.mxu0 %v962
    %978 = vmatpush1.bf16.msra.mxu0 %v961
    %979 = vmatprep.subr.bf16.mxu0 %v965
    %980 = vmatpush1.bf16.msra.mxu0 %v964
    %981 = vmatprep.subr.bf16.mxu0 0
    %982 = vmatpush1.bf16.msra.mxu0 0
    %983 = vmatprep.subr.bf16.mxu0 0
    %984 = vmatpush1.bf16.msra.mxu0 0
    %985 = vmatprep.subr.bf16.mxu0 0
    %986 = vmatpush1.bf16.msra.mxu0 0
    %987 = vmatprep.subr.bf16.mxu0 0
    %988 = vmatpush1.bf16.msra.mxu0 0
    %989 = vmatprep.subr.bf16.mxu0 0
    %990 = vmatpush1.bf16.msra.mxu0 0
    %991 = vmatprep.subr.bf16.mxu0 0
    %992 = vmatpush1.bf16.msra.mxu0 0
    %993 = vmatprep.subr.bf16.mxu0 0
    %994 = vmatpush1.bf16.msra.mxu0 0
    %995 = vmatprep.subr.bf16.mxu0 0
    %996 = vmatpush1.bf16.msra.mxu0 0
    %997 = vmatprep.subr.bf16.mxu0 0
    %998 = vmatpush1.bf16.msra.mxu0 0
    %999 = vmatprep.subr.bf16.mxu0 0
    %1000 = vmatpush1.bf16.msra.mxu0 0
    %1001 = vmatprep.subr.bf16.mxu0 0
    %1002 = vmatpush1.bf16.msra.mxu0 0
    %1003 = vmatprep.subr.bf16.mxu0 0
    %1004 = vmatpush1.bf16.msra.mxu0 0
    %1005 = vmatprep.subr.bf16.mxu0 0
    %1006 = vmatpush1.bf16.msra.mxu0 0
    %1007 = vmatprep.subr.bf16.mxu0 0
    %1008 = vmatpush1.bf16.msra.mxu0 0
    %1009 = vmatprep.mubr.bf16.mxu0 0
    %1010 = vmatmul.mubr.bf16.gmra.mrb[0].mxu0 %v975
    %v1011 = vpop.f32.mrb[0].mxu0
    %v1012 = vadd.f32 0.0, %v1011
    %v1013 = vpop.f32.mrb[0].mxu0
    %v1014 = vadd.f32 0.0, %v1013
    %v1015 = vpop.f32.mrb[0].mxu0
    %v1016 = vpop.f32.mrb[0].mxu0
    %1017 = vdwg.mxu0
    %1018 = vmatprep.subr.bf16.mxu0 0
    %1019 = vmatpush1.bf16.msra.mxu0 %v963
    %1020 = vmatprep.subr.bf16.mxu0 0
    %1021 = vmatpush1.bf16.msra.mxu0 %v966
    %1022 = vmatprep.subr.bf16.mxu0 0
    %1023 = vmatpush1.bf16.msra.mxu0 0
    %1024 = vmatprep.subr.bf16.mxu0 0
    %1025 = vmatpush1.bf16.msra.mxu0 0
    %1026 = vmatprep.subr.bf16.mxu0 0
    %1027 = vmatpush1.bf16.msra.mxu0 0
    %1028 = vmatprep.subr.bf16.mxu0 0
    %1029 = vmatpush1.bf16.msra.mxu0 0
    %1030 = vmatprep.subr.bf16.mxu0 0
    %1031 = vmatpush1.bf16.msra.mxu0 0
    %1032 = vmatprep.subr.bf16.mxu0 0
    %1033 = vmatpush1.bf16.msra.mxu0 0
    %1034 = vmatprep.subr.bf16.mxu0 0
    %1035 = vmatpush1.bf16.msra.mxu0 0
    %1036 = vmatprep.subr.bf16.mxu0 0
    %1037 = vmatpush1.bf16.msra.mxu0 0
    %1038 = vmatprep.subr.bf16.mxu0 0
    %1039 = vmatpush1.bf16.msra.mxu0 0
    %1040 = vmatprep.subr.bf16.mxu0 0
    %1041 = vmatpush1.bf16.msra.mxu0 0
    %1042 = vmatprep.subr.bf16.mxu0 0
    %1043 = vmatpush1.bf16.msra.mxu0 0
    %1044 = vmatprep.subr.bf16.mxu0 0
    %1045 = vmatpush1.bf16.msra.mxu0 0
    %1046 = vmatprep.subr.bf16.mxu0 0
    %1047 = vmatpush1.bf16.msra.mxu0 0
    %1048 = vmatprep.subr.bf16.mxu0 0
    %1049 = vmatpush1.bf16.msra.mxu0 0
    %1050 = vmatprep.mubr.bf16.mxu0 0
    %1051 = vmatmul.mubr.bf16.gmra.mrb[0].mxu0 %v975
    %v1052 = vpop.f32.mrb[0].mxu0
    %v1053 = vadd.f32 0.0, %v1052
    %v1054 = vpop.f32.mrb[0].mxu0
    %v1055 = vpop.f32.mrb[0].mxu0
    %v1056 = vpop.f32.mrb[0].mxu0
    %1057 = vdwg.mxu0
    %v1058 = vadd.f32 %v791, %v1012
    %v1059 = vadd.f32 %v793, %v1014
    %v1060 = vadd.f32 %v864, %v1053
    %v1061 = vadd.f32 %v795, %v1012
    %v1062 = vadd.f32 %v797, %v1014
    %v1063 = vadd.f32 %v867, %v1053
    %v1064 = vadd.f32 %v801, %v1012
    %v1065 = vadd.f32 %v803, %v1014
    %v1066 = vadd.f32 %v872, %v1053
    %v1067 = vadd.f32 %v805, %v1012
    %v1068 = vadd.f32 %v807, %v1014
    %v1069 = vadd.f32 %v875, %v1053
    %v1070 = vadd.f32 %v811, %v1012
    %v1071 = vadd.f32 %v813, %v1014
    %v1072 = vadd.f32 %v880, %v1053
    %v1073 = vadd.f32 %v815, %v1012
    %v1074 = vadd.f32 %v817, %v1014
    %v1075 = vadd.f32 %v883, %v1053
    %v1076 = vadd.f32 %v821, %v1012
    %v1077 = vadd.f32 %v823, %v1014
    %v1078 = vadd.f32 %v888, %v1053
    %v1079 = vadd.f32 %v825, %v1012
    %v1080 = vadd.f32 %v827, %v1014
    %v1081 = vadd.f32 %v891, %v1053
    %v1082 = vld [vmem:[%s6] sm:$0x7]
    %v1084 = vlaneseq
    %v1085 = vshrl.u32 %v1084, 7
    %v1086 = vsub.s32 0, %v1085
    %v1087 = vrot.slane %v1082, %v1086
    %v1088 = vlaneseq
    %v1089 = vshrl.u32 %v1088, 7
    %v1090 = vsub.s32 1, %v1089
    %v1091 = vrot.slane %v1082, %v1090
    %v1092 = vlaneseq
    %v1093 = vshrl.u32 %v1092, 7
    %v1094 = vsub.s32 2, %v1093
    %v1095 = vrot.slane %v1082, %v1094
    %v1099 = vadd.f32 %v1058, %v1087
    %v1100 = vadd.f32 %v1059, %v1091
    %v1101 = vadd.f32 %v1060, %v1095
    %v1102 = vadd.f32 %v1061, %v1087
    %v1103 = vadd.f32 %v1062, %v1091
    %v1104 = vadd.f32 %v1063, %v1095
    %v1105 = vadd.f32 %v1064, %v1087
    %v1106 = vadd.f32 %v1065, %v1091
    %v1107 = vadd.f32 %v1066, %v1095
    %v1108 = vadd.f32 %v1067, %v1087
    %v1109 = vadd.f32 %v1068, %v1091
    %v1110 = vadd.f32 %v1069, %v1095
    %v1111 = vadd.f32 %v1070, %v1087
    %v1112 = vadd.f32 %v1071, %v1091
    %v1113 = vadd.f32 %v1072, %v1095
    %v1114 = vadd.f32 %v1073, %v1087
    %v1115 = vadd.f32 %v1074, %v1091
    %v1116 = vadd.f32 %v1075, %v1095
    %v1117 = vadd.f32 %v1076, %v1087
    %v1118 = vadd.f32 %v1077, %v1091
    %v1119 = vadd.f32 %v1078, %v1095
    %v1120 = vadd.f32 %v1079, %v1087
    %v1121 = vadd.f32 %v1080, %v1091
    %v1122 = vadd.f32 %v1081, %v1095
    %v1123 = vld [vmem:[#allocation7] sm:$0xff]
    %v1124 = vld [vmem:[#allocation7 + $0x8] sm:$0xf]
    %v1125 = vld [vmem:[#allocation7 + $0xc] sm:$0xff]
    %v1126 = vld [vmem:[#allocation7 + $0x14] sm:$0xf]
    %v1127 = vld [vmem:[#allocation7 + $0x18] sm:$0xff]
    %v1128 = vld [vmem:[#allocation7 + $0x20] sm:$0xf]
    %v1129 = vld [vmem:[#allocation7 + $0x24] sm:$0xff]
    %v1130 = vld [vmem:[#allocation7 + $0x2c] sm:$0xf]
    %v1131 = vld [vmem:[#allocation7 + $0x30] sm:$0xff]
    %v1132 = vld [vmem:[#allocation7 + $0x38] sm:$0xf]
    %v1133 = vld [vmem:[#allocation7 + $0x3c] sm:$0xff]
    %v1134 = vld [vmem:[#allocation7 + $0x44] sm:$0xf]
    %v1135 = vld [vmem:[#allocation7 + $0x48] sm:$0xff]
    %v1136 = vld [vmem:[#allocation7 + $0x50] sm:$0xf]
    %v1137 = vld [vmem:[#allocation7 + $0x54] sm:$0xff]
    %v1138 = vld [vmem:[#allocation7 + $0x5c] sm:$0xf]
    %v1139 = vld [vmem:[#allocation7 + $0x60] sm:$0xff]
    %v1140 = vld [vmem:[#allocation7 + $0x68] sm:$0xf]
    %v1141 = vld [vmem:[#allocation7 + $0x6c] sm:$0xff]
    %v1142 = vld [vmem:[#allocation7 + $0x74] sm:$0xf]
    %v1143 = vld [vmem:[#allocation7 + $0x78] sm:$0xff]
    %v1144 = vld [vmem:[#allocation7 + $0x80] sm:$0xf]
    %v1145 = vld [vmem:[#allocation7 + $0x84] sm:$0xff]
    %v1146 = vld [vmem:[#allocation7 + $0x8c] sm:$0xf]
    %v1147 = vld [vmem:[#allocation7 + $0x90] sm:$0xff]
    %v1148 = vld [vmem:[#allocation7 + $0x98] sm:$0xf]
    %v1149 = vld [vmem:[#allocation7 + $0x9c] sm:$0xff]
    %v1150 = vld [vmem:[#allocation7 + $0xa4] sm:$0xf]
    %v1151 = vld [vmem:[#allocation7 + $0xa8] sm:$0xff]
    %v1152 = vld [vmem:[#allocation7 + $0xb0] sm:$0xf]
    %v1153 = vld [vmem:[#allocation7 + $0xb4] sm:$0xff]
    %v1154 = vld [vmem:[#allocation7 + $0xbc] sm:$0xf]
    %v1155 = vld [vmem:[%s7] sm:$0x7]
    %v1157 = vlaneseq
    %v1158 = vshrl.u32 %v1157, 7
    %v1159 = vsub.s32 0, %v1158
    %v1160 = vrot.slane %v1155, %v1159
    %v1161 = vlaneseq
    %v1162 = vshrl.u32 %v1161, 7
    %v1163 = vsub.s32 1, %v1162
    %v1164 = vrot.slane %v1155, %v1163
    %v1165 = vlaneseq
    %v1166 = vshrl.u32 %v1165, 7
    %v1167 = vsub.s32 2, %v1166
    %v1168 = vrot.slane %v1155, %v1167
    %v1204 = vunpack.c.l.b16 %v1123
    %v1205 = vunpack.c.h.b16 %v1123
    %v1206 = vunpack.c.l.b16 %v1124
    %v1207 = vunpack.c.l.b16 %v1125
    %v1208 = vunpack.c.h.b16 %v1125
    %v1209 = vunpack.c.l.b16 %v1126
    %v1210 = vunpack.c.l.b16 %v1127
    %v1211 = vunpack.c.h.b16 %v1127
    %v1212 = vunpack.c.l.b16 %v1128
    %v1213 = vunpack.c.l.b16 %v1129
    %v1214 = vunpack.c.h.b16 %v1129
    %v1215 = vunpack.c.l.b16 %v1130
    %v1216 = vunpack.c.l.b16 %v1131
    %v1217 = vunpack.c.h.b16 %v1131
    %v1218 = vunpack.c.l.b16 %v1132
    %v1219 = vunpack.c.l.b16 %v1133
    %v1220 = vunpack.c.h.b16 %v1133
    %v1221 = vunpack.c.l.b16 %v1134
    %v1222 = vunpack.c.l.b16 %v1135
    %v1223 = vunpack.c.h.b16 %v1135
    %v1224 = vunpack.c.l.b16 %v1136
    %v1225 = vunpack.c.l.b16 %v1137
    %v1226 = vunpack.c.h.b16 %v1137
    %v1227 = vunpack.c.l.b16 %v1138
    %v1228 = vunpack.c.l.b16 %v1139
    %v1229 = vunpack.c.h.b16 %v1139
    %v1230 = vunpack.c.l.b16 %v1140
    %v1231 = vunpack.c.l.b16 %v1141
    %v1232 = vunpack.c.h.b16 %v1141
    %v1233 = vunpack.c.l.b16 %v1142
    %v1234 = vunpack.c.l.b16 %v1143
    %v1235 = vunpack.c.h.b16 %v1143
    %v1236 = vunpack.c.l.b16 %v1144
    %v1237 = vunpack.c.l.b16 %v1145
    %v1238 = vunpack.c.h.b16 %v1145
    %v1239 = vunpack.c.l.b16 %v1146
    %v1240 = vunpack.c.l.b16 %v1147
    %v1241 = vunpack.c.h.b16 %v1147
    %v1242 = vunpack.c.l.b16 %v1148
    %v1243 = vunpack.c.l.b16 %v1149
    %v1244 = vunpack.c.h.b16 %v1149
    %v1245 = vunpack.c.l.b16 %v1150
    %v1246 = vunpack.c.l.b16 %v1151
    %v1247 = vunpack.c.h.b16 %v1151
    %v1248 = vunpack.c.l.b16 %v1152
    %v1249 = vunpack.c.l.b16 %v1153
    %v1250 = vunpack.c.h.b16 %v1153
    %v1251 = vunpack.c.l.b16 %v1154
    %v1252 = vpack.c.b16 %v1207, %v1204
    %v1253 = vpack.c.b16 %v1208, %v1205
    %v1254 = vpack.c.b16 %v1209, %v1206
    %v1255 = vpack.c.b16 %v1213, %v1210
    %v1256 = vpack.c.b16 %v1214, %v1211
    %v1257 = vpack.c.b16 %v1215, %v1212
    %v1258 = vpack.c.b16 %v1219, %v1216
    %v1259 = vpack.c.b16 %v1220, %v1217
    %v1260 = vpack.c.b16 %v1221, %v1218
    %v1261 = vpack.c.b16 %v1225, %v1222
    %v1262 = vpack.c.b16 %v1226, %v1223
    %v1263 = vpack.c.b16 %v1227, %v1224
    %v1264 = vpack.c.b16 %v1231, %v1228
    %v1265 = vpack.c.b16 %v1232, %v1229
    %v1266 = vpack.c.b16 %v1233, %v1230
    %v1267 = vpack.c.b16 %v1237, %v1234
    %v1268 = vpack.c.b16 %v1238, %v1235
    %v1269 = vpack.c.b16 %v1239, %v1236
    %v1270 = vpack.c.b16 %v1243, %v1240
    %v1271 = vpack.c.b16 %v1244, %v1241
    %v1272 = vpack.c.b16 %v1245, %v1242
    %v1273 = vpack.c.b16 %v1249, %v1246
    %v1274 = vpack.c.b16 %v1250, %v1247
    %v1275 = vpack.c.b16 %v1251, %v1248
    %1300 = vmatprep.subr.bf16.mxu0 %v1253
    %1301 = vmatpush1.bf16.msra.mxu0 %v1252
    %1302 = vmatprep.subr.bf16.mxu0 %v1256
    %1303 = vmatpush1.bf16.msra.mxu0 %v1255
    %1304 = vmatprep.subr.bf16.mxu0 %v1259
    %1305 = vmatpush1.bf16.msra.mxu0 %v1258
    %1306 = vmatprep.subr.bf16.mxu0 %v1262
    %1307 = vmatpush1.bf16.msra.mxu0 %v1261
    %1308 = vmatprep.subr.bf16.mxu0 %v1265
    %1309 = vmatpush1.bf16.msra.mxu0 %v1264
    %1310 = vmatprep.subr.bf16.mxu0 %v1268
    %1311 = vmatpush1.bf16.msra.mxu0 %v1267
    %1312 = vmatprep.subr.bf16.mxu0 %v1271
    %1313 = vmatpush1.bf16.msra.mxu0 %v1270
    %1314 = vmatprep.subr.bf16.mxu0 %v1274
    %1315 = vmatpush1.bf16.msra.mxu0 %v1273
    %1316 = vmatprep.subr.bf16.mxu0 0
    %1317 = vmatpush1.bf16.msra.mxu0 0
    %1318 = vmatprep.subr.bf16.mxu0 0
    %1319 = vmatpush1.bf16.msra.mxu0 0
    %1320 = vmatprep.subr.bf16.mxu0 0
    %1321 = vmatpush1.bf16.msra.mxu0 0
    %1322 = vmatprep.subr.bf16.mxu0 0
    %1323 = vmatpush1.bf16.msra.mxu0 0
    %1324 = vmatprep.subr.bf16.mxu0 0
    %1325 = vmatpush1.bf16.msra.mxu0 0
    %1326 = vmatprep.subr.bf16.mxu0 0
    %1327 = vmatpush1.bf16.msra.mxu0 0
    %1328 = vmatprep.subr.bf16.mxu0 0
    %1329 = vmatpush1.bf16.msra.mxu0 0
    %1330 = vmatprep.subr.bf16.mxu0 0
    %1331 = vmatpush1.bf16.msra.mxu0 0
    %1332 = vmatprep.mubr.bf16.mxu0 0
    %1333 = vmatmul.mubr.bf16.gmra.mrb[0].mxu0 0
    %v1334 = vpop.f32.mrb[0].mxu0
    %v1335 = vadd.f32 %v1160, %v1334
    %v1336 = vpop.f32.mrb[0].mxu0
    %v1337 = vadd.f32 %v1164, %v1336
    %v1338 = vpop.f32.mrb[0].mxu0
    %v1339 = vpop.f32.mrb[0].mxu0
    %1340 = vdwg.mxu0
    %1341 = vmatprep.subr.bf16.mxu0 0
    %1342 = vmatpush1.bf16.msra.mxu0 %v1254
    %1343 = vmatprep.subr.bf16.mxu0 0
    %1344 = vmatpush1.bf16.msra.mxu0 %v1257
    %1345 = vmatprep.subr.bf16.mxu0 0
    %1346 = vmatpush1.bf16.msra.mxu0 %v1260
    %1347 = vmatprep.subr.bf16.mxu0 0
    %1348 = vmatpush1.bf16.msra.mxu0 %v1263
    %1349 = vmatprep.subr.bf16.mxu0 0
    %1350 = vmatpush1.bf16.msra.mxu0 %v1266
    %1351 = vmatprep.subr.bf16.mxu0 0
    %1352 = vmatpush1.bf16.msra.mxu0 %v1269
    %1353 = vmatprep.subr.bf16.mxu0 0
    %1354 = vmatpush1.bf16.msra.mxu0 %v1272
    %1355 = vmatprep.subr.bf16.mxu0 0
    %1356 = vmatpush1.bf16.msra.mxu0 %v1275
    %1357 = vmatprep.subr.bf16.mxu0 0
    %1358 = vmatpush1.bf16.msra.mxu0 0
    %1359 = vmatprep.subr.bf16.mxu0 0
    %1360 = vmatpush1.bf16.msra.mxu0 0
    %1361 = vmatprep.subr.bf16.mxu0 0
    %1362 = vmatpush1.bf16.msra.mxu0 0
    %1363 = vmatprep.subr.bf16.mxu0 0
    %1364 = vmatpush1.bf16.msra.mxu0 0
    %1365 = vmatprep.subr.bf16.mxu0 0
    %1366 = vmatpush1.bf16.msra.mxu0 0
    %1367 = vmatprep.subr.bf16.mxu0 0
    %1368 = vmatpush1.bf16.msra.mxu0 0
    %1369 = vmatprep.subr.bf16.mxu0 0
    %1370 = vmatpush1.bf16.msra.mxu0 0
    %1371 = vmatprep.subr.bf16.mxu0 0
    %1372 = vmatpush1.bf16.msra.mxu0 0
    %1373 = vmatprep.mubr.bf16.mxu0 0
    %1374 = vmatmul.mubr.bf16.gmra.mrb[0].mxu0 0
    %v1375 = vpop.f32.mrb[0].mxu0
    %v1376 = vadd.f32 %v1168, %v1375
    %v1377 = vpop.f32.mrb[0].mxu0
    %v1378 = vpop.f32.mrb[0].mxu0
    %v1379 = vpop.f32.mrb[0].mxu0
    %1380 = vdwg.mxu0
    %v1381 = vadd.f32 %v1099, %v1335
    %v1382 = vxor.u32 %v1381, 2147483648
    %v1383 = vmul.f32 %v1382, 1.442695
    %v1384 = vpow.pop %v1383
    %v1385 = vadd.f32 %v1384, 1.0
    %v1386 = vrcp.pop %v1385
    %v1387 = vmul.f32 1.0, %v1386
    %v1388 = vadd.f32 %v1100, %v1337
    %v1389 = vxor.u32 %v1388, 2147483648
    %v1390 = vmul.f32 %v1389, 1.442695
    %v1391 = vpow.pop %v1390
    %v1392 = vadd.f32 %v1391, 1.0
    %v1393 = vrcp.pop %v1392
    %v1394 = vmul.f32 1.0, %v1393
    %v1395 = vmul.f32 %v1387, %v1376
    %v1396 = vadd.f32 %v1101, %v1395
    %v1397 = vtanh.pop %v1396
    %v1398 = vsub.f32 1.0, %v1394
    %v1399 = vmul.f32 %v1398, %v1397
    %v1400 = vmul.f32 %v1394, 0.0
    %v1401 = vadd.f32 %v1399, %v1400
    %v1402 = vpack.c.bf16 %v1401, %v1401
    %1403 = vmatprep.subr.bf16.mxu0 %v1253
    %1404 = vmatpush1.bf16.msra.mxu0 %v1252
    %1405 = vmatprep.subr.bf16.mxu0 %v1256
    %1406 = vmatpush1.bf16.msra.mxu0 %v1255
    %1407 = vmatprep.subr.bf16.mxu0 %v1259
    %1408 = vmatpush1.bf16.msra.mxu0 %v1258
    %1409 = vmatprep.subr.bf16.mxu0 %v1262
    %1410 = vmatpush1.bf16.msra.mxu0 %v1261
    %1411 = vmatprep.subr.bf16.mxu0 %v1265
    %1412 = vmatpush1.bf16.msra.mxu0 %v1264
    %1413 = vmatprep.subr.bf16.mxu0 %v1268
    %1414 = vmatpush1.bf16.msra.mxu0 %v1267
    %1415 = vmatprep.subr.bf16.mxu0 %v1271
    %1416 = vmatpush1.bf16.msra.mxu0 %v1270
    %1417 = vmatprep.subr.bf16.mxu0 %v1274
    %1418 = vmatpush1.bf16.msra.mxu0 %v1273
    %1419 = vmatprep.subr.bf16.mxu0 0
    %1420 = vmatpush1.bf16.msra.mxu0 0
    %1421 = vmatprep.subr.bf16.mxu0 0
    %1422 = vmatpush1.bf16.msra.mxu0 0
    %1423 = vmatprep.subr.bf16.mxu0 0
    %1424 = vmatpush1.bf16.msra.mxu0 0
    %1425 = vmatprep.subr.bf16.mxu0 0
    %1426 = vmatpush1.bf16.msra.mxu0 0
    %1427 = vmatprep.subr.bf16.mxu0 0
    %1428 = vmatpush1.bf16.msra.mxu0 0
    %1429 = vmatprep.subr.bf16.mxu0 0
    %1430 = vmatpush1.bf16.msra.mxu0 0
    %1431 = vmatprep.subr.bf16.mxu0 0
    %1432 = vmatpush1.bf16.msra.mxu0 0
    %1433 = vmatprep.subr.bf16.mxu0 0
    %1434 = vmatpush1.bf16.msra.mxu0 0
    %1435 = vmatprep.mubr.bf16.mxu0 0
    %1436 = vmatmul.mubr.bf16.gmra.mrb[0].mxu0 %v1402
    %v1437 = vpop.f32.mrb[0].mxu0
    %v1438 = vadd.f32 %v1160, %v1437
    %v1439 = vpop.f32.mrb[0].mxu0
    %v1440 = vadd.f32 %v1164, %v1439
    %v1441 = vpop.f32.mrb[0].mxu0
    %v1442 = vpop.f32.mrb[0].mxu0
    %1443 = vdwg.mxu0
    %1444 = vmatprep.subr.bf16.mxu0 0
    %1445 = vmatpush1.bf16.msra.mxu0 %v1254
    %1446 = vmatprep.subr.bf16.mxu0 0
    %1447 = vmatpush1.bf16.msra.mxu0 %v1257
    %1448 = vmatprep.subr.bf16.mxu0 0
    %1449 = vmatpush1.bf16.msra.mxu0 %v1260
    %1450 = vmatprep.subr.bf16.mxu0 0
    %1451 = vmatpush1.bf16.msra.mxu0 %v1263
    %1452 = vmatprep.subr.bf16.mxu0 0
    %1453 = vmatpush1.bf16.msra.mxu0 %v1266
    %1454 = vmatprep.subr.bf16.mxu0 0
    %1455 = vmatpush1.bf16.msra.mxu0 %v1269
    %1456 = vmatprep.subr.bf16.mxu0 0
    %1457 = vmatpush1.bf16.msra.mxu0 %v1272
    %1458 = vmatprep.subr.bf16.mxu0 0
    %1459 = vmatpush1.bf16.msra.mxu0 %v1275
    %1460 = vmatprep.subr.bf16.mxu0 0
    %1461 = vmatpush1.bf16.msra.mxu0 0
    %1462 = vmatprep.subr.bf16.mxu0 0
    %1463 = vmatpush1.bf16.msra.mxu0 0
    %1464 = vmatprep.subr.bf16.mxu0 0
    %1465 = vmatpush1.bf16.msra.mxu0 0
    %1466 = vmatprep.subr.bf16.mxu0 0
    %1467 = vmatpush1.bf16.msra.mxu0 0
    %1468 = vmatprep.subr.bf16.mxu0 0
    %1469 = vmatpush1.bf16.msra.mxu0 0
    %1470 = vmatprep.subr.bf16.mxu0 0
    %1471 = vmatpush1.bf16.msra.mxu0 0
    %1472 = vmatprep.subr.bf16.mxu0 0
    %1473 = vmatpush1.bf16.msra.mxu0 0
    %1474 = vmatprep.subr.bf16.mxu0 0
    %1475 = vmatpush1.bf16.msra.mxu0 0
    %1476 = vmatprep.mubr.bf16.mxu0 0
    %1477 = vmatmul.mubr.bf16.gmra.mrb[0].mxu0 %v1402
    %v1478 = vpop.f32.mrb[0].mxu0
    %v1479 = vadd.f32 %v1168, %v1478
    %v1480 = vpop.f32.mrb[0].mxu0
    %v1481 = vpop.f32.mrb[0].mxu0
    %v1482 = vpop.f32.mrb[0].mxu0
    %1483 = vdwg.mxu0
    %v1484 = vadd.f32 %v1102, %v1438
    %v1485 = vxor.u32 %v1484, 2147483648
    %v1486 = vmul.f32 %v1485, 1.442695
    %v1487 = vpow.pop %v1486
    %v1488 = vadd.f32 %v1487, 1.0
    %v1489 = vrcp.pop %v1488
    %v1490 = vmul.f32 1.0, %v1489
    %v1491 = vadd.f32 %v1103, %v1440
    %v1492 = vxor.u32 %v1491, 2147483648
    %v1493 = vmul.f32 %v1492, 1.442695
    %v1494 = vpow.pop %v1493
    %v1495 = vadd.f32 %v1494, 1.0
    %v1496 = vrcp.pop %v1495
    %v1497 = vmul.f32 1.0, %v1496
    %v1498 = vmul.f32 %v1490, %v1479
    %v1499 = vadd.f32 %v1104, %v1498
    %v1500 = vtanh.pop %v1499
    %v1501 = vsub.f32 1.0, %v1497
    %v1502 = vmul.f32 %v1501, %v1500
    %v1503 = vmul.f32 %v1497, %v1401
    %v1504 = vadd.f32 %v1502, %v1503
    %v1505 = vpack.c.bf16 %v1504, %v1504
    %1506 = vmatprep.subr.bf16.mxu0 %v1253
    %1507 = vmatpush1.bf16.msra.mxu0 %v1252
    %1508 = vmatprep.subr.bf16.mxu0 %v1256
    %1509 = vmatpush1.bf16.msra.mxu0 %v1255
    %1510 = vmatprep.subr.bf16.mxu0 %v1259
    %1511 = vmatpush1.bf16.msra.mxu0 %v1258
    %1512 = vmatprep.subr.bf16.mxu0 %v1262
    %1513 = vmatpush1.bf16.msra.mxu0 %v1261
    %1514 = vmatprep.subr.bf16.mxu0 %v1265
    %1515 = vmatpush1.bf16.msra.mxu0 %v1264
    %1516 = vmatprep.subr.bf16.mxu0 %v1268
    %1517 = vmatpush1.bf16.msra.mxu0 %v1267
    %1518 = vmatprep.subr.bf16.mxu0 %v1271
    %1519 = vmatpush1.bf16.msra.mxu0 %v1270
    %1520 = vmatprep.subr.bf16.mxu0 %v1274
    %1521 = vmatpush1.bf16.msra.mxu0 %v1273
    %1522 = vmatprep.subr.bf16.mxu0 0
    %1523 = vmatpush1.bf16.msra.mxu0 0
    %1524 = vmatprep.subr.bf16.mxu0 0
    %1525 = vmatpush1.bf16.msra.mxu0 0
    %1526 = vmatprep.subr.bf16.mxu0 0
    %1527 = vmatpush1.bf16.msra.mxu0 0
    %1528 = vmatprep.subr.bf16.mxu0 0
    %1529 = vmatpush1.bf16.msra.mxu0 0
    %1530 = vmatprep.subr.bf16.mxu0 0
    %1531 = vmatpush1.bf16.msra.mxu0 0
    %1532 = vmatprep.subr.bf16.mxu0 0
    %1533 = vmatpush1.bf16.msra.mxu0 0
    %1534 = vmatprep.subr.bf16.mxu0 0
    %1535 = vmatpush1.bf16.msra.mxu0 0
    %1536 = vmatprep.subr.bf16.mxu0 0
    %1537 = vmatpush1.bf16.msra.mxu0 0
    %1538 = vmatprep.mubr.bf16.mxu0 0
    %1539 = vmatmul.mubr.bf16.gmra.mrb[0].mxu0 %v1505
    %v1540 = vpop.f32.mrb[0].mxu0
    %v1541 = vadd.f32 %v1160, %v1540
    %v1542 = vpop.f32.mrb[0].mxu0
    %v1543 = vadd.f32 %v1164, %v1542
    %v1544 = vpop.f32.mrb[0].mxu0
    %v1545 = vpop.f32.mrb[0].mxu0
    %1546 = vdwg.mxu0
    %1547 = vmatprep.subr.bf16.mxu0 0
    %1548 = vmatpush1.bf16.msra.mxu0 %v1254
    %1549 = vmatprep.subr.bf16.mxu0 0
    %1550 = vmatpush1.bf16.msra.mxu0 %v1257
    %1551 = vmatprep.subr.bf16.mxu0 0
    %1552 = vmatpush1.bf16.msra.mxu0 %v1260
    %1553 = vmatprep.subr.bf16.mxu0 0
    %1554 = vmatpush1.bf16.msra.mxu0 %v1263
    %1555 = vmatprep.subr.bf16.mxu0 0
    %1556 = vmatpush1.bf16.msra.mxu0 %v1266
    %1557 = vmatprep.subr.bf16.mxu0 0
    %1558 = vmatpush1.bf16.msra.mxu0 %v1269
    %1559 = vmatprep.subr.bf16.mxu0 0
    %1560 = vmatpush1.bf16.msra.mxu0 %v1272
    %1561 = vmatprep.subr.bf16.mxu0 0
    %1562 = vmatpush1.bf16.msra.mxu0 %v1275
    %1563 = vmatprep.subr.bf16.mxu0 0
    %1564 = vmatpush1.bf16.msra.mxu0 0
    %1565 = vmatprep.subr.bf16.mxu0 0
    %1566 = vmatpush1.bf16.msra.mxu0 0
    %1567 = vmatprep.subr.bf16.mxu0 0
    %1568 = vmatpush1.bf16.msra.mxu0 0
    %1569 = vmatprep.subr.bf16.mxu0 0
    %1570 = vmatpush1.bf16.msra.mxu0 0
    %1571 = vmatprep.subr.bf16.mxu0 0
    %1572 = vmatpush1.bf16.msra.mxu0 0
    %1573 = vmatprep.subr.bf16.mxu0 0
    %1574 = vmatpush1.bf16.msra.mxu0 0
    %1575 = vmatprep.subr.bf16.mxu0 0
    %1576 = vmatpush1.bf16.msra.mxu0 0
    %1577 = vmatprep.subr.bf16.mxu0 0
    %1578 = vmatpush1.bf16.msra.mxu0 0
    %1579 = vmatprep.mubr.bf16.mxu0 0
    %1580 = vmatmul.mubr.bf16.gmra.mrb[0].mxu0 %v1505
    %v1581 = vpop.f32.mrb[0].mxu0
    %v1582 = vadd.f32 %v1168, %v1581
    %v1583 = vpop.f32.mrb[0].mxu0
    %v1584 = vpop.f32.mrb[0].mxu0
    %v1585 = vpop.f32.mrb[0].mxu0
    %1586 = vdwg.mxu0
    %v1587 = vadd.f32 %v1105, %v1541
    %v1588 = vxor.u32 %v1587, 2147483648
    %v1589 = vmul.f32 %v1588, 1.442695
    %v1590 = vpow.pop %v1589
    %v1591 = vadd.f32 %v1590, 1.0
    %v1592 = vrcp.pop %v1591
    %v1593 = vmul.f32 1.0, %v1592
    %v1594 = vadd.f32 %v1106, %v1543
    %v1595 = vxor.u32 %v1594, 2147483648
    %v1596 = vmul.f32 %v1595, 1.442695
    %v1597 = vpow.pop %v1596
    %v1598 = vadd.f32 %v1597, 1.0
    %v1599 = vrcp.pop %v1598
    %v1600 = vmul.f32 1.0, %v1599
    %v1601 = vmul.f32 %v1593, %v1582
    %v1602 = vadd.f32 %v1107, %v1601
    %v1603 = vtanh.pop %v1602
    %v1604 = vsub.f32 1.0, %v1600
    %v1605 = vmul.f32 %v1604, %v1603
    %v1606 = vmul.f32 %v1600, %v1504
    %v1607 = vadd.f32 %v1605, %v1606
    %v1608 = vpack.c.bf16 %v1607, %v1607
    %1609 = vmatprep.subr.bf16.mxu0 %v1253
    %1610 = vmatpush1.bf16.msra.mxu0 %v1252
    %1611 = vmatprep.subr.bf16.mxu0 %v1256
    %1612 = vmatpush1.bf16.msra.mxu0 %v1255
    %1613 = vmatprep.subr.bf16.mxu0 %v1259
    %1614 = vmatpush1.bf16.msra.mxu0 %v1258
    %1615 = vmatprep.subr.bf16.mxu0 %v1262
    %1616 = vmatpush1.bf16.msra.mxu0 %v1261
    %1617 = vmatprep.subr.bf16.mxu0 %v1265
    %1618 = vmatpush1.bf16.msra.mxu0 %v1264
    %1619 = vmatprep.subr.bf16.mxu0 %v1268
    %1620 = vmatpush1.bf16.msra.mxu0 %v1267
    %1621 = vmatprep.subr.bf16.mxu0 %v1271
    %1622 = vmatpush1.bf16.msra.mxu0 %v1270
    %1623 = vmatprep.subr.bf16.mxu0 %v1274
    %1624 = vmatpush1.bf16.msra.mxu0 %v1273
    %1625 = vmatprep.subr.bf16.mxu0 0
    %1626 = vmatpush1.bf16.msra.mxu0 0
    %1627 = vmatprep.subr.bf16.mxu0 0
    %1628 = vmatpush1.bf16.msra.mxu0 0
    %1629 = vmatprep.subr.bf16.mxu0 0
    %1630 = vmatpush1.bf16.msra.mxu0 0
    %1631 = vmatprep.subr.bf16.mxu0 0
    %1632 = vmatpush1.bf16.msra.mxu0 0
    %1633 = vmatprep.subr.bf16.mxu0 0
    %1634 = vmatpush1.bf16.msra.mxu0 0
    %1635 = vmatprep.subr.bf16.mxu0 0
    %1636 = vmatpush1.bf16.msra.mxu0 0
    %1637 = vmatprep.subr.bf16.mxu0 0
    %1638 = vmatpush1.bf16.msra.mxu0 0
    %1639 = vmatprep.subr.bf16.mxu0 0
    %1640 = vmatpush1.bf16.msra.mxu0 0
    %1641 = vmatprep.mubr.bf16.mxu0 0
    %1642 = vmatmul.mubr.bf16.gmra.mrb[0].mxu0 %v1608
    %v1643 = vpop.f32.mrb[0].mxu0
    %v1644 = vadd.f32 %v1160, %v1643
    %v1645 = vpop.f32.mrb[0].mxu0
    %v1646 = vadd.f32 %v1164, %v1645
    %v1647 = vpop.f32.mrb[0].mxu0
    %v1648 = vpop.f32.mrb[0].mxu0
    %1649 = vdwg.mxu0
    %1650 = vmatprep.subr.bf16.mxu0 0
    %1651 = vmatpush1.bf16.msra.mxu0 %v1254
    %1652 = vmatprep.subr.bf16.mxu0 0
    %1653 = vmatpush1.bf16.msra.mxu0 %v1257
    %1654 = vmatprep.subr.bf16.mxu0 0
    %1655 = vmatpush1.bf16.msra.mxu0 %v1260
    %1656 = vmatprep.subr.bf16.mxu0 0
    %1657 = vmatpush1.bf16.msra.mxu0 %v1263
    %1658 = vmatprep.subr.bf16.mxu0 0
    %1659 = vmatpush1.bf16.msra.mxu0 %v1266
    %1660 = vmatprep.subr.bf16.mxu0 0
    %1661 = vmatpush1.bf16.msra.mxu0 %v1269
    %1662 = vmatprep.subr.bf16.mxu0 0
    %1663 = vmatpush1.bf16.msra.mxu0 %v1272
    %1664 = vmatprep.subr.bf16.mxu0 0
    %1665 = vmatpush1.bf16.msra.mxu0 %v1275
    %1666 = vmatprep.subr.bf16.mxu0 0
    %1667 = vmatpush1.bf16.msra.mxu0 0
    %1668 = vmatprep.subr.bf16.mxu0 0
    %1669 = vmatpush1.bf16.msra.mxu0 0
    %1670 = vmatprep.subr.bf16.mxu0 0
    %1671 = vmatpush1.bf16.msra.mxu0 0
    %1672 = vmatprep.subr.bf16.mxu0 0
    %1673 = vmatpush1.bf16.msra.mxu0 0
    %1674 = vmatprep.subr.bf16.mxu0 0
    %1675 = vmatpush1.bf16.msra.mxu0 0
    %1676 = vmatprep.subr.bf16.mxu0 0
    %1677 = vmatpush1.bf16.msra.mxu0 0
    %1678 = vmatprep.subr.bf16.mxu0 0
    %1679 = vmatpush1.bf16.msra.mxu0 0
    %1680 = vmatprep.subr.bf16.mxu0 0
    %1681 = vmatpush1.bf16.msra.mxu0 0
    %1682 = vmatprep.mubr.bf16.mxu0 0
    %1683 = vmatmul.mubr.bf16.gmra.mrb[0].mxu0 %v1608
    %v1684 = vpop.f32.mrb[0].mxu0
    %v1685 = vadd.f32 %v1168, %v1684
    %v1686 = vpop.f32.mrb[0].mxu0
    %v1687 = vpop.f32.mrb[0].mxu0
    %v1688 = vpop.f32.mrb[0].mxu0
    %1689 = vdwg.mxu0
    %v1690 = vadd.f32 %v1108, %v1644
    %v1691 = vxor.u32 %v1690, 2147483648
    %v1692 = vmul.f32 %v1691, 1.442695
    %v1693 = vpow.pop %v1692
    %v1694 = vadd.f32 %v1693, 1.0
    %v1695 = vrcp.pop %v1694
    %v1696 = vmul.f32 1.0, %v1695
    %v1697 = vadd.f32 %v1109, %v1646
    %v1698 = vxor.u32 %v1697, 2147483648
    %v1699 = vmul.f32 %v1698, 1.442695
    %v1700 = vpow.pop %v1699
    %v1701 = vadd.f32 %v1700, 1.0
    %v1702 = vrcp.pop %v1701
    %v1703 = vmul.f32 1.0, %v1702
    %v1704 = vmul.f32 %v1696, %v1685
    %v1705 = vadd.f32 %v1110, %v1704
    %v1706 = vtanh.pop %v1705
    %v1707 = vsub.f32 1.0, %v1703
    %v1708 = vmul.f32 %v1707, %v1706
    %v1709 = vmul.f32 %v1703, %v1607
    %v1710 = vadd.f32 %v1708, %v1709
    %v1711 = vpack.c.bf16 %v1710, %v1710
    %1712 = vmatprep.subr.bf16.mxu0 %v1253
    %1713 = vmatpush1.bf16.msra.mxu0 %v1252
    %1714 = vmatprep.subr.bf16.mxu0 %v1256
    %1715 = vmatpush1.bf16.msra.mxu0 %v1255
    %1716 = vmatprep.subr.bf16.mxu0 %v1259
    %1717 = vmatpush1.bf16.msra.mxu0 %v1258
    %1718 = vmatprep.subr.bf16.mxu0 %v1262
    %1719 = vmatpush1.bf16.msra.mxu0 %v1261
    %1720 = vmatprep.subr.bf16.mxu0 %v1265
    %1721 = vmatpush1.bf16.msra.mxu0 %v1264
    %1722 = vmatprep.subr.bf16.mxu0 %v1268
    %1723 = vmatpush1.bf16.msra.mxu0 %v1267
    %1724 = vmatprep.subr.bf16.mxu0 %v1271
    %1725 = vmatpush1.bf16.msra.mxu0 %v1270
    %1726 = vmatprep.subr.bf16.mxu0 %v1274
    %1727 = vmatpush1.bf16.msra.mxu0 %v1273
    %1728 = vmatprep.subr.bf16.mxu0 0
    %1729 = vmatpush1.bf16.msra.mxu0 0
    %1730 = vmatprep.subr.bf16.mxu0 0
    %1731 = vmatpush1.bf16.msra.mxu0 0
    %1732 = vmatprep.subr.bf16.mxu0 0
    %1733 = vmatpush1.bf16.msra.mxu0 0
    %1734 = vmatprep.subr.bf16.mxu0 0
    %1735 = vmatpush1.bf16.msra.mxu0 0
    %1736 = vmatprep.subr.bf16.mxu0 0
    %1737 = vmatpush1.bf16.msra.mxu0 0
    %1738 = vmatprep.subr.bf16.mxu0 0
    %1739 = vmatpush1.bf16.msra.mxu0 0
    %1740 = vmatprep.subr.bf16.mxu0 0
    %1741 = vmatpush1.bf16.msra.mxu0 0
    %1742 = vmatprep.subr.bf16.mxu0 0
    %1743 = vmatpush1.bf16.msra.mxu0 0
    %1744 = vmatprep.mubr.bf16.mxu0 0
    %1745 = vmatmul.mubr.bf16.gmra.mrb[0].mxu0 %v1711
    %v1746 = vpop.f32.mrb[0].mxu0
    %v1747 = vadd.f32 %v1160, %v1746
    %v1748 = vpop.f32.mrb[0].mxu0
    %v1749 = vadd.f32 %v1164, %v1748
    %v1750 = vpop.f32.mrb[0].mxu0
    %v1751 = vpop.f32.mrb[0].mxu0
    %1752 = vdwg.mxu0
    %1753 = vmatprep.subr.bf16.mxu0 0
    %1754 = vmatpush1.bf16.msra.mxu0 %v1254
    %1755 = vmatprep.subr.bf16.mxu0 0
    %1756 = vmatpush1.bf16.msra.mxu0 %v1257
    %1757 = vmatprep.subr.bf16.mxu0 0
    %1758 = vmatpush1.bf16.msra.mxu0 %v1260
    %1759 = vmatprep.subr.bf16.mxu0 0
    %1760 = vmatpush1.bf16.msra.mxu0 %v1263
    %1761 = vmatprep.subr.bf16.mxu0 0
    %1762 = vmatpush1.bf16.msra.mxu0 %v1266
    %1763 = vmatprep.subr.bf16.mxu0 0
    %1764 = vmatpush1.bf16.msra.mxu0 %v1269
    %1765 = vmatprep.subr.bf16.mxu0 0
    %1766 = vmatpush1.bf16.msra.mxu0 %v1272
    %1767 = vmatprep.subr.bf16.mxu0 0
    %1768 = vmatpush1.bf16.msra.mxu0 %v1275
    %1769 = vmatprep.subr.bf16.mxu0 0
    %1770 = vmatpush1.bf16.msra.mxu0 0
    %1771 = vmatprep.subr.bf16.mxu0 0
    %1772 = vmatpush1.bf16.msra.mxu0 0
    %1773 = vmatprep.subr.bf16.mxu0 0
    %1774 = vmatpush1.bf16.msra.mxu0 0
    %1775 = vmatprep.subr.bf16.mxu0 0
    %1776 = vmatpush1.bf16.msra.mxu0 0
    %1777 = vmatprep.subr.bf16.mxu0 0
    %1778 = vmatpush1.bf16.msra.mxu0 0
    %1779 = vmatprep.subr.bf16.mxu0 0
    %1780 = vmatpush1.bf16.msra.mxu0 0
    %1781 = vmatprep.subr.bf16.mxu0 0
    %1782 = vmatpush1.bf16.msra.mxu0 0
    %1783 = vmatprep.subr.bf16.mxu0 0
    %1784 = vmatpush1.bf16.msra.mxu0 0
    %1785 = vmatprep.mubr.bf16.mxu0 0
    %1786 = vmatmul.mubr.bf16.gmra.mrb[0].mxu0 %v1711
    %v1787 = vpop.f32.mrb[0].mxu0
    %v1788 = vadd.f32 %v1168, %v1787
    %v1789 = vpop.f32.mrb[0].mxu0
    %v1790 = vpop.f32.mrb[0].mxu0
    %v1791 = vpop.f32.mrb[0].mxu0
    %1792 = vdwg.mxu0
    %v1793 = vadd.f32 %v1111, %v1747
    %v1794 = vxor.u32 %v1793, 2147483648
    %v1795 = vmul.f32 %v1794, 1.442695
    %v1796 = vpow.pop %v1795
    %v1797 = vadd.f32 %v1796, 1.0
    %v1798 = vrcp.pop %v1797
    %v1799 = vmul.f32 1.0, %v1798
    %v1800 = vadd.f32 %v1112, %v1749
    %v1801 = vxor.u32 %v1800, 2147483648
    %v1802 = vmul.f32 %v1801, 1.442695
    %v1803 = vpow.pop %v1802
    %v1804 = vadd.f32 %v1803, 1.0
    %v1805 = vrcp.pop %v1804
    %v1806 = vmul.f32 1.0, %v1805
    %v1807 = vmul.f32 %v1799, %v1788
    %v1808 = vadd.f32 %v1113, %v1807
    %v1809 = vtanh.pop %v1808
    %v1810 = vsub.f32 1.0, %v1806
    %v1811 = vmul.f32 %v1810, %v1809
    %v1812 = vmul.f32 %v1806, %v1710
    %v1813 = vadd.f32 %v1811, %v1812
    %v1814 = vpack.c.bf16 %v1813, %v1813
    %1815 = vmatprep.subr.bf16.mxu0 %v1253
    %1816 = vmatpush1.bf16.msra.mxu0 %v1252
    %1817 = vmatprep.subr.bf16.mxu0 %v1256
    %1818 = vmatpush1.bf16.msra.mxu0 %v1255
    %1819 = vmatprep.subr.bf16.mxu0 %v1259
    %1820 = vmatpush1.bf16.msra.mxu0 %v1258
    %1821 = vmatprep.subr.bf16.mxu0 %v1262
    %1822 = vmatpush1.bf16.msra.mxu0 %v1261
    %1823 = vmatprep.subr.bf16.mxu0 %v1265
    %1824 = vmatpush1.bf16.msra.mxu0 %v1264
    %1825 = vmatprep.subr.bf16.mxu0 %v1268
    %1826 = vmatpush1.bf16.msra.mxu0 %v1267
    %1827 = vmatprep.subr.bf16.mxu0 %v1271
    %1828 = vmatpush1.bf16.msra.mxu0 %v1270
    %1829 = vmatprep.subr.bf16.mxu0 %v1274
    %1830 = vmatpush1.bf16.msra.mxu0 %v1273
    %1831 = vmatprep.subr.bf16.mxu0 0
    %1832 = vmatpush1.bf16.msra.mxu0 0
    %1833 = vmatprep.subr.bf16.mxu0 0
    %1834 = vmatpush1.bf16.msra.mxu0 0
    %1835 = vmatprep.subr.bf16.mxu0 0
    %1836 = vmatpush1.bf16.msra.mxu0 0
    %1837 = vmatprep.subr.bf16.mxu0 0
    %1838 = vmatpush1.bf16.msra.mxu0 0
    %1839 = vmatprep.subr.bf16.mxu0 0
    %1840 = vmatpush1.bf16.msra.mxu0 0
    %1841 = vmatprep.subr.bf16.mxu0 0
    %1842 = vmatpush1.bf16.msra.mxu0 0
    %1843 = vmatprep.subr.bf16.mxu0 0
    %1844 = vmatpush1.bf16.msra.mxu0 0
    %1845 = vmatprep.subr.bf16.mxu0 0
    %1846 = vmatpush1.bf16.msra.mxu0 0
    %1847 = vmatprep.mubr.bf16.mxu0 0
    %1848 = vmatmul.mubr.bf16.gmra.mrb[0].mxu0 %v1814
    %v1849 = vpop.f32.mrb[0].mxu0
    %v1850 = vadd.f32 %v1160, %v1849
    %v1851 = vpop.f32.mrb[0].mxu0
    %v1852 = vadd.f32 %v1164, %v1851
    %v1853 = vpop.f32.mrb[0].mxu0
    %v1854 = vpop.f32.mrb[0].mxu0
    %1855 = vdwg.mxu0
    %1856 = vmatprep.subr.bf16.mxu0 0
    %1857 = vmatpush1.bf16.msra.mxu0 %v1254
    %1858 = vmatprep.subr.bf16.mxu0 0
    %1859 = vmatpush1.bf16.msra.mxu0 %v1257
    %1860 = vmatprep.subr.bf16.mxu0 0
    %1861 = vmatpush1.bf16.msra.mxu0 %v1260
    %1862 = vmatprep.subr.bf16.mxu0 0
    %1863 = vmatpush1.bf16.msra.mxu0 %v1263
    %1864 = vmatprep.subr.bf16.mxu0 0
    %1865 = vmatpush1.bf16.msra.mxu0 %v1266
    %1866 = vmatprep.subr.bf16.mxu0 0
    %1867 = vmatpush1.bf16.msra.mxu0 %v1269
    %1868 = vmatprep.subr.bf16.mxu0 0
    %1869 = vmatpush1.bf16.msra.mxu0 %v1272
    %1870 = vmatprep.subr.bf16.mxu0 0
    %1871 = vmatpush1.bf16.msra.mxu0 %v1275
    %1872 = vmatprep.subr.bf16.mxu0 0
    %1873 = vmatpush1.bf16.msra.mxu0 0
    %1874 = vmatprep.subr.bf16.mxu0 0
    %1875 = vmatpush1.bf16.msra.mxu0 0
    %1876 = vmatprep.subr.bf16.mxu0 0
    %1877 = vmatpush1.bf16.msra.mxu0 0
    %1878 = vmatprep.subr.bf16.mxu0 0
    %1879 = vmatpush1.bf16.msra.mxu0 0
    %1880 = vmatprep.subr.bf16.mxu0 0
    %1881 = vmatpush1.bf16.msra.mxu0 0
    %1882 = vmatprep.subr.bf16.mxu0 0
    %1883 = vmatpush1.bf16.msra.mxu0 0
    %1884 = vmatprep.subr.bf16.mxu0 0
    %1885 = vmatpush1.bf16.msra.mxu0 0
    %1886 = vmatprep.subr.bf16.mxu0 0
    %1887 = vmatpush1.bf16.msra.mxu0 0
    %1888 = vmatprep.mubr.bf16.mxu0 0
    %1889 = vmatmul.mubr.bf16.gmra.mrb[0].mxu0 %v1814
    %v1890 = vpop.f32.mrb[0].mxu0
    %v1891 = vadd.f32 %v1168, %v1890
    %v1892 = vpop.f32.mrb[0].mxu0
    %v1893 = vpop.f32.mrb[0].mxu0
    %v1894 = vpop.f32.mrb[0].mxu0
    %1895 = vdwg.mxu0
    %v1896 = vadd.f32 %v1114, %v1850
    %v1897 = vxor.u32 %v1896, 2147483648
    %v1898 = vmul.f32 %v1897, 1.442695
    %v1899 = vpow.pop %v1898
    %v1900 = vadd.f32 %v1899, 1.0
    %v1901 = vrcp.pop %v1900
    %v1902 = vmul.f32 1.0, %v1901
    %v1903 = vadd.f32 %v1115, %v1852
    %v1904 = vxor.u32 %v1903, 2147483648
    %v1905 = vmul.f32 %v1904, 1.442695
    %v1906 = vpow.pop %v1905
    %v1907 = vadd.f32 %v1906, 1.0
    %v1908 = vrcp.pop %v1907
    %v1909 = vmul.f32 1.0, %v1908
    %v1910 = vmul.f32 %v1902, %v1891
    %v1911 = vadd.f32 %v1116, %v1910
    %v1912 = vtanh.pop %v1911
    %v1913 = vsub.f32 1.0, %v1909
    %v1914 = vmul.f32 %v1913, %v1912
    %v1915 = vmul.f32 %v1909, %v1813
    %v1916 = vadd.f32 %v1914, %v1915
    %v1917 = vpack.c.bf16 %v1916, %v1916
    %1918 = vmatprep.subr.bf16.mxu0 %v1253
    %1919 = vmatpush1.bf16.msra.mxu0 %v1252
    %1920 = vmatprep.subr.bf16.mxu0 %v1256
    %1921 = vmatpush1.bf16.msra.mxu0 %v1255
    %1922 = vmatprep.subr.bf16.mxu0 %v1259
    %1923 = vmatpush1.bf16.msra.mxu0 %v1258
    %1924 = vmatprep.subr.bf16.mxu0 %v1262
    %1925 = vmatpush1.bf16.msra.mxu0 %v1261
    %1926 = vmatprep.subr.bf16.mxu0 %v1265
    %1927 = vmatpush1.bf16.msra.mxu0 %v1264
    %1928 = vmatprep.subr.bf16.mxu0 %v1268
    %1929 = vmatpush1.bf16.msra.mxu0 %v1267
    %1930 = vmatprep.subr.bf16.mxu0 %v1271
    %1931 = vmatpush1.bf16.msra.mxu0 %v1270
    %1932 = vmatprep.subr.bf16.mxu0 %v1274
    %1933 = vmatpush1.bf16.msra.mxu0 %v1273
    %1934 = vmatprep.subr.bf16.mxu0 0
    %1935 = vmatpush1.bf16.msra.mxu0 0
    %1936 = vmatprep.subr.bf16.mxu0 0
    %1937 = vmatpush1.bf16.msra.mxu0 0
    %1938 = vmatprep.subr.bf16.mxu0 0
    %1939 = vmatpush1.bf16.msra.mxu0 0
    %1940 = vmatprep.subr.bf16.mxu0 0
    %1941 = vmatpush1.bf16.msra.mxu0 0
    %1942 = vmatprep.subr.bf16.mxu0 0
    %1943 = vmatpush1.bf16.msra.mxu0 0
    %1944 = vmatprep.subr.bf16.mxu0 0
    %1945 = vmatpush1.bf16.msra.mxu0 0
    %1946 = vmatprep.subr.bf16.mxu0 0
    %1947 = vmatpush1.bf16.msra.mxu0 0
    %1948 = vmatprep.subr.bf16.mxu0 0
    %1949 = vmatpush1.bf16.msra.mxu0 0
    %1950 = vmatprep.mubr.bf16.mxu0 0
    %1951 = vmatmul.mubr.bf16.gmra.mrb[0].mxu0 %v1917
    %v1952 = vpop.f32.mrb[0].mxu0
    %v1953 = vadd.f32 %v1160, %v1952
    %v1954 = vpop.f32.mrb[0].mxu0
    %v1955 = vadd.f32 %v1164, %v1954
    %v1956 = vpop.f32.mrb[0].mxu0
    %v1957 = vpop.f32.mrb[0].mxu0
    %1958 = vdwg.mxu0
    %1959 = vmatprep.subr.bf16.mxu0 0
    %1960 = vmatpush1.bf16.msra.mxu0 %v1254
    %1961 = vmatprep.subr.bf16.mxu0 0
    %1962 = vmatpush1.bf16.msra.mxu0 %v1257
    %1963 = vmatprep.subr.bf16.mxu0 0
    %1964 = vmatpush1.bf16.msra.mxu0 %v1260
    %1965 = vmatprep.subr.bf16.mxu0 0
    %1966 = vmatpush1.bf16.msra.mxu0 %v1263
    %1967 = vmatprep.subr.bf16.mxu0 0
    %1968 = vmatpush1.bf16.msra.mxu0 %v1266
    %1969 = vmatprep.subr.bf16.mxu0 0
    %1970 = vmatpush1.bf16.msra.mxu0 %v1269
    %1971 = vmatprep.subr.bf16.mxu0 0
    %1972 = vmatpush1.bf16.msra.mxu0 %v1272
    %1973 = vmatprep.subr.bf16.mxu0 0
    %1974 = vmatpush1.bf16.msra.mxu0 %v1275
    %1975 = vmatprep.subr.bf16.mxu0 0
    %1976 = vmatpush1.bf16.msra.mxu0 0
    %1977 = vmatprep.subr.bf16.mxu0 0
    %1978 = vmatpush1.bf16.msra.mxu0 0
    %1979 = vmatprep.subr.bf16.mxu0 0
    %1980 = vmatpush1.bf16.msra.mxu0 0
    %1981 = vmatprep.subr.bf16.mxu0 0
    %1982 = vmatpush1.bf16.msra.mxu0 0
    %1983 = vmatprep.subr.bf16.mxu0 0
    %1984 = vmatpush1.bf16.msra.mxu0 0
    %1985 = vmatprep.subr.bf16.mxu0 0
    %1986 = vmatpush1.bf16.msra.mxu0 0
    %1987 = vmatprep.subr.bf16.mxu0 0
    %1988 = vmatpush1.bf16.msra.mxu0 0
    %1989 = vmatprep.subr.bf16.mxu0 0
    %1990 = vmatpush1.bf16.msra.mxu0 0
    %1991 = vmatprep.mubr.bf16.mxu0 0
    %1992 = vmatmul.mubr.bf16.gmra.mrb[0].mxu0 %v1917
    %v1993 = vpop.f32.mrb[0].mxu0
    %v1994 = vadd.f32 %v1168, %v1993
    %v1995 = vpop.f32.mrb[0].mxu0
    %v1996 = vpop.f32.mrb[0].mxu0
    %v1997 = vpop.f32.mrb[0].mxu0
    %1998 = vdwg.mxu0
    %v1999 = vadd.f32 %v1117, %v1953
    %v2000 = vxor.u32 %v1999, 2147483648
    %v2001 = vmul.f32 %v2000, 1.442695
    %v2002 = vpow.pop %v2001
    %v2003 = vadd.f32 %v2002, 1.0
    %v2004 = vrcp.pop %v2003
    %v2005 = vmul.f32 1.0, %v2004
    %v2006 = vadd.f32 %v1118, %v1955
    %v2007 = vxor.u32 %v2006, 2147483648
    %v2008 = vmul.f32 %v2007, 1.442695
    %v2009 = vpow.pop %v2008
    %v2010 = vadd.f32 %v2009, 1.0
    %v2011 = vrcp.pop %v2010
    %v2012 = vmul.f32 1.0, %v2011
    %v2013 = vmul.f32 %v2005, %v1994
    %v2014 = vadd.f32 %v1119, %v2013
    %v2015 = vtanh.pop %v2014
    %v2016 = vsub.f32 1.0, %v2012
    %v2017 = vmul.f32 %v2016, %v2015
    %v2018 = vmul.f32 %v2012, %v1916
    %v2019 = vadd.f32 %v2017, %v2018
    %v2020 = vpack.c.bf16 %v2019, %v2019
    %2021 = vmatprep.subr.bf16.mxu0 %v1253
    %2022 = vmatpush1.bf16.msra.mxu0 %v1252
    %2023 = vmatprep.subr.bf16.mxu0 %v1256
    %2024 = vmatpush1.bf16.msra.mxu0 %v1255
    %2025 = vmatprep.subr.bf16.mxu0 %v1259
    %2026 = vmatpush1.bf16.msra.mxu0 %v1258
    %2027 = vmatprep.subr.bf16.mxu0 %v1262
    %2028 = vmatpush1.bf16.msra.mxu0 %v1261
    %2029 = vmatprep.subr.bf16.mxu0 %v1265
    %2030 = vmatpush1.bf16.msra.mxu0 %v1264
    %2031 = vmatprep.subr.bf16.mxu0 %v1268
    %2032 = vmatpush1.bf16.msra.mxu0 %v1267
    %2033 = vmatprep.subr.bf16.mxu0 %v1271
    %2034 = vmatpush1.bf16.msra.mxu0 %v1270
    %2035 = vmatprep.subr.bf16.mxu0 %v1274
    %2036 = vmatpush1.bf16.msra.mxu0 %v1273
    %2037 = vmatprep.subr.bf16.mxu0 0
    %2038 = vmatpush1.bf16.msra.mxu0 0
    %2039 = vmatprep.subr.bf16.mxu0 0
    %2040 = vmatpush1.bf16.msra.mxu0 0
    %2041 = vmatprep.subr.bf16.mxu0 0
    %2042 = vmatpush1.bf16.msra.mxu0 0
    %2043 = vmatprep.subr.bf16.mxu0 0
    %2044 = vmatpush1.bf16.msra.mxu0 0
    %2045 = vmatprep.subr.bf16.mxu0 0
    %2046 = vmatpush1.bf16.msra.mxu0 0
    %2047 = vmatprep.subr.bf16.mxu0 0
    %2048 = vmatpush1.bf16.msra.mxu0 0
    %2049 = vmatprep.subr.bf16.mxu0 0
    %2050 = vmatpush1.bf16.msra.mxu0 0
    %2051 = vmatprep.subr.bf16.mxu0 0
    %2052 = vmatpush1.bf16.msra.mxu0 0
    %2053 = vmatprep.mubr.bf16.mxu0 0
    %2054 = vmatmul.mubr.bf16.gmra.mrb[0].mxu0 %v2020
    %v2055 = vpop.f32.mrb[0].mxu0
    %v2056 = vadd.f32 %v1160, %v2055
    %v2057 = vpop.f32.mrb[0].mxu0
    %v2058 = vadd.f32 %v1164, %v2057
    %v2059 = vpop.f32.mrb[0].mxu0
    %v2060 = vpop.f32.mrb[0].mxu0
    %2061 = vdwg.mxu0
    %2062 = vmatprep.subr.bf16.mxu0 0
    %2063 = vmatpush1.bf16.msra.mxu0 %v1254
    %2064 = vmatprep.subr.bf16.mxu0 0
    %2065 = vmatpush1.bf16.msra.mxu0 %v1257
    %2066 = vmatprep.subr.bf16.mxu0 0
    %2067 = vmatpush1.bf16.msra.mxu0 %v1260
    %2068 = vmatprep.subr.bf16.mxu0 0
    %2069 = vmatpush1.bf16.msra.mxu0 %v1263
    %2070 = vmatprep.subr.bf16.mxu0 0
    %2071 = vmatpush1.bf16.msra.mxu0 %v1266
    %2072 = vmatprep.subr.bf16.mxu0 0
    %2073 = vmatpush1.bf16.msra.mxu0 %v1269
    %2074 = vmatprep.subr.bf16.mxu0 0
    %2075 = vmatpush1.bf16.msra.mxu0 %v1272
    %2076 = vmatprep.subr.bf16.mxu0 0
    %2077 = vmatpush1.bf16.msra.mxu0 %v1275
    %2078 = vmatprep.subr.bf16.mxu0 0
    %2079 = vmatpush1.bf16.msra.mxu0 0
    %2080 = vmatprep.subr.bf16.mxu0 0
    %2081 = vmatpush1.bf16.msra.mxu0 0
    %2082 = vmatprep.subr.bf16.mxu0 0
    %2083 = vmatpush1.bf16.msra.mxu0 0
    %2084 = vmatprep.subr.bf16.mxu0 0
    %2085 = vmatpush1.bf16.msra.mxu0 0
    %2086 = vmatprep.subr.bf16.mxu0 0
    %2087 = vmatpush1.bf16.msra.mxu0 0
    %2088 = vmatprep.subr.bf16.mxu0 0
    %2089 = vmatpush1.bf16.msra.mxu0 0
    %2090 = vmatprep.subr.bf16.mxu0 0
    %2091 = vmatpush1.bf16.msra.mxu0 0
    %2092 = vmatprep.subr.bf16.mxu0 0
    %2093 = vmatpush1.bf16.msra.mxu0 0
    %2094 = vmatprep.mubr.bf16.mxu0 0
    %2095 = vmatmul.mubr.bf16.gmra.mrb[0].mxu0 %v2020
    %v2096 = vpop.f32.mrb[0].mxu0
    %v2097 = vadd.f32 %v1168, %v2096
    %v2098 = vpop.f32.mrb[0].mxu0
    %v2099 = vpop.f32.mrb[0].mxu0
    %v2100 = vpop.f32.mrb[0].mxu0
    %2101 = vdwg.mxu0
    %v2102 = vadd.f32 %v1120, %v2056
    %v2103 = vxor.u32 %v2102, 2147483648
    %v2104 = vmul.f32 %v2103, 1.442695
    %v2105 = vpow.pop %v2104
    %v2106 = vadd.f32 %v2105, 1.0
    %v2107 = vrcp.pop %v2106
    %v2108 = vmul.f32 1.0, %v2107
    %v2109 = vadd.f32 %v1121, %v2058
    %v2110 = vxor.u32 %v2109, 2147483648
    %v2111 = vmul.f32 %v2110, 1.442695
    %v2112 = vpow.pop %v2111
    %v2113 = vadd.f32 %v2112, 1.0
    %v2114 = vrcp.pop %v2113
    %v2115 = vmul.f32 1.0, %v2114
    %v2116 = vmul.f32 %v2108, %v2097
    %v2117 = vadd.f32 %v1122, %v2116
    %v2118 = vtanh.pop %v2117
    %v2119 = vsub.f32 1.0, %v2115
    %v2120 = vmul.f32 %v2119, %v2118
    %v2121 = vmul.f32 %v2115, %v2019
    %v2122 = vadd.f32 %v2120, %v2121
    %v2123 = vpack.c.bf16 %v1504, %v1401
    %v2124 = vpack.c.bf16 %v1710, %v1607
    %v2125 = vpack.c.bf16 %v1916, %v1813
    %v2126 = vpack.c.bf16 %v2122, %v2019
    %v2127 = vld [vmem:[#allocation8] sm:$0xff]
    %v2128 = vld [vmem:[#allocation8 + $0x8] sm:$0xf]
    %v2129 = vld [vmem:[#allocation8 + $0xc] sm:$0xff]
    %v2130 = vld [vmem:[#allocation8 + $0x14] sm:$0xf]
    %v2131 = vld [vmem:[#allocation8 + $0x18] sm:$0xff]
    %v2132 = vld [vmem:[#allocation8 + $0x20] sm:$0xf]
    %v2133 = vld [vmem:[#allocation8 + $0x24] sm:$0xff]
    %v2134 = vld [vmem:[#allocation8 + $0x2c] sm:$0xf]
    %v2135 = vld [vmem:[#allocation8 + $0x30] sm:$0xff]
    %v2136 = vld [vmem:[#allocation8 + $0x38] sm:$0xf]
    %v2137 = vld [vmem:[#allocation8 + $0x3c] sm:$0xff]
    %v2138 = vld [vmem:[#allocation8 + $0x44] sm:$0xf]
    %v2139 = vld [vmem:[#allocation8 + $0x48] sm:$0xff]
    %v2140 = vld [vmem:[#allocation8 + $0x50] sm:$0xf]
    %v2141 = vld [vmem:[#allocation8 + $0x54] sm:$0xff]
    %v2142 = vld [vmem:[#allocation8 + $0x5c] sm:$0xf]
    %v2143 = vld [vmem:[#allocation8 + $0x60] sm:$0xff]
    %v2144 = vld [vmem:[#allocation8 + $0x68] sm:$0xf]
    %v2145 = vld [vmem:[#allocation8 + $0x6c] sm:$0xff]
    %v2146 = vld [vmem:[#allocation8 + $0x74] sm:$0xf]
    %v2147 = vld [vmem:[#allocation8 + $0x78] sm:$0xff]
    %v2148 = vld [vmem:[#allocation8 + $0x80] sm:$0xf]
    %v2149 = vld [vmem:[#allocation8 + $0x84] sm:$0xff]
    %v2150 = vld [vmem:[#allocation8 + $0x8c] sm:$0xf]
    %v2151 = vld [vmem:[#allocation8 + $0x90] sm:$0xff]
    %v2152 = vld [vmem:[#allocation8 + $0x98] sm:$0xf]
    %v2153 = vld [vmem:[#allocation8 + $0x9c] sm:$0xff]
    %v2154 = vld [vmem:[#allocation8 + $0xa4] sm:$0xf]
    %v2155 = vld [vmem:[#allocation8 + $0xa8] sm:$0xff]
    %v2156 = vld [vmem:[#allocation8 + $0xb0] sm:$0xf]
    %v2157 = vld [vmem:[#allocation8 + $0xb4] sm:$0xff]
    %v2158 = vld [vmem:[#allocation8 + $0xbc] sm:$0xf]
    %v2191 = vunpack.c.l.b16 %v2127
    %v2192 = vunpack.c.h.b16 %v2127
    %v2193 = vunpack.c.l.b16 %v2128
    %v2194 = vunpack.c.l.b16 %v2129
    %v2195 = vunpack.c.h.b16 %v2129
    %v2196 = vunpack.c.l.b16 %v2130
    %v2197 = vunpack.c.l.b16 %v2131
    %v2198 = vunpack.c.h.b16 %v2131
    %v2199 = vunpack.c.l.b16 %v2132
    %v2200 = vunpack.c.l.b16 %v2133
    %v2201 = vunpack.c.h.b16 %v2133
    %v2202 = vunpack.c.l.b16 %v2134
    %v2203 = vunpack.c.l.b16 %v2135
    %v2204 = vunpack.c.h.b16 %v2135
    %v2205 = vunpack.c.l.b16 %v2136
    %v2206 = vunpack.c.l.b16 %v2137
    %v2207 = vunpack.c.h.b16 %v2137
    %v2208 = vunpack.c.l.b16 %v2138
    %v2209 = vunpack.c.l.b16 %v2139
    %v2210 = vunpack.c.h.b16 %v2139
    %v2211 = vunpack.c.l.b16 %v2140
    %v2212 = vunpack.c.l.b16 %v2141
    %v2213 = vunpack.c.h.b16 %v2141
    %v2214 = vunpack.c.l.b16 %v2142
    %v2215 = vunpack.c.l.b16 %v2143
    %v2216 = vunpack.c.h.b16 %v2143
    %v2217 = vunpack.c.l.b16 %v2144
    %v2218 = vunpack.c.l.b16 %v2145
    %v2219 = vunpack.c.h.b16 %v2145
    %v2220 = vunpack.c.l.b16 %v2146
    %v2221 = vunpack.c.l.b16 %v2147
    %v2222 = vunpack.c.h.b16 %v2147
    %v2223 = vunpack.c.l.b16 %v2148
    %v2224 = vunpack.c.l.b16 %v2149
    %v2225 = vunpack.c.h.b16 %v2149
    %v2226 = vunpack.c.l.b16 %v2150
    %v2227 = vunpack.c.l.b16 %v2151
    %v2228 = vunpack.c.h.b16 %v2151
    %v2229 = vunpack.c.l.b16 %v2152
    %v2230 = vunpack.c.l.b16 %v2153
    %v2231 = vunpack.c.h.b16 %v2153
    %v2232 = vunpack.c.l.b16 %v2154
    %v2233 = vunpack.c.l.b16 %v2155
    %v2234 = vunpack.c.h.b16 %v2155
    %v2235 = vunpack.c.l.b16 %v2156
    %v2236 = vunpack.c.l.b16 %v2157
    %v2237 = vunpack.c.h.b16 %v2157
    %v2238 = vunpack.c.l.b16 %v2158
    %v2239 = vpack.c.b16 %v2194, %v2191
    %v2240 = vpack.c.b16 %v2195, %v2192
    %v2241 = vpack.c.b16 %v2196, %v2193
    %v2242 = vpack.c.b16 %v2200, %v2197
    %v2243 = vpack.c.b16 %v2201, %v2198
    %v2244 = vpack.c.b16 %v2202, %v2199
    %v2245 = vpack.c.b16 %v2206, %v2203
    %v2246 = vpack.c.b16 %v2207, %v2204
    %v2247 = vpack.c.b16 %v2208, %v2205
    %v2248 = vpack.c.b16 %v2212, %v2209
    %v2249 = vpack.c.b16 %v2213, %v2210
    %v2250 = vpack.c.b16 %v2214, %v2211
    %v2251 = vpack.c.b16 %v2218, %v2215
    %v2252 = vpack.c.b16 %v2219, %v2216
    %v2253 = vpack.c.b16 %v2220, %v2217
    %v2254 = vpack.c.b16 %v2224, %v2221
    %v2255 = vpack.c.b16 %v2225, %v2222
    %v2256 = vpack.c.b16 %v2226, %v2223
    %v2257 = vpack.c.b16 %v2230, %v2227
    %v2258 = vpack.c.b16 %v2231, %v2228
    %v2259 = vpack.c.b16 %v2232, %v2229
    %v2260 = vpack.c.b16 %v2236, %v2233
    %v2261 = vpack.c.b16 %v2237, %v2234
    %v2262 = vpack.c.b16 %v2238, %v2235
    %2287 = vmatprep.subr.bf16.mxu0 %v2240
    %2288 = vmatpush1.bf16.msra.mxu0 %v2239
    %2289 = vmatprep.subr.bf16.mxu0 %v2243
    %2290 = vmatpush1.bf16.msra.mxu0 %v2242
    %2291 = vmatprep.subr.bf16.mxu0 %v2246
    %2292 = vmatpush1.bf16.msra.mxu0 %v2245
    %2293 = vmatprep.subr.bf16.mxu0 %v2249
    %2294 = vmatpush1.bf16.msra.mxu0 %v2248
    %2295 = vmatprep.subr.bf16.mxu0 %v2252
    %2296 = vmatpush1.bf16.msra.mxu0 %v2251
    %2297 = vmatprep.subr.bf16.mxu0 %v2255
    %2298 = vmatpush1.bf16.msra.mxu0 %v2254
    %2299 = vmatprep.subr.bf16.mxu0 %v2258
    %2300 = vmatpush1.bf16.msra.mxu0 %v2257
    %2301 = vmatprep.subr.bf16.mxu0 %v2261
    %2302 = vmatpush1.bf16.msra.mxu0 %v2260
    %2303 = vmatprep.subr.bf16.mxu0 0
    %2304 = vmatpush1.bf16.msra.mxu0 0
    %2305 = vmatprep.subr.bf16.mxu0 0
    %2306 = vmatpush1.bf16.msra.mxu0 0
    %2307 = vmatprep.subr.bf16.mxu0 0
    %2308 = vmatpush1.bf16.msra.mxu0 0
    %2309 = vmatprep.subr.bf16.mxu0 0
    %2310 = vmatpush1.bf16.msra.mxu0 0
    %2311 = vmatprep.subr.bf16.mxu0 0
    %2312 = vmatpush1.bf16.msra.mxu0 0
    %2313 = vmatprep.subr.bf16.mxu0 0
    %2314 = vmatpush1.bf16.msra.mxu0 0
    %2315 = vmatprep.subr.bf16.mxu0 0
    %2316 = vmatpush1.bf16.msra.mxu0 0
    %2317 = vmatprep.subr.bf16.mxu0 0
    %2318 = vmatpush1.bf16.msra.mxu0 0
    %2319 = vmatprep.mubr.bf16.mxu0 0
    %2320 = vmatmul.mubr.bf16.gmra.mrb[0].mxu0 %v518
    %v2321 = vpop.f32.mrb[0].mxu0
    %v2322 = vadd.f32 0.0, %v2321
    %v2323 = vpop.f32.mrb[0].mxu0
    %v2324 = vadd.f32 0.0, %v2323
    %v2325 = vpop.f32.mrb[0].mxu0
    %v2326 = vadd.f32 0.0, %v2325
    %v2327 = vpop.f32.mrb[0].mxu0
    %v2328 = vadd.f32 0.0, %v2327
    %2329 = vmatprep.mubr.bf16.mxu0 0
    %2330 = vmatmul.mubr.bf16.gmra.mrb[0].mxu0 %v519
    %v2331 = vpop.f32.mrb[0].mxu0
    %v2332 = vadd.f32 0.0, %v2331
    %v2333 = vpop.f32.mrb[0].mxu0
    %v2334 = vadd.f32 0.0, %v2333
    %v2335 = vpop.f32.mrb[0].mxu0
    %v2336 = vadd.f32 0.0, %v2335
    %v2337 = vpop.f32.mrb[0].mxu0
    %v2338 = vadd.f32 0.0, %v2337
    %2339 = vmatprep.mubr.bf16.mxu0 0
    %2340 = vmatmul.mubr.bf16.gmra.mrb[0].mxu0 %v520
    %v2341 = vpop.f32.mrb[0].mxu0
    %v2342 = vadd.f32 0.0, %v2341
    %v2343 = vpop.f32.mrb[0].mxu0
    %v2344 = vadd.f32 0.0, %v2343
    %v2345 = vpop.f32.mrb[0].mxu0
    %v2346 = vadd.f32 0.0, %v2345
    %v2347 = vpop.f32.mrb[0].mxu0
    %v2348 = vadd.f32 0.0, %v2347
    %2349 = vmatprep.mubr.bf16.mxu0 0
    %2350 = vmatmul.mubr.bf16.gmra.mrb[0].mxu0 %v521
    %v2351 = vpop.f32.mrb[0].mxu0
    %v2352 = vadd.f32 0.0, %v2351
    %v2353 = vpop.f32.mrb[0].mxu0
    %v2354 = vadd.f32 0.0, %v2353
    %v2355 = vpop.f32.mrb[0].mxu0
    %v2356 = vadd.f32 0.0, %v2355
    %v2357 = vpop.f32.mrb[0].mxu0
    %v2358 = vadd.f32 0.0, %v2357
    %2359 = vdwg.mxu0
    %2360 = vmatprep.subr.bf16.mxu0 0
    %2361 = vmatpush1.bf16.msra.mxu0 %v2241
    %2362 = vmatprep.subr.bf16.mxu0 0
    %2363 = vmatpush1.bf16.msra.mxu0 %v2244
    %2364 = vmatprep.subr.bf16.mxu0 0
    %2365 = vmatpush1.bf16.msra.mxu0 %v2247
    %2366 = vmatprep.subr.bf16.mxu0 0
    %2367 = vmatpush1.bf16.msra.mxu0 %v2250
    %2368 = vmatprep.subr.bf16.mxu0 0
    %2369 = vmatpush1.bf16.msra.mxu0 %v2253
    %2370 = vmatprep.subr.bf16.mxu0 0
    %2371 = vmatpush1.bf16.msra.mxu0 %v2256
    %2372 = vmatprep.subr.bf16.mxu0 0
    %2373 = vmatpush1.bf16.msra.mxu0 %v2259
    %2374 = vmatprep.subr.bf16.mxu0 0
    %2375 = vmatpush1.bf16.msra.mxu0 %v2262
    %2376 = vmatprep.subr.bf16.mxu0 0
    %2377 = vmatpush1.bf16.msra.mxu0 0
    %2378 = vmatprep.subr.bf16.mxu0 0
    %2379 = vmatpush1.bf16.msra.mxu0 0
    %2380 = vmatprep.subr.bf16.mxu0 0
    %2381 = vmatpush1.bf16.msra.mxu0 0
    %2382 = vmatprep.subr.bf16.mxu0 0
    %2383 = vmatpush1.bf16.msra.mxu0 0
    %2384 = vmatprep.subr.bf16.mxu0 0
    %2385 = vmatpush1.bf16.msra.mxu0 0
    %2386 = vmatprep.subr.bf16.mxu0 0
    %2387 = vmatpush1.bf16.msra.mxu0 0
    %2388 = vmatprep.subr.bf16.mxu0 0
    %2389 = vmatpush1.bf16.msra.mxu0 0
    %2390 = vmatprep.subr.bf16.mxu0 0
    %2391 = vmatpush1.bf16.msra.mxu0 0
    %2392 = vmatprep.mubr.bf16.mxu0 0
    %2393 = vmatmul.mubr.bf16.gmra.mrb[0].mxu0 %v518
    %v2394 = vpop.f32.mrb[0].mxu0
    %v2395 = vadd.f32 0.0, %v2394
    %v2396 = vpop.f32.mrb[0].mxu0
    %v2397 = vpop.f32.mrb[0].mxu0
    %v2398 = vadd.f32 0.0, %v2397
    %v2399 = vpop.f32.mrb[0].mxu0
    %2400 = vmatprep.mubr.bf16.mxu0 0
    %2401 = vmatmul.mubr.bf16.gmra.mrb[0].mxu0 %v519
    %v2402 = vpop.f32.mrb[0].mxu0
    %v2403 = vadd.f32 0.0, %v2402
    %v2404 = vpop.f32.mrb[0].mxu0
    %v2405 = vpop.f32.mrb[0].mxu0
    %v2406 = vadd.f32 0.0, %v2405
    %v2407 = vpop.f32.mrb[0].mxu0
    %2408 = vmatprep.mubr.bf16.mxu0 0
    %2409 = vmatmul.mubr.bf16.gmra.mrb[0].mxu0 %v520
    %v2410 = vpop.f32.mrb[0].mxu0
    %v2411 = vadd.f32 0.0, %v2410
    %v2412 = vpop.f32.mrb[0].mxu0
    %v2413 = vpop.f32.mrb[0].mxu0
    %v2414 = vadd.f32 0.0, %v2413
    %v2415 = vpop.f32.mrb[0].mxu0
    %2416 = vmatprep.mubr.bf16.mxu0 0
    %2417 = vmatmul.mubr.bf16.gmra.mrb[0].mxu0 %v521
    %v2418 = vpop.f32.mrb[0].mxu0
    %v2419 = vadd.f32 0.0, %v2418
    %v2420 = vpop.f32.mrb[0].mxu0
    %v2421 = vpop.f32.mrb[0].mxu0
    %v2422 = vadd.f32 0.0, %v2421
    %v2423 = vpop.f32.mrb[0].mxu0
    %2424 = vdwg.mxu0
    %v2425 = vld [vmem:[%s10] sm:$0x7]
    %v2427 = vlaneseq
    %v2428 = vshrl.u32 %v2427, 7
    %v2429 = vsub.s32 0, %v2428
    %v2430 = vrot.slane %v2425, %v2429
    %v2431 = vlaneseq
    %v2432 = vshrl.u32 %v2431, 7
    %v2433 = vsub.s32 1, %v2432
    %v2434 = vrot.slane %v2425, %v2433
    %v2435 = vlaneseq
    %v2436 = vshrl.u32 %v2435, 7
    %v2437 = vsub.s32 2, %v2436
    %v2438 = vrot.slane %v2425, %v2437
    %v2442 = vadd.f32 %v2322, %v2430
    %v2443 = vadd.f32 %v2324, %v2434
    %v2444 = vadd.f32 %v2395, %v2438
    %v2445 = vadd.f32 %v2326, %v2430
    %v2446 = vadd.f32 %v2328, %v2434
    %v2447 = vadd.f32 %v2398, %v2438
    %v2448 = vadd.f32 %v2332, %v2430
    %v2449 = vadd.f32 %v2334, %v2434
    %v2450 = vadd.f32 %v2403, %v2438
    %v2451 = vadd.f32 %v2336, %v2430
    %v2452 = vadd.f32 %v2338, %v2434
    %v2453 = vadd.f32 %v2406, %v2438
    %v2454 = vadd.f32 %v2342, %v2430
    %v2455 = vadd.f32 %v2344, %v2434
    %v2456 = vadd.f32 %v2411, %v2438
    %v2457 = vadd.f32 %v2346, %v2430
    %v2458 = vadd.f32 %v2348, %v2434
    %v2459 = vadd.f32 %v2414, %v2438
    %v2460 = vadd.f32 %v2352, %v2430
    %v2461 = vadd.f32 %v2354, %v2434
    %v2462 = vadd.f32 %v2419, %v2438
    %v2463 = vadd.f32 %v2356, %v2430
    %v2464 = vadd.f32 %v2358, %v2434
    %v2465 = vadd.f32 %v2422, %v2438
    %v2466 = vld [vmem:[#allocation10] sm:$0xff]
    %v2467 = vld [vmem:[#allocation10 + $0x8] sm:$0xf]
    %v2468 = vld [vmem:[#allocation10 + $0xc] sm:$0xff]
    %v2469 = vld [vmem:[#allocation10 + $0x14] sm:$0xf]
    %v2470 = vld [vmem:[#allocation10 + $0x18] sm:$0xff]
    %v2471 = vld [vmem:[#allocation10 + $0x20] sm:$0xf]
    %v2472 = vld [vmem:[#allocation10 + $0x24] sm:$0xff]
    %v2473 = vld [vmem:[#allocation10 + $0x2c] sm:$0xf]
    %v2474 = vld [vmem:[#allocation10 + $0x30] sm:$0xff]
    %v2475 = vld [vmem:[#allocation10 + $0x38] sm:$0xf]
    %v2476 = vld [vmem:[#allocation10 + $0x3c] sm:$0xff]
    %v2477 = vld [vmem:[#allocation10 + $0x44] sm:$0xf]
    %v2478 = vld [vmem:[#allocation10 + $0x48] sm:$0xff]
    %v2479 = vld [vmem:[#allocation10 + $0x50] sm:$0xf]
    %v2480 = vld [vmem:[#allocation10 + $0x54] sm:$0xff]
    %v2481 = vld [vmem:[#allocation10 + $0x5c] sm:$0xf]
    %v2482 = vld [vmem:[#allocation10 + $0x60] sm:$0xff]
    %v2483 = vld [vmem:[#allocation10 + $0x68] sm:$0xf]
    %v2484 = vld [vmem:[#allocation10 + $0x6c] sm:$0xff]
    %v2485 = vld [vmem:[#allocation10 + $0x74] sm:$0xf]
    %v2486 = vld [vmem:[#allocation10 + $0x78] sm:$0xff]
    %v2487 = vld [vmem:[#allocation10 + $0x80] sm:$0xf]
    %v2488 = vld [vmem:[#allocation10 + $0x84] sm:$0xff]
    %v2489 = vld [vmem:[#allocation10 + $0x8c] sm:$0xf]
    %v2490 = vld [vmem:[#allocation10 + $0x90] sm:$0xff]
    %v2491 = vld [vmem:[#allocation10 + $0x98] sm:$0xf]
    %v2492 = vld [vmem:[#allocation10 + $0x9c] sm:$0xff]
    %v2493 = vld [vmem:[#allocation10 + $0xa4] sm:$0xf]
    %v2494 = vld [vmem:[#allocation10 + $0xa8] sm:$0xff]
    %v2495 = vld [vmem:[#allocation10 + $0xb0] sm:$0xf]
    %v2496 = vld [vmem:[#allocation10 + $0xb4] sm:$0xff]
    %v2497 = vld [vmem:[#allocation10 + $0xbc] sm:$0xf]
    %v2498 = vld [vmem:[#allocation11] sm:$0x7]
    %v2499 = vpack.c.bf16 %v2122, %v2122
    %v2501 = vlaneseq
    %v2502 = vshrl.u32 %v2501, 7
    %v2503 = vsub.s32 0, %v2502
    %v2504 = vrot.slane %v2498, %v2503
    %v2505 = vlaneseq
    %v2506 = vshrl.u32 %v2505, 7
    %v2507 = vsub.s32 1, %v2506
    %v2508 = vrot.slane %v2498, %v2507
    %v2509 = vlaneseq
    %v2510 = vshrl.u32 %v2509, 7
    %v2511 = vsub.s32 2, %v2510
    %v2512 = vrot.slane %v2498, %v2511
    %v2548 = vunpack.c.l.b16 %v2466
    %v2549 = vunpack.c.h.b16 %v2466
    %v2550 = vunpack.c.l.b16 %v2467
    %v2551 = vunpack.c.l.b16 %v2468
    %v2552 = vunpack.c.h.b16 %v2468
    %v2553 = vunpack.c.l.b16 %v2469
    %v2554 = vunpack.c.l.b16 %v2470
    %v2555 = vunpack.c.h.b16 %v2470
    %v2556 = vunpack.c.l.b16 %v2471
    %v2557 = vunpack.c.l.b16 %v2472
    %v2558 = vunpack.c.h.b16 %v2472
    %v2559 = vunpack.c.l.b16 %v2473
    %v2560 = vunpack.c.l.b16 %v2474
    %v2561 = vunpack.c.h.b16 %v2474
    %v2562 = vunpack.c.l.b16 %v2475
    %v2563 = vunpack.c.l.b16 %v2476
    %v2564 = vunpack.c.h.b16 %v2476
    %v2565 = vunpack.c.l.b16 %v2477
    %v2566 = vunpack.c.l.b16 %v2478
    %v2567 = vunpack.c.h.b16 %v2478
    %v2568 = vunpack.c.l.b16 %v2479
    %v2569 = vunpack.c.l.b16 %v2480
    %v2570 = vunpack.c.h.b16 %v2480
    %v2571 = vunpack.c.l.b16 %v2481
    %v2572 = vunpack.c.l.b16 %v2482
    %v2573 = vunpack.c.h.b16 %v2482
    %v2574 = vunpack.c.l.b16 %v2483
    %v2575 = vunpack.c.l.b16 %v2484
    %v2576 = vunpack.c.h.b16 %v2484
    %v2577 = vunpack.c.l.b16 %v2485
    %v2578 = vunpack.c.l.b16 %v2486
    %v2579 = vunpack.c.h.b16 %v2486
    %v2580 = vunpack.c.l.b16 %v2487
    %v2581 = vunpack.c.l.b16 %v2488
    %v2582 = vunpack.c.h.b16 %v2488
    %v2583 = vunpack.c.l.b16 %v2489
    %v2584 = vunpack.c.l.b16 %v2490
    %v2585 = vunpack.c.h.b16 %v2490
    %v2586 = vunpack.c.l.b16 %v2491
    %v2587 = vunpack.c.l.b16 %v2492
    %v2588 = vunpack.c.h.b16 %v2492
    %v2589 = vunpack.c.l.b16 %v2493
    %v2590 = vunpack.c.l.b16 %v2494
    %v2591 = vunpack.c.h.b16 %v2494
    %v2592 = vunpack.c.l.b16 %v2495
    %v2593 = vunpack.c.l.b16 %v2496
    %v2594 = vunpack.c.h.b16 %v2496
    %v2595 = vunpack.c.l.b16 %v2497
    %v2596 = vpack.c.b16 %v2551, %v2548
    %v2597 = vpack.c.b16 %v2552, %v2549
    %v2598 = vpack.c.b16 %v2553, %v2550
    %v2599 = vpack.c.b16 %v2557, %v2554
    %v2600 = vpack.c.b16 %v2558, %v2555
    %v2601 = vpack.c.b16 %v2559, %v2556
    %v2602 = vpack.c.b16 %v2563, %v2560
    %v2603 = vpack.c.b16 %v2564, %v2561
    %v2604 = vpack.c.b16 %v2565, %v2562
    %v2605 = vpack.c.b16 %v2569, %v2566
    %v2606 = vpack.c.b16 %v2570, %v2567
    %v2607 = vpack.c.b16 %v2571, %v2568
    %v2608 = vpack.c.b16 %v2575, %v2572
    %v2609 = vpack.c.b16 %v2576, %v2573
    %v2610 = vpack.c.b16 %v2577, %v2574
    %v2611 = vpack.c.b16 %v2581, %v2578
    %v2612 = vpack.c.b16 %v2582, %v2579
    %v2613 = vpack.c.b16 %v2583, %v2580
    %v2614 = vpack.c.b16 %v2587, %v2584
    %v2615 = vpack.c.b16 %v2588, %v2585
    %v2616 = vpack.c.b16 %v2589, %v2586
    %v2617 = vpack.c.b16 %v2593, %v2590
    %v2618 = vpack.c.b16 %v2594, %v2591
    %v2619 = vpack.c.b16 %v2595, %v2592
    %2644 = vmatprep.subr.bf16.mxu0 %v2597
    %2645 = vmatpush1.bf16.msra.mxu0 %v2596
    %2646 = vmatprep.subr.bf16.mxu0 %v2600
    %2647 = vmatpush1.bf16.msra.mxu0 %v2599
    %2648 = vmatprep.subr.bf16.mxu0 %v2603
    %2649 = vmatpush1.bf16.msra.mxu0 %v2602
    %2650 = vmatprep.subr.bf16.mxu0 %v2606
    %2651 = vmatpush1.bf16.msra.mxu0 %v2605
    %2652 = vmatprep.subr.bf16.mxu0 %v2609
    %2653 = vmatpush1.bf16.msra.mxu0 %v2608
    %2654 = vmatprep.subr.bf16.mxu0 %v2612
    %2655 = vmatpush1.bf16.msra.mxu0 %v2611
    %2656 = vmatprep.subr.bf16.mxu0 %v2615
    %2657 = vmatpush1.bf16.msra.mxu0 %v2614
    %2658 = vmatprep.subr.bf16.mxu0 %v2618
    %2659 = vmatpush1.bf16.msra.mxu0 %v2617
    %2660 = vmatprep.subr.bf16.mxu0 0
    %2661 = vmatpush1.bf16.msra.mxu0 0
    %2662 = vmatprep.subr.bf16.mxu0 0
    %2663 = vmatpush1.bf16.msra.mxu0 0
    %2664 = vmatprep.subr.bf16.mxu0 0
    %2665 = vmatpush1.bf16.msra.mxu0 0
    %2666 = vmatprep.subr.bf16.mxu0 0
    %2667 = vmatpush1.bf16.msra.mxu0 0
    %2668 = vmatprep.subr.bf16.mxu0 0
    %2669 = vmatpush1.bf16.msra.mxu0 0
    %2670 = vmatprep.subr.bf16.mxu0 0
    %2671 = vmatpush1.bf16.msra.mxu0 0
    %2672 = vmatprep.subr.bf16.mxu0 0
    %2673 = vmatpush1.bf16.msra.mxu0 0
    %2674 = vmatprep.subr.bf16.mxu0 0
    %2675 = vmatpush1.bf16.msra.mxu0 0
    %2676 = vmatprep.mubr.bf16.mxu0 0
    %2677 = vmatmul.mubr.bf16.gmra.mrb[0].mxu0 %v2499
    %v2678 = vpop.f32.mrb[0].mxu0
    %v2679 = vadd.f32 %v2504, %v2678
    %v2680 = vpop.f32.mrb[0].mxu0
    %v2681 = vadd.f32 %v2508, %v2680
    %v2682 = vpop.f32.mrb[0].mxu0
    %v2683 = vpop.f32.mrb[0].mxu0
    %2684 = vdwg.mxu0
    %2685 = vmatprep.subr.bf16.mxu0 0
    %2686 = vmatpush1.bf16.msra.mxu0 %v2598
    %2687 = vmatprep.subr.bf16.mxu0 0
    %2688 = vmatpush1.bf16.msra.mxu0 %v2601
    %2689 = vmatprep.subr.bf16.mxu0 0
    %2690 = vmatpush1.bf16.msra.mxu0 %v2604
    %2691 = vmatprep.subr.bf16.mxu0 0
    %2692 = vmatpush1.bf16.msra.mxu0 %v2607
    %2693 = vmatprep.subr.bf16.mxu0 0
    %2694 = vmatpush1.bf16.msra.mxu0 %v2610
    %2695 = vmatprep.subr.bf16.mxu0 0
    %2696 = vmatpush1.bf16.msra.mxu0 %v2613
    %2697 = vmatprep.subr.bf16.mxu0 0
    %2698 = vmatpush1.bf16.msra.mxu0 %v2616
    %2699 = vmatprep.subr.bf16.mxu0 0
    %2700 = vmatpush1.bf16.msra.mxu0 %v2619
    %2701 = vmatprep.subr.bf16.mxu0 0
    %2702 = vmatpush1.bf16.msra.mxu0 0
    %2703 = vmatprep.subr.bf16.mxu0 0
    %2704 = vmatpush1.bf16.msra.mxu0 0
    %2705 = vmatprep.subr.bf16.mxu0 0
    %2706 = vmatpush1.bf16.msra.mxu0 0
    %2707 = vmatprep.subr.bf16.mxu0 0
    %2708 = vmatpush1.bf16.msra.mxu0 0
    %2709 = vmatprep.subr.bf16.mxu0 0
    %2710 = vmatpush1.bf16.msra.mxu0 0
    %2711 = vmatprep.subr.bf16.mxu0 0
    %2712 = vmatpush1.bf16.msra.mxu0 0
    %2713 = vmatprep.subr.bf16.mxu0 0
    %2714 = vmatpush1.bf16.msra.mxu0 0
    %2715 = vmatprep.subr.bf16.mxu0 0
    %2716 = vmatpush1.bf16.msra.mxu0 0
    %2717 = vmatprep.mubr.bf16.mxu0 0
    %2718 = vmatmul.mubr.bf16.gmra.mrb[0].mxu0 %v2499
    %v2719 = vpop.f32.mrb[0].mxu0
    %v2720 = vadd.f32 %v2512, %v2719
    %v2721 = vpop.f32.mrb[0].mxu0
    %v2722 = vpop.f32.mrb[0].mxu0
    %v2723 = vpop.f32.mrb[0].mxu0
    %2724 = vdwg.mxu0
    %v2725 = vadd.f32 %v2442, %v2679
    %v2726 = vxor.u32 %v2725, 2147483648
    %v2727 = vmul.f32 %v2726, 1.442695
    %v2728 = vpow.pop %v2727
    %v2729 = vadd.f32 %v2728, 1.0
    %v2730 = vrcp.pop %v2729
    %v2731 = vmul.f32 1.0, %v2730
    %v2732 = vadd.f32 %v2443, %v2681
    %v2733 = vxor.u32 %v2732, 2147483648
    %v2734 = vmul.f32 %v2733, 1.442695
    %v2735 = vpow.pop %v2734
    %v2736 = vadd.f32 %v2735, 1.0
    %v2737 = vrcp.pop %v2736
    %v2738 = vmul.f32 1.0, %v2737
    %v2739 = vmul.f32 %v2731, %v2720
    %v2740 = vadd.f32 %v2444, %v2739
    %v2741 = vtanh.pop %v2740
    %v2742 = vsub.f32 1.0, %v2738
    %v2743 = vmul.f32 %v2742, %v2741
    %v2744 = vmul.f32 %v2738, %v2122
    %v2745 = vadd.f32 %v2743, %v2744
    %v2746 = vpack.c.bf16 %v2745, %v2745
    %2747 = vmatprep.subr.bf16.mxu0 %v2597
    %2748 = vmatpush1.bf16.msra.mxu0 %v2596
    %2749 = vmatprep.subr.bf16.mxu0 %v2600
    %2750 = vmatpush1.bf16.msra.mxu0 %v2599
    %2751 = vmatprep.subr.bf16.mxu0 %v2603
    %2752 = vmatpush1.bf16.msra.mxu0 %v2602
    %2753 = vmatprep.subr.bf16.mxu0 %v2606
    %2754 = vmatpush1.bf16.msra.mxu0 %v2605
    %2755 = vmatprep.subr.bf16.mxu0 %v2609
    %2756 = vmatpush1.bf16.msra.mxu0 %v2608
    %2757 = vmatprep.subr.bf16.mxu0 %v2612
    %2758 = vmatpush1.bf16.msra.mxu0 %v2611
    %2759 = vmatprep.subr.bf16.mxu0 %v2615
    %2760 = vmatpush1.bf16.msra.mxu0 %v2614
    %2761 = vmatprep.subr.bf16.mxu0 %v2618
    %2762 = vmatpush1.bf16.msra.mxu0 %v2617
    %2763 = vmatprep.subr.bf16.mxu0 0
    %2764 = vmatpush1.bf16.msra.mxu0 0
    %2765 = vmatprep.subr.bf16.mxu0 0
    %2766 = vmatpush1.bf16.msra.mxu0 0
    %2767 = vmatprep.subr.bf16.mxu0 0
    %2768 = vmatpush1.bf16.msra.mxu0 0
    %2769 = vmatprep.subr.bf16.mxu0 0
    %2770 = vmatpush1.bf16.msra.mxu0 0
    %2771 = vmatprep.subr.bf16.mxu0 0
    %2772 = vmatpush1.bf16.msra.mxu0 0
    %2773 = vmatprep.subr.bf16.mxu0 0
    %2774 = vmatpush1.bf16.msra.mxu0 0
    %2775 = vmatprep.subr.bf16.mxu0 0
    %2776 = vmatpush1.bf16.msra.mxu0 0
    %2777 = vmatprep.subr.bf16.mxu0 0
    %2778 = vmatpush1.bf16.msra.mxu0 0
    %2779 = vmatprep.mubr.bf16.mxu0 0
    %2780 = vmatmul.mubr.bf16.gmra.mrb[0].mxu0 %v2746
    %v2781 = vpop.f32.mrb[0].mxu0
    %v2782 = vadd.f32 %v2504, %v2781
    %v2783 = vpop.f32.mrb[0].mxu0
    %v2784 = vadd.f32 %v2508, %v2783
    %v2785 = vpop.f32.mrb[0].mxu0
    %v2786 = vpop.f32.mrb[0].mxu0
    %2787 = vdwg.mxu0
    %2788 = vmatprep.subr.bf16.mxu0 0
    %2789 = vmatpush1.bf16.msra.mxu0 %v2598
    %2790 = vmatprep.subr.bf16.mxu0 0
    %2791 = vmatpush1.bf16.msra.mxu0 %v2601
    %2792 = vmatprep.subr.bf16.mxu0 0
    %2793 = vmatpush1.bf16.msra.mxu0 %v2604
    %2794 = vmatprep.subr.bf16.mxu0 0
    %2795 = vmatpush1.bf16.msra.mxu0 %v2607
    %2796 = vmatprep.subr.bf16.mxu0 0
    %2797 = vmatpush1.bf16.msra.mxu0 %v2610
    %2798 = vmatprep.subr.bf16.mxu0 0
    %2799 = vmatpush1.bf16.msra.mxu0 %v2613
    %2800 = vmatprep.subr.bf16.mxu0 0
    %2801 = vmatpush1.bf16.msra.mxu0 %v2616
    %2802 = vmatprep.subr.bf16.mxu0 0
    %2803 = vmatpush1.bf16.msra.mxu0 %v2619
    %2804 = vmatprep.subr.bf16.mxu0 0
    %2805 = vmatpush1.bf16.msra.mxu0 0
    %2806 = vmatprep.subr.bf16.mxu0 0
    %2807 = vmatpush1.bf16.msra.mxu0 0
    %2808 = vmatprep.subr.bf16.mxu0 0
    %2809 = vmatpush1.bf16.msra.mxu0 0
    %2810 = vmatprep.subr.bf16.mxu0 0
    %2811 = vmatpush1.bf16.msra.mxu0 0
    %2812 = vmatprep.subr.bf16.mxu0 0
    %2813 = vmatpush1.bf16.msra.mxu0 0
    %2814 = vmatprep.subr.bf16.mxu0 0
    %2815 = vmatpush1.bf16.msra.mxu0 0
    %2816 = vmatprep.subr.bf16.mxu0 0
    %2817 = vmatpush1.bf16.msra.mxu0 0
    %2818 = vmatprep.subr.bf16.mxu0 0
    %2819 = vmatpush1.bf16.msra.mxu0 0
    %2820 = vmatprep.mubr.bf16.mxu0 0
    %2821 = vmatmul.mubr.bf16.gmra.mrb[0].mxu0 %v2746
    %v2822 = vpop.f32.mrb[0].mxu0
    %v2823 = vadd.f32 %v2512, %v2822
    %v2824 = vpop.f32.mrb[0].mxu0
    %v2825 = vpop.f32.mrb[0].mxu0
    %v2826 = vpop.f32.mrb[0].mxu0
    %2827 = vdwg.mxu0
    %v2828 = vadd.f32 %v2445, %v2782
    %v2829 = vxor.u32 %v2828, 2147483648
    %v2830 = vmul.f32 %v2829, 1.442695
    %v2831 = vpow.pop %v2830
    %v2832 = vadd.f32 %v2831, 1.0
    %v2833 = vrcp.pop %v2832
    %v2834 = vmul.f32 1.0, %v2833
    %v2835 = vadd.f32 %v2446, %v2784
    %v2836 = vxor.u32 %v2835, 2147483648
    %v2837 = vmul.f32 %v2836, 1.442695
    %v2838 = vpow.pop %v2837
    %v2839 = vadd.f32 %v2838, 1.0
    %v2840 = vrcp.pop %v2839
    %v2841 = vmul.f32 1.0, %v2840
    %v2842 = vmul.f32 %v2834, %v2823
    %v2843 = vadd.f32 %v2447, %v2842
    %v2844 = vtanh.pop %v2843
    %v2845 = vsub.f32 1.0, %v2841
    %v2846 = vmul.f32 %v2845, %v2844
    %v2847 = vmul.f32 %v2841, %v2745
    %v2848 = vadd.f32 %v2846, %v2847
    %v2849 = vpack.c.bf16 %v2848, %v2848
    %2850 = vmatprep.subr.bf16.mxu0 %v2597
    %2851 = vmatpush1.bf16.msra.mxu0 %v2596
    %2852 = vmatprep.subr.bf16.mxu0 %v2600
    %2853 = vmatpush1.bf16.msra.mxu0 %v2599
    %2854 = vmatprep.subr.bf16.mxu0 %v2603
    %2855 = vmatpush1.bf16.msra.mxu0 %v2602
    %2856 = vmatprep.subr.bf16.mxu0 %v2606
    %2857 = vmatpush1.bf16.msra.mxu0 %v2605
    %2858 = vmatprep.subr.bf16.mxu0 %v2609
    %2859 = vmatpush1.bf16.msra.mxu0 %v2608
    %2860 = vmatprep.subr.bf16.mxu0 %v2612
    %2861 = vmatpush1.bf16.msra.mxu0 %v2611
    %2862 = vmatprep.subr.bf16.mxu0 %v2615
    %2863 = vmatpush1.bf16.msra.mxu0 %v2614
    %2864 = vmatprep.subr.bf16.mxu0 %v2618
    %2865 = vmatpush1.bf16.msra.mxu0 %v2617
    %2866 = vmatprep.subr.bf16.mxu0 0
    %2867 = vmatpush1.bf16.msra.mxu0 0
    %2868 = vmatprep.subr.bf16.mxu0 0
    %2869 = vmatpush1.bf16.msra.mxu0 0
    %2870 = vmatprep.subr.bf16.mxu0 0
    %2871 = vmatpush1.bf16.msra.mxu0 0
    %2872 = vmatprep.subr.bf16.mxu0 0
    %2873 = vmatpush1.bf16.msra.mxu0 0
    %2874 = vmatprep.subr.bf16.mxu0 0
    %2875 = vmatpush1.bf16.msra.mxu0 0
    %2876 = vmatprep.subr.bf16.mxu0 0
    %2877 = vmatpush1.bf16.msra.mxu0 0
    %2878 = vmatprep.subr.bf16.mxu0 0
    %2879 = vmatpush1.bf16.msra.mxu0 0
    %2880 = vmatprep.subr.bf16.mxu0 0
    %2881 = vmatpush1.bf16.msra.mxu0 0
    %2882 = vmatprep.mubr.bf16.mxu0 0
    %2883 = vmatmul.mubr.bf16.gmra.mrb[0].mxu0 %v2849
    %v2884 = vpop.f32.mrb[0].mxu0
    %v2885 = vadd.f32 %v2504, %v2884
    %v2886 = vpop.f32.mrb[0].mxu0
    %v2887 = vadd.f32 %v2508, %v2886
    %v2888 = vpop.f32.mrb[0].mxu0
    %v2889 = vpop.f32.mrb[0].mxu0
    %2890 = vdwg.mxu0
    %2891 = vmatprep.subr.bf16.mxu0 0
    %2892 = vmatpush1.bf16.msra.mxu0 %v2598
    %2893 = vmatprep.subr.bf16.mxu0 0
    %2894 = vmatpush1.bf16.msra.mxu0 %v2601
    %2895 = vmatprep.subr.bf16.mxu0 0
    %2896 = vmatpush1.bf16.msra.mxu0 %v2604
    %2897 = vmatprep.subr.bf16.mxu0 0
    %2898 = vmatpush1.bf16.msra.mxu0 %v2607
    %2899 = vmatprep.subr.bf16.mxu0 0
    %2900 = vmatpush1.bf16.msra.mxu0 %v2610
    %2901 = vmatprep.subr.bf16.mxu0 0
    %2902 = vmatpush1.bf16.msra.mxu0 %v2613
    %2903 = vmatprep.subr.bf16.mxu0 0
    %2904 = vmatpush1.bf16.msra.mxu0 %v2616
    %2905 = vmatprep.subr.bf16.mxu0 0
    %2906 = vmatpush1.bf16.msra.mxu0 %v2619
    %2907 = vmatprep.subr.bf16.mxu0 0
    %2908 = vmatpush1.bf16.msra.mxu0 0
    %2909 = vmatprep.subr.bf16.mxu0 0
    %2910 = vmatpush1.bf16.msra.mxu0 0
    %2911 = vmatprep.subr.bf16.mxu0 0
    %2912 = vmatpush1.bf16.msra.mxu0 0
    %2913 = vmatprep.subr.bf16.mxu0 0
    %2914 = vmatpush1.bf16.msra.mxu0 0
    %2915 = vmatprep.subr.bf16.mxu0 0
    %2916 = vmatpush1.bf16.msra.mxu0 0
    %2917 = vmatprep.subr.bf16.mxu0 0
    %2918 = vmatpush1.bf16.msra.mxu0 0
    %2919 = vmatprep.subr.bf16.mxu0 0
    %2920 = vmatpush1.bf16.msra.mxu0 0
    %2921 = vmatprep.subr.bf16.mxu0 0
    %2922 = vmatpush1.bf16.msra.mxu0 0
    %2923 = vmatprep.mubr.bf16.mxu0 0
    %2924 = vmatmul.mubr.bf16.gmra.mrb[0].mxu0 %v2849
    %v2925 = vpop.f32.mrb[0].mxu0
    %v2926 = vadd.f32 %v2512, %v2925
    %v2927 = vpop.f32.mrb[0].mxu0
    %v2928 = vpop.f32.mrb[0].mxu0
    %v2929 = vpop.f32.mrb[0].mxu0
    %2930 = vdwg.mxu0
    %v2931 = vadd.f32 %v2448, %v2885
    %v2932 = vxor.u32 %v2931, 2147483648
    %v2933 = vmul.f32 %v2932, 1.442695
    %v2934 = vpow.pop %v2933
    %v2935 = vadd.f32 %v2934, 1.0
    %v2936 = vrcp.pop %v2935
    %v2937 = vmul.f32 1.0, %v2936
    %v2938 = vadd.f32 %v2449, %v2887
    %v2939 = vxor.u32 %v2938, 2147483648
    %v2940 = vmul.f32 %v2939, 1.442695
    %v2941 = vpow.pop %v2940
    %v2942 = vadd.f32 %v2941, 1.0
    %v2943 = vrcp.pop %v2942
    %v2944 = vmul.f32 1.0, %v2943
    %v2945 = vmul.f32 %v2937, %v2926
    %v2946 = vadd.f32 %v2450, %v2945
    %v2947 = vtanh.pop %v2946
    %v2948 = vsub.f32 1.0, %v2944
    %v2949 = vmul.f32 %v2948, %v2947
    %v2950 = vmul.f32 %v2944, %v2848
    %v2951 = vadd.f32 %v2949, %v2950
    %v2952 = vpack.c.bf16 %v2951, %v2951
    %2953 = vmatprep.subr.bf16.mxu0 %v2597
    %2954 = vmatpush1.bf16.msra.mxu0 %v2596
    %2955 = vmatprep.subr.bf16.mxu0 %v2600
    %2956 = vmatpush1.bf16.msra.mxu0 %v2599
    %2957 = vmatprep.subr.bf16.mxu0 %v2603
    %2958 = vmatpush1.bf16.msra.mxu0 %v2602
    %2959 = vmatprep.subr.bf16.mxu0 %v2606
    %2960 = vmatpush1.bf16.msra.mxu0 %v2605
    %2961 = vmatprep.subr.bf16.mxu0 %v2609
    %2962 = vmatpush1.bf16.msra.mxu0 %v2608
    %2963 = vmatprep.subr.bf16.mxu0 %v2612
    %2964 = vmatpush1.bf16.msra.mxu0 %v2611
    %2965 = vmatprep.subr.bf16.mxu0 %v2615
    %2966 = vmatpush1.bf16.msra.mxu0 %v2614
    %2967 = vmatprep.subr.bf16.mxu0 %v2618
    %2968 = vmatpush1.bf16.msra.mxu0 %v2617
    %2969 = vmatprep.subr.bf16.mxu0 0
    %2970 = vmatpush1.bf16.msra.mxu0 0
    %2971 = vmatprep.subr.bf16.mxu0 0
    %2972 = vmatpush1.bf16.msra.mxu0 0
    %2973 = vmatprep.subr.bf16.mxu0 0
    %2974 = vmatpush1.bf16.msra.mxu0 0
    %2975 = vmatprep.subr.bf16.mxu0 0
    %2976 = vmatpush1.bf16.msra.mxu0 0
    %2977 = vmatprep.subr.bf16.mxu0 0
    %2978 = vmatpush1.bf16.msra.mxu0 0
    %2979 = vmatprep.subr.bf16.mxu0 0
    %2980 = vmatpush1.bf16.msra.mxu0 0
    %2981 = vmatprep.subr.bf16.mxu0 0
    %2982 = vmatpush1.bf16.msra.mxu0 0
    %2983 = vmatprep.subr.bf16.mxu0 0
    %2984 = vmatpush1.bf16.msra.mxu0 0
    %2985 = vmatprep.mubr.bf16.mxu0 0
    %2986 = vmatmul.mubr.bf16.gmra.mrb[0].mxu0 %v2952
    %v2987 = vpop.f32.mrb[0].mxu0
    %v2988 = vadd.f32 %v2504, %v2987
    %v2989 = vpop.f32.mrb[0].mxu0
    %v2990 = vadd.f32 %v2508, %v2989
    %v2991 = vpop.f32.mrb[0].mxu0
    %v2992 = vpop.f32.mrb[0].mxu0
    %2993 = vdwg.mxu0
    %2994 = vmatprep.subr.bf16.mxu0 0
    %2995 = vmatpush1.bf16.msra.mxu0 %v2598
    %2996 = vmatprep.subr.bf16.mxu0 0
    %2997 = vmatpush1.bf16.msra.mxu0 %v2601
    %2998 = vmatprep.subr.bf16.mxu0 0
    %2999 = vmatpush1.bf16.msra.mxu0 %v2604
    %3000 = vmatprep.subr.bf16.mxu0 0
    %3001 = vmatpush1.bf16.msra.mxu0 %v2607
    %3002 = vmatprep.subr.bf16.mxu0 0
    %3003 = vmatpush1.bf16.msra.mxu0 %v2610
    %3004 = vmatprep.subr.bf16.mxu0 0
    %3005 = vmatpush1.bf16.msra.mxu0 %v2613
    %3006 = vmatprep.subr.bf16.mxu0 0
    %3007 = vmatpush1.bf16.msra.mxu0 %v2616
    %3008 = vmatprep.subr.bf16.mxu0 0
    %3009 = vmatpush1.bf16.msra.mxu0 %v2619
    %3010 = vmatprep.subr.bf16.mxu0 0
    %3011 = vmatpush1.bf16.msra.mxu0 0
    %3012 = vmatprep.subr.bf16.mxu0 0
    %3013 = vmatpush1.bf16.msra.mxu0 0
    %3014 = vmatprep.subr.bf16.mxu0 0
    %3015 = vmatpush1.bf16.msra.mxu0 0
    %3016 = vmatprep.subr.bf16.mxu0 0
    %3017 = vmatpush1.bf16.msra.mxu0 0
    %3018 = vmatprep.subr.bf16.mxu0 0
    %3019 = vmatpush1.bf16.msra.mxu0 0
    %3020 = vmatprep.subr.bf16.mxu0 0
    %3021 = vmatpush1.bf16.msra.mxu0 0
    %3022 = vmatprep.subr.bf16.mxu0 0
    %3023 = vmatpush1.bf16.msra.mxu0 0
    %3024 = vmatprep.subr.bf16.mxu0 0
    %3025 = vmatpush1.bf16.msra.mxu0 0
    %3026 = vmatprep.mubr.bf16.mxu0 0
    %3027 = vmatmul.mubr.bf16.gmra.mrb[0].mxu0 %v2952
    %v3028 = vpop.f32.mrb[0].mxu0
    %v3029 = vadd.f32 %v2512, %v3028
    %v3030 = vpop.f32.mrb[0].mxu0
    %v3031 = vpop.f32.mrb[0].mxu0
    %v3032 = vpop.f32.mrb[0].mxu0
    %3033 = vdwg.mxu0
    %v3034 = vadd.f32 %v2451, %v2988
    %v3035 = vxor.u32 %v3034, 2147483648
    %v3036 = vmul.f32 %v3035, 1.442695
    %v3037 = vpow.pop %v3036
    %v3038 = vadd.f32 %v3037, 1.0
    %v3039 = vrcp.pop %v3038
    %v3040 = vmul.f32 1.0, %v3039
    %v3041 = vadd.f32 %v2452, %v2990
    %v3042 = vxor.u32 %v3041, 2147483648
    %v3043 = vmul.f32 %v3042, 1.442695
    %v3044 = vpow.pop %v3043
    %v3045 = vadd.f32 %v3044, 1.0
    %v3046 = vrcp.pop %v3045
    %v3047 = vmul.f32 1.0, %v3046
    %v3048 = vmul.f32 %v3040, %v3029
    %v3049 = vadd.f32 %v2453, %v3048
    %v3050 = vtanh.pop %v3049
    %v3051 = vsub.f32 1.0, %v3047
    %v3052 = vmul.f32 %v3051, %v3050
    %v3053 = vmul.f32 %v3047, %v2951
    %v3054 = vadd.f32 %v3052, %v3053
    %v3055 = vpack.c.bf16 %v3054, %v3054
    %3056 = vmatprep.subr.bf16.mxu0 %v2597
    %3057 = vmatpush1.bf16.msra.mxu0 %v2596
    %3058 = vmatprep.subr.bf16.mxu0 %v2600
    %3059 = vmatpush1.bf16.msra.mxu0 %v2599
    %3060 = vmatprep.subr.bf16.mxu0 %v2603
    %3061 = vmatpush1.bf16.msra.mxu0 %v2602
    %3062 = vmatprep.subr.bf16.mxu0 %v2606
    %3063 = vmatpush1.bf16.msra.mxu0 %v2605
    %3064 = vmatprep.subr.bf16.mxu0 %v2609
    %3065 = vmatpush1.bf16.msra.mxu0 %v2608
    %3066 = vmatprep.subr.bf16.mxu0 %v2612
    %3067 = vmatpush1.bf16.msra.mxu0 %v2611
    %3068 = vmatprep.subr.bf16.mxu0 %v2615
    %3069 = vmatpush1.bf16.msra.mxu0 %v2614
    %3070 = vmatprep.subr.bf16.mxu0 %v2618
    %3071 = vmatpush1.bf16.msra.mxu0 %v2617
    %3072 = vmatprep.subr.bf16.mxu0 0
    %3073 = vmatpush1.bf16.msra.mxu0 0
    %3074 = vmatprep.subr.bf16.mxu0 0
    %3075 = vmatpush1.bf16.msra.mxu0 0
    %3076 = vmatprep.subr.bf16.mxu0 0
    %3077 = vmatpush1.bf16.msra.mxu0 0
    %3078 = vmatprep.subr.bf16.mxu0 0
    %3079 = vmatpush1.bf16.msra.mxu0 0
    %3080 = vmatprep.subr.bf16.mxu0 0
    %3081 = vmatpush1.bf16.msra.mxu0 0
    %3082 = vmatprep.subr.bf16.mxu0 0
    %3083 = vmatpush1.bf16.msra.mxu0 0
    %3084 = vmatprep.subr.bf16.mxu0 0
    %3085 = vmatpush1.bf16.msra.mxu0 0
    %3086 = vmatprep.subr.bf16.mxu0 0
    %3087 = vmatpush1.bf16.msra.mxu0 0
    %3088 = vmatprep.mubr.bf16.mxu0 0
    %3089 = vmatmul.mubr.bf16.gmra.mrb[0].mxu0 %v3055
    %v3090 = vpop.f32.mrb[0].mxu0
    %v3091 = vadd.f32 %v2504, %v3090
    %v3092 = vpop.f32.mrb[0].mxu0
    %v3093 = vadd.f32 %v2508, %v3092
    %v3094 = vpop.f32.mrb[0].mxu0
    %v3095 = vpop.f32.mrb[0].mxu0
    %3096 = vdwg.mxu0
    %3097 = vmatprep.subr.bf16.mxu0 0
    %3098 = vmatpush1.bf16.msra.mxu0 %v2598
    %3099 = vmatprep.subr.bf16.mxu0 0
    %3100 = vmatpush1.bf16.msra.mxu0 %v2601
    %3101 = vmatprep.subr.bf16.mxu0 0
    %3102 = vmatpush1.bf16.msra.mxu0 %v2604
    %3103 = vmatprep.subr.bf16.mxu0 0
    %3104 = vmatpush1.bf16.msra.mxu0 %v2607
    %3105 = vmatprep.subr.bf16.mxu0 0
    %3106 = vmatpush1.bf16.msra.mxu0 %v2610
    %3107 = vmatprep.subr.bf16.mxu0 0
    %3108 = vmatpush1.bf16.msra.mxu0 %v2613
    %3109 = vmatprep.subr.bf16.mxu0 0
    %3110 = vmatpush1.bf16.msra.mxu0 %v2616
    %3111 = vmatprep.subr.bf16.mxu0 0
    %3112 = vmatpush1.bf16.msra.mxu0 %v2619
    %3113 = vmatprep.subr.bf16.mxu0 0
    %3114 = vmatpush1.bf16.msra.mxu0 0
    %3115 = vmatprep.subr.bf16.mxu0 0
    %3116 = vmatpush1.bf16.msra.mxu0 0
    %3117 = vmatprep.subr.bf16.mxu0 0
    %3118 = vmatpush1.bf16.msra.mxu0 0
    %3119 = vmatprep.subr.bf16.mxu0 0
    %3120 = vmatpush1.bf16.msra.mxu0 0
    %3121 = vmatprep.subr.bf16.mxu0 0
    %3122 = vmatpush1.bf16.msra.mxu0 0
    %3123 = vmatprep.subr.bf16.mxu0 0
    %3124 = vmatpush1.bf16.msra.mxu0 0
    %3125 = vmatprep.subr.bf16.mxu0 0
    %3126 = vmatpush1.bf16.msra.mxu0 0
    %3127 = vmatprep.subr.bf16.mxu0 0
    %3128 = vmatpush1.bf16.msra.mxu0 0
    %3129 = vmatprep.mubr.bf16.mxu0 0
    %3130 = vmatmul.mubr.bf16.gmra.mrb[0].mxu0 %v3055
    %v3131 = vpop.f32.mrb[0].mxu0
    %v3132 = vadd.f32 %v2512, %v3131
    %v3133 = vpop.f32.mrb[0].mxu0
    %v3134 = vpop.f32.mrb[0].mxu0
    %v3135 = vpop.f32.mrb[0].mxu0
    %3136 = vdwg.mxu0
    %v3137 = vadd.f32 %v2454, %v3091
    %v3138 = vxor.u32 %v3137, 2147483648
    %v3139 = vmul.f32 %v3138, 1.442695
    %v3140 = vpow.pop %v3139
    %v3141 = vadd.f32 %v3140, 1.0
    %v3142 = vrcp.pop %v3141
    %v3143 = vmul.f32 1.0, %v3142
    %v3144 = vadd.f32 %v2455, %v3093
    %v3145 = vxor.u32 %v3144, 2147483648
    %v3146 = vmul.f32 %v3145, 1.442695
    %v3147 = vpow.pop %v3146
    %v3148 = vadd.f32 %v3147, 1.0
    %v3149 = vrcp.pop %v3148
    %v3150 = vmul.f32 1.0, %v3149
    %v3151 = vmul.f32 %v3143, %v3132
    %v3152 = vadd.f32 %v2456, %v3151
    %v3153 = vtanh.pop %v3152
    %v3154 = vsub.f32 1.0, %v3150
    %v3155 = vmul.f32 %v3154, %v3153
    %v3156 = vmul.f32 %v3150, %v3054
    %v3157 = vadd.f32 %v3155, %v3156
    %v3158 = vpack.c.bf16 %v3157, %v3157
    %3159 = vmatprep.subr.bf16.mxu0 %v2597
    %3160 = vmatpush1.bf16.msra.mxu0 %v2596
    %3161 = vmatprep.subr.bf16.mxu0 %v2600
    %3162 = vmatpush1.bf16.msra.mxu0 %v2599
    %3163 = vmatprep.subr.bf16.mxu0 %v2603
    %3164 = vmatpush1.bf16.msra.mxu0 %v2602
    %3165 = vmatprep.subr.bf16.mxu0 %v2606
    %3166 = vmatpush1.bf16.msra.mxu0 %v2605
    %3167 = vmatprep.subr.bf16.mxu0 %v2609
    %3168 = vmatpush1.bf16.msra.mxu0 %v2608
    %3169 = vmatprep.subr.bf16.mxu0 %v2612
    %3170 = vmatpush1.bf16.msra.mxu0 %v2611
    %3171 = vmatprep.subr.bf16.mxu0 %v2615
    %3172 = vmatpush1.bf16.msra.mxu0 %v2614
    %3173 = vmatprep.subr.bf16.mxu0 %v2618
    %3174 = vmatpush1.bf16.msra.mxu0 %v2617
    %3175 = vmatprep.subr.bf16.mxu0 0
    %3176 = vmatpush1.bf16.msra.mxu0 0
    %3177 = vmatprep.subr.bf16.mxu0 0
    %3178 = vmatpush1.bf16.msra.mxu0 0
    %3179 = vmatprep.subr.bf16.mxu0 0
    %3180 = vmatpush1.bf16.msra.mxu0 0
    %3181 = vmatprep.subr.bf16.mxu0 0
    %3182 = vmatpush1.bf16.msra.mxu0 0
    %3183 = vmatprep.subr.bf16.mxu0 0
    %3184 = vmatpush1.bf16.msra.mxu0 0
    %3185 = vmatprep.subr.bf16.mxu0 0
    %3186 = vmatpush1.bf16.msra.mxu0 0
    %3187 = vmatprep.subr.bf16.mxu0 0
    %3188 = vmatpush1.bf16.msra.mxu0 0
    %3189 = vmatprep.subr.bf16.mxu0 0
    %3190 = vmatpush1.bf16.msra.mxu0 0
    %3191 = vmatprep.mubr.bf16.mxu0 0
    %3192 = vmatmul.mubr.bf16.gmra.mrb[0].mxu0 %v3158
    %v3193 = vpop.f32.mrb[0].mxu0
    %v3194 = vadd.f32 %v2504, %v3193
    %v3195 = vpop.f32.mrb[0].mxu0
    %v3196 = vadd.f32 %v2508, %v3195
    %v3197 = vpop.f32.mrb[0].mxu0
    %v3198 = vpop.f32.mrb[0].mxu0
    %3199 = vdwg.mxu0
    %3200 = vmatprep.subr.bf16.mxu0 0
    %3201 = vmatpush1.bf16.msra.mxu0 %v2598
    %3202 = vmatprep.subr.bf16.mxu0 0
    %3203 = vmatpush1.bf16.msra.mxu0 %v2601
    %3204 = vmatprep.subr.bf16.mxu0 0
    %3205 = vmatpush1.bf16.msra.mxu0 %v2604
    %3206 = vmatprep.subr.bf16.mxu0 0
    %3207 = vmatpush1.bf16.msra.mxu0 %v2607
    %3208 = vmatprep.subr.bf16.mxu0 0
    %3209 = vmatpush1.bf16.msra.mxu0 %v2610
    %3210 = vmatprep.subr.bf16.mxu0 0
    %3211 = vmatpush1.bf16.msra.mxu0 %v2613
    %3212 = vmatprep.subr.bf16.mxu0 0
    %3213 = vmatpush1.bf16.msra.mxu0 %v2616
    %3214 = vmatprep.subr.bf16.mxu0 0
    %3215 = vmatpush1.bf16.msra.mxu0 %v2619
    %3216 = vmatprep.subr.bf16.mxu0 0
    %3217 = vmatpush1.bf16.msra.mxu0 0
    %3218 = vmatprep.subr.bf16.mxu0 0
    %3219 = vmatpush1.bf16.msra.mxu0 0
    %3220 = vmatprep.subr.bf16.mxu0 0
    %3221 = vmatpush1.bf16.msra.mxu0 0
    %3222 = vmatprep.subr.bf16.mxu0 0
    %3223 = vmatpush1.bf16.msra.mxu0 0
    %3224 = vmatprep.subr.bf16.mxu0 0
    %3225 = vmatpush1.bf16.msra.mxu0 0
    %3226 = vmatprep.subr.bf16.mxu0 0
    %3227 = vmatpush1.bf16.msra.mxu0 0
    %3228 = vmatprep.subr.bf16.mxu0 0
    %3229 = vmatpush1.bf16.msra.mxu0 0
    %3230 = vmatprep.subr.bf16.mxu0 0
    %3231 = vmatpush1.bf16.msra.mxu0 0
    %3232 = vmatprep.mubr.bf16.mxu0 0
    %3233 = vmatmul.mubr.bf16.gmra.mrb[0].mxu0 %v3158
    %v3234 = vpop.f32.mrb[0].mxu0
    %v3235 = vadd.f32 %v2512, %v3234
    %v3236 = vpop.f32.mrb[0].mxu0
    %v3237 = vpop.f32.mrb[0].mxu0
    %v3238 = vpop.f32.mrb[0].mxu0
    %3239 = vdwg.mxu0
    %v3240 = vadd.f32 %v2457, %v3194
    %v3241 = vxor.u32 %v3240, 2147483648
    %v3242 = vmul.f32 %v3241, 1.442695
    %v3243 = vpow.pop %v3242
    %v3244 = vadd.f32 %v3243, 1.0
    %v3245 = vrcp.pop %v3244
    %v3246 = vmul.f32 1.0, %v3245
    %v3247 = vadd.f32 %v2458, %v3196
    %v3248 = vxor.u32 %v3247, 2147483648
    %v3249 = vmul.f32 %v3248, 1.442695
    %v3250 = vpow.pop %v3249
    %v3251 = vadd.f32 %v3250, 1.0
    %v3252 = vrcp.pop %v3251
    %v3253 = vmul.f32 1.0, %v3252
    %v3254 = vmul.f32 %v3246, %v3235
    %v3255 = vadd.f32 %v2459, %v3254
    %v3256 = vtanh.pop %v3255
    %v3257 = vsub.f32 1.0, %v3253
    %v3258 = vmul.f32 %v3257, %v3256
    %v3259 = vmul.f32 %v3253, %v3157
    %v3260 = vadd.f32 %v3258, %v3259
    %v3261 = vpack.c.bf16 %v3260, %v3260
    %3262 = vmatprep.subr.bf16.mxu0 %v2597
    %3263 = vmatpush1.bf16.msra.mxu0 %v2596
    %3264 = vmatprep.subr.bf16.mxu0 %v2600
    %3265 = vmatpush1.bf16.msra.mxu0 %v2599
    %3266 = vmatprep.subr.bf16.mxu0 %v2603
    %3267 = vmatpush1.bf16.msra.mxu0 %v2602
    %3268 = vmatprep.subr.bf16.mxu0 %v2606
    %3269 = vmatpush1.bf16.msra.mxu0 %v2605
    %3270 = vmatprep.subr.bf16.mxu0 %v2609
    %3271 = vmatpush1.bf16.msra.mxu0 %v2608
    %3272 = vmatprep.subr.bf16.mxu0 %v2612
    %3273 = vmatpush1.bf16.msra.mxu0 %v2611
    %3274 = vmatprep.subr.bf16.mxu0 %v2615
    %3275 = vmatpush1.bf16.msra.mxu0 %v2614
    %3276 = vmatprep.subr.bf16.mxu0 %v2618
    %3277 = vmatpush1.bf16.msra.mxu0 %v2617
    %3278 = vmatprep.subr.bf16.mxu0 0
    %3279 = vmatpush1.bf16.msra.mxu0 0
    %3280 = vmatprep.subr.bf16.mxu0 0
    %3281 = vmatpush1.bf16.msra.mxu0 0
    %3282 = vmatprep.subr.bf16.mxu0 0
    %3283 = vmatpush1.bf16.msra.mxu0 0
    %3284 = vmatprep.subr.bf16.mxu0 0
    %3285 = vmatpush1.bf16.msra.mxu0 0
    %3286 = vmatprep.subr.bf16.mxu0 0
    %3287 = vmatpush1.bf16.msra.mxu0 0
    %3288 = vmatprep.subr.bf16.mxu0 0
    %3289 = vmatpush1.bf16.msra.mxu0 0
    %3290 = vmatprep.subr.bf16.mxu0 0
    %3291 = vmatpush1.bf16.msra.mxu0 0
    %3292 = vmatprep.subr.bf16.mxu0 0
    %3293 = vmatpush1.bf16.msra.mxu0 0
    %3294 = vmatprep.mubr.bf16.mxu0 0
    %3295 = vmatmul.mubr.bf16.gmra.mrb[0].mxu0 %v3261
    %v3296 = vpop.f32.mrb[0].mxu0
    %v3297 = vadd.f32 %v2504, %v3296
    %v3298 = vpop.f32.mrb[0].mxu0
    %v3299 = vadd.f32 %v2508, %v3298
    %v3300 = vpop.f32.mrb[0].mxu0
    %v3301 = vpop.f32.mrb[0].mxu0
    %3302 = vdwg.mxu0
    %3303 = vmatprep.subr.bf16.mxu0 0
    %3304 = vmatpush1.bf16.msra.mxu0 %v2598
    %3305 = vmatprep.subr.bf16.mxu0 0
    %3306 = vmatpush1.bf16.msra.mxu0 %v2601
    %3307 = vmatprep.subr.bf16.mxu0 0
    %3308 = vmatpush1.bf16.msra.mxu0 %v2604
    %3309 = vmatprep.subr.bf16.mxu0 0
    %3310 = vmatpush1.bf16.msra.mxu0 %v2607
    %3311 = vmatprep.subr.bf16.mxu0 0
    %3312 = vmatpush1.bf16.msra.mxu0 %v2610
    %3313 = vmatprep.subr.bf16.mxu0 0
    %3314 = vmatpush1.bf16.msra.mxu0 %v2613
    %3315 = vmatprep.subr.bf16.mxu0 0
    %3316 = vmatpush1.bf16.msra.mxu0 %v2616
    %3317 = vmatprep.subr.bf16.mxu0 0
    %3318 = vmatpush1.bf16.msra.mxu0 %v2619
    %3319 = vmatprep.subr.bf16.mxu0 0
    %3320 = vmatpush1.bf16.msra.mxu0 0
    %3321 = vmatprep.subr.bf16.mxu0 0
    %3322 = vmatpush1.bf16.msra.mxu0 0
    %3323 = vmatprep.subr.bf16.mxu0 0
    %3324 = vmatpush1.bf16.msra.mxu0 0
    %3325 = vmatprep.subr.bf16.mxu0 0
    %3326 = vmatpush1.bf16.msra.mxu0 0
    %3327 = vmatprep.subr.bf16.mxu0 0
    %3328 = vmatpush1.bf16.msra.mxu0 0
    %3329 = vmatprep.subr.bf16.mxu0 0
    %3330 = vmatpush1.bf16.msra.mxu0 0
    %3331 = vmatprep.subr.bf16.mxu0 0
    %3332 = vmatpush1.bf16.msra.mxu0 0
    %3333 = vmatprep.subr.bf16.mxu0 0
    %3334 = vmatpush1.bf16.msra.mxu0 0
    %3335 = vmatprep.mubr.bf16.mxu0 0
    %3336 = vmatmul.mubr.bf16.gmra.mrb[0].mxu0 %v3261
    %v3337 = vpop.f32.mrb[0].mxu0
    %v3338 = vadd.f32 %v2512, %v3337
    %v3339 = vpop.f32.mrb[0].mxu0
    %v3340 = vpop.f32.mrb[0].mxu0
    %v3341 = vpop.f32.mrb[0].mxu0
    %3342 = vdwg.mxu0
    %v3343 = vadd.f32 %v2460, %v3297
    %v3344 = vxor.u32 %v3343, 2147483648
    %v3345 = vmul.f32 %v3344, 1.442695
    %v3346 = vpow.pop %v3345
    %v3347 = vadd.f32 %v3346, 1.0
    %v3348 = vrcp.pop %v3347
    %v3349 = vmul.f32 1.0, %v3348
    %v3350 = vadd.f32 %v2461, %v3299
    %v3351 = vxor.u32 %v3350, 2147483648
    %v3352 = vmul.f32 %v3351, 1.442695
    %v3353 = vpow.pop %v3352
    %v3354 = vadd.f32 %v3353, 1.0
    %v3355 = vrcp.pop %v3354
    %v3356 = vmul.f32 1.0, %v3355
    %v3357 = vmul.f32 %v3349, %v3338
    %v3358 = vadd.f32 %v2462, %v3357
    %v3359 = vtanh.pop %v3358
    %v3360 = vsub.f32 1.0, %v3356
    %v3361 = vmul.f32 %v3360, %v3359
    %v3362 = vmul.f32 %v3356, %v3260
    %v3363 = vadd.f32 %v3361, %v3362
    %v3364 = vpack.c.bf16 %v3363, %v3363
    %3365 = vmatprep.subr.bf16.mxu0 %v2597
    %3366 = vmatpush1.bf16.msra.mxu0 %v2596
    %3367 = vmatprep.subr.bf16.mxu0 %v2600
    %3368 = vmatpush1.bf16.msra.mxu0 %v2599
    %3369 = vmatprep.subr.bf16.mxu0 %v2603
    %3370 = vmatpush1.bf16.msra.mxu0 %v2602
    %3371 = vmatprep.subr.bf16.mxu0 %v2606
    %3372 = vmatpush1.bf16.msra.mxu0 %v2605
    %3373 = vmatprep.subr.bf16.mxu0 %v2609
    %3374 = vmatpush1.bf16.msra.mxu0 %v2608
    %3375 = vmatprep.subr.bf16.mxu0 %v2612
    %3376 = vmatpush1.bf16.msra.mxu0 %v2611
    %3377 = vmatprep.subr.bf16.mxu0 %v2615
    %3378 = vmatpush1.bf16.msra.mxu0 %v2614
    %3379 = vmatprep.subr.bf16.mxu0 %v2618
    %3380 = vmatpush1.bf16.msra.mxu0 %v2617
    %3381 = vmatprep.subr.bf16.mxu0 0
    %3382 = vmatpush1.bf16.msra.mxu0 0
    %3383 = vmatprep.subr.bf16.mxu0 0
    %3384 = vmatpush1.bf16.msra.mxu0 0
    %3385 = vmatprep.subr.bf16.mxu0 0
    %3386 = vmatpush1.bf16.msra.mxu0 0
    %3387 = vmatprep.subr.bf16.mxu0 0
    %3388 = vmatpush1.bf16.msra.mxu0 0
    %3389 = vmatprep.subr.bf16.mxu0 0
    %3390 = vmatpush1.bf16.msra.mxu0 0
    %3391 = vmatprep.subr.bf16.mxu0 0
    %3392 = vmatpush1.bf16.msra.mxu0 0
    %3393 = vmatprep.subr.bf16.mxu0 0
    %3394 = vmatpush1.bf16.msra.mxu0 0
    %3395 = vmatprep.subr.bf16.mxu0 0
    %3396 = vmatpush1.bf16.msra.mxu0 0
    %3397 = vmatprep.mubr.bf16.mxu0 0
    %3398 = vmatmul.mubr.bf16.gmra.mrb[0].mxu0 %v3364
    %v3399 = vpop.f32.mrb[0].mxu0
    %v3400 = vadd.f32 %v2504, %v3399
    %v3401 = vpop.f32.mrb[0].mxu0
    %v3402 = vadd.f32 %v2508, %v3401
    %v3403 = vpop.f32.mrb[0].mxu0
    %v3404 = vpop.f32.mrb[0].mxu0
    %3405 = vdwg.mxu0
    %3406 = vmatprep.subr.bf16.mxu0 0
    %3407 = vmatpush1.bf16.msra.mxu0 %v2598
    %3408 = vmatprep.subr.bf16.mxu0 0
    %3409 = vmatpush1.bf16.msra.mxu0 %v2601
    %3410 = vmatprep.subr.bf16.mxu0 0
    %3411 = vmatpush1.bf16.msra.mxu0 %v2604
    %3412 = vmatprep.subr.bf16.mxu0 0
    %3413 = vmatpush1.bf16.msra.mxu0 %v2607
    %3414 = vmatprep.subr.bf16.mxu0 0
    %3415 = vmatpush1.bf16.msra.mxu0 %v2610
    %3416 = vmatprep.subr.bf16.mxu0 0
    %3417 = vmatpush1.bf16.msra.mxu0 %v2613
    %3418 = vmatprep.subr.bf16.mxu0 0
    %3419 = vmatpush1.bf16.msra.mxu0 %v2616
    %3420 = vmatprep.subr.bf16.mxu0 0
    %3421 = vmatpush1.bf16.msra.mxu0 %v2619
    %3422 = vmatprep.subr.bf16.mxu0 0
    %3423 = vmatpush1.bf16.msra.mxu0 0
    %3424 = vmatprep.subr.bf16.mxu0 0
    %3425 = vmatpush1.bf16.msra.mxu0 0
    %3426 = vmatprep.subr.bf16.mxu0 0
    %3427 = vmatpush1.bf16.msra.mxu0 0
    %3428 = vmatprep.subr.bf16.mxu0 0
    %3429 = vmatpush1.bf16.msra.mxu0 0
    %3430 = vmatprep.subr.bf16.mxu0 0
    %3431 = vmatpush1.bf16.msra.mxu0 0
    %3432 = vmatprep.subr.bf16.mxu0 0
    %3433 = vmatpush1.bf16.msra.mxu0 0
    %3434 = vmatprep.subr.bf16.mxu0 0
    %3435 = vmatpush1.bf16.msra.mxu0 0
    %3436 = vmatprep.subr.bf16.mxu0 0
    %3437 = vmatpush1.bf16.msra.mxu0 0
    %3438 = vmatprep.mubr.bf16.mxu0 0
    %3439 = vmatmul.mubr.bf16.gmra.mrb[0].mxu0 %v3364
    %v3440 = vpop.f32.mrb[0].mxu0
    %v3441 = vadd.f32 %v2512, %v3440
    %v3442 = vpop.f32.mrb[0].mxu0
    %v3443 = vpop.f32.mrb[0].mxu0
    %v3444 = vpop.f32.mrb[0].mxu0
    %3445 = vdwg.mxu0
    %v3446 = vadd.f32 %v2463, %v3400
    %v3447 = vxor.u32 %v3446, 2147483648
    %v3448 = vmul.f32 %v3447, 1.442695
    %v3449 = vpow.pop %v3448
    %v3450 = vadd.f32 %v3449, 1.0
    %v3451 = vrcp.pop %v3450
    %v3452 = vmul.f32 1.0, %v3451
    %v3453 = vadd.f32 %v2464, %v3402
    %v3454 = vxor.u32 %v3453, 2147483648
    %v3455 = vmul.f32 %v3454, 1.442695
    %v3456 = vpow.pop %v3455
    %v3457 = vadd.f32 %v3456, 1.0
    %v3458 = vrcp.pop %v3457
    %v3459 = vmul.f32 1.0, %v3458
    %v3460 = vmul.f32 %v3452, %v3441
    %v3461 = vadd.f32 %v2465, %v3460
    %v3462 = vtanh.pop %v3461
    %v3463 = vsub.f32 1.0, %v3459
    %v3464 = vmul.f32 %v3463, %v3462
    %v3465 = vmul.f32 %v3459, %v3363
    %v3466 = vadd.f32 %v3464, %v3465
    %v3467 = vpack.c.bf16 %v2848, %v2745
    %v3468 = vpack.c.bf16 %v3054, %v2951
    %v3469 = vpack.c.bf16 %v3260, %v3157
    %v3470 = vpack.c.bf16 %v3466, %v3363
    %3471 = vmatprep.subr.bf16.mxu0 0
    %3472 = vmatpush1.bf16.xpose.msra.mxu0 %v2123
    %3473 = vmatprep.subr.bf16.mxu0 0
    %3474 = vmatpush1.bf16.xpose.msra.mxu0 %v2124
    %3475 = vmatprep.subr.bf16.mxu0 0
    %3476 = vmatpush1.bf16.xpose.msra.mxu0 %v2125
    %3477 = vmatprep.subr.bf16.mxu0 0
    %3478 = vmatpush1.bf16.xpose.msra.mxu0 %v2126
    %3479 = vmatprep.subr.bf16.mxu0 0
    %3480 = vmatpush1.bf16.xpose.msra.mxu0 0
    %3481 = vmatprep.subr.bf16.mxu0 0
    %3482 = vmatpush1.bf16.xpose.msra.mxu0 0
    %3483 = vmatprep.subr.bf16.mxu0 0
    %3484 = vmatpush1.bf16.xpose.msra.mxu0 0
    %3485 = vmatprep.subr.bf16.mxu0 0
    %3486 = vmatpush1.bf16.xpose.msra.mxu0 0
    %3487 = vmatprep.subr.bf16.mxu0 0
    %3488 = vmatpush1.bf16.xpose.msra.mxu0 0
    %3489 = vmatprep.subr.bf16.mxu0 0
    %3490 = vmatpush1.bf16.xpose.msra.mxu0 0
    %3491 = vmatprep.subr.bf16.mxu0 0
    %3492 = vmatpush1.bf16.xpose.msra.mxu0 0
    %3493 = vmatprep.subr.bf16.mxu0 0
    %3494 = vmatpush1.bf16.xpose.msra.mxu0 0
    %3495 = vmatprep.subr.bf16.mxu0 0
    %3496 = vmatpush1.bf16.xpose.msra.mxu0 0
    %3497 = vmatprep.subr.bf16.mxu0 0
    %3498 = vmatpush1.bf16.xpose.msra.mxu0 0
    %3499 = vmatprep.subr.bf16.mxu0 0
    %3500 = vmatpush1.bf16.xpose.msra.mxu0 0
    %3501 = vmatprep.subr.bf16.mxu0 0
    %3502 = vmatpush1.bf16.xpose.msra.mxu0 0
    %3503 = vmatprep.mubr.bf16.mxu0 0
    %3504 = vmatmul.mubr.bf16.gmra.mrb[0].mxu0 %v3467
    %v3505 = vpop.f32.mrb[0].mxu0
    %v3506 = vadd.f32 0.0, %v3505
    %v3507 = vpop.f32.mrb[0].mxu0
    %v3508 = vpop.f32.mrb[0].mxu0
    %v3509 = vadd.f32 0.0, %v3508
    %v3510 = vpop.f32.mrb[0].mxu0
    %3511 = vmatprep.mubr.bf16.mxu0 0
    %3512 = vmatmul.mubr.bf16.gmra.mrb[0].mxu0 %v3468
    %v3513 = vpop.f32.mrb[0].mxu0
    %v3514 = vadd.f32 0.0, %v3513
    %v3515 = vpop.f32.mrb[0].mxu0
    %v3516 = vpop.f32.mrb[0].mxu0
    %v3517 = vadd.f32 0.0, %v3516
    %v3518 = vpop.f32.mrb[0].mxu0
    %3519 = vmatprep.mubr.bf16.mxu0 0
    %3520 = vmatmul.mubr.bf16.gmra.mrb[0].mxu0 %v3469
    %v3521 = vpop.f32.mrb[0].mxu0
    %v3522 = vadd.f32 0.0, %v3521
    %v3523 = vpop.f32.mrb[0].mxu0
    %v3524 = vpop.f32.mrb[0].mxu0
    %v3525 = vadd.f32 0.0, %v3524
    %v3526 = vpop.f32.mrb[0].mxu0
    %3527 = vmatprep.mubr.bf16.mxu0 0
    %3528 = vmatmul.mubr.bf16.gmra.mrb[0].mxu0 %v3470
    %v3529 = vpop.f32.mrb[0].mxu0
    %v3530 = vadd.f32 0.0, %v3529
    %v3531 = vpop.f32.mrb[0].mxu0
    %v3532 = vpop.f32.mrb[0].mxu0
    %v3533 = vadd.f32 0.0, %v3532
    %v3534 = vpop.f32.mrb[0].mxu0
    %3535 = vdwg.mxu0
    %v3536 = vlaneseq
    %v3537 = vshrl.u32 %v3536, 7
    %v3538 = vadd.s32 %v3537, 8
    %v3539 = vadd.s32 %v3537, 16
    %v3540 = vadd.s32 %v3537, 24
    %v3541 = vadd.s32 %v3537, 32
    %v3542 = vadd.s32 %v3537, 40
    %v3543 = vadd.s32 %v3537, 48
    %v3544 = vadd.s32 %v3537, 56
    %v3545 = vand.u32 %v3537, 7
    %v3546 = vand.u32 %v3538, 7
    %v3547 = vand.u32 %v3539, 7
    %v3548 = vand.u32 %v3540, 7
    %v3549 = vand.u32 %v3541, 7
    %v3550 = vand.u32 %v3542, 7
    %v3551 = vand.u32 %v3543, 7
    %v3552 = vand.u32 %v3544, 7
    %v3553 = vand.u32 %v159, 7
    %vm3554 = vcmp.eq.s32.totalorder %v3545, %v3553
    %vm3555 = vcmp.eq.s32.totalorder %v3546, %v3553
    %vm3556 = vcmp.eq.s32.totalorder %v3547, %v3553
    %vm3557 = vcmp.eq.s32.totalorder %v3548, %v3553
    %vm3558 = vcmp.eq.s32.totalorder %v3549, %v3553
    %vm3559 = vcmp.eq.s32.totalorder %v3550, %v3553
    %vm3560 = vcmp.eq.s32.totalorder %v3551, %v3553
    %vm3561 = vcmp.eq.s32.totalorder %v3552, %v3553
    %v3562 = vsel %vm3554, %v3506, -1e+30
    %v3563 = vsel %vm3555, %v3509, -1e+30
    %v3564 = vsel %vm3556, %v3514, -1e+30
    %v3565 = vsel %vm3557, %v3517, -1e+30
    %v3566 = vsel %vm3558, %v3522, -1e+30
    %v3567 = vsel %vm3559, %v3525, -1e+30
    %v3568 = vsel %vm3560, %v3530, -1e+30
    %v3569 = vsel %vm3561, %v3533, -1e+30
    %vm3570 = vcmask 523264
    %v3571 = vsel %vm3570, %v3562, -inf
    %3572 = vmax.xlane.f32.xlu0 %v3571
    %v3573 = vpop.xlane.xlu0 %3572
    %v3574 = vsel %vm3570, %v3563, -inf
    %3575 = vmax.xlane.f32.xlu0 %v3574
    %v3576 = vpop.xlane.xlu0 %3575
    %v3577 = vsel %vm3570, %v3564, -inf
    %3578 = vmax.xlane.f32.xlu0 %v3577
    %v3579 = vpop.xlane.xlu0 %3578
    %v3580 = vsel %vm3570, %v3565, -inf
    %3581 = vmax.xlane.f32.xlu0 %v3580
    %v3582 = vpop.xlane.xlu0 %3581
    %v3583 = vsel %vm3570, %v3566, -inf
    %3584 = vmax.xlane.f32.xlu0 %v3583
    %v3585 = vpop.xlane.xlu0 %3584
    %v3586 = vsel %vm3570, %v3567, -inf
    %3587 = vmax.xlane.f32.xlu0 %v3586
    %v3588 = vpop.xlane.xlu0 %3587
    %v3589 = vsel %vm3570, %v3568, -inf
    %3590 = vmax.xlane.f32.xlu0 %v3589
    %v3591 = vpop.xlane.xlu0 %3590
    %v3592 = vsel %vm3570, %v3569, -inf
    %3593 = vmax.xlane.f32.xlu0 %v3592
    %v3594 = vpop.xlane.xlu0 %3593
    %v3595 = vsub.f32 %v3562, %v3573
    %v3596 = vsub.f32 %v3563, %v3576
    %v3597 = vsub.f32 %v3564, %v3579
    %v3598 = vsub.f32 %v3565, %v3582
    %v3599 = vsub.f32 %v3566, %v3585
    %v3600 = vsub.f32 %v3567, %v3588
    %v3601 = vsub.f32 %v3568, %v3591
    %v3602 = vsub.f32 %v3569, %v3594
    %v3603 = vmul.f32 %v3595, 1.442695
    %v3604 = vpow.pop %v3603
    %v3605 = vmul.f32 %v3596, 1.442695
    %v3606 = vpow.pop %v3605
    %v3607 = vmul.f32 %v3597, 1.442695
    %v3608 = vpow.pop %v3607
    %v3609 = vmul.f32 %v3598, 1.442695
    %v3610 = vpow.pop %v3609
    %v3611 = vmul.f32 %v3599, 1.442695
    %v3612 = vpow.pop %v3611
    %v3613 = vmul.f32 %v3600, 1.442695
    %v3614 = vpow.pop %v3613
    %v3615 = vmul.f32 %v3601, 1.442695
    %v3616 = vpow.pop %v3615
    %v3617 = vmul.f32 %v3602, 1.442695
    %v3618 = vpow.pop %v3617
    %v3619 = vsel %vm3570, %v3604, 0.0
    %3620 = vadd.xlane.f32.xlu0 %v3619
    %v3621 = vpop.xlane.xlu0 %3620
    %v3622 = vsel %vm3570, %v3606, 0.0
    %3623 = vadd.xlane.f32.xlu0 %v3622
    %v3624 = vpop.xlane.xlu0 %3623
    %v3625 = vsel %vm3570, %v3608, 0.0
    %3626 = vadd.xlane.f32.xlu0 %v3625
    %v3627 = vpop.xlane.xlu0 %3626
    %v3628 = vsel %vm3570, %v3610, 0.0
    %3629 = vadd.xlane.f32.xlu0 %v3628
    %v3630 = vpop.xlane.xlu0 %3629
    %v3631 = vsel %vm3570, %v3612, 0.0
    %3632 = vadd.xlane.f32.xlu0 %v3631
    %v3633 = vpop.xlane.xlu0 %3632
    %v3634 = vsel %vm3570, %v3614, 0.0
    %3635 = vadd.xlane.f32.xlu0 %v3634
    %v3636 = vpop.xlane.xlu0 %3635
    %v3637 = vsel %vm3570, %v3616, 0.0
    %3638 = vadd.xlane.f32.xlu0 %v3637
    %v3639 = vpop.xlane.xlu0 %3638
    %v3640 = vsel %vm3570, %v3618, 0.0
    %3641 = vadd.xlane.f32.xlu0 %v3640
    %v3642 = vpop.xlane.xlu0 %3641
    %v3643 = vrcp.pop %v3621
    %v3644 = vrcp.pop %v3624
    %v3645 = vrcp.pop %v3627
    %v3646 = vrcp.pop %v3630
    %v3647 = vrcp.pop %v3633
    %v3648 = vrcp.pop %v3636
    %v3649 = vrcp.pop %v3639
    %v3650 = vrcp.pop %v3642
    %v3651 = vmul.f32 %v3604, %v3643
    %v3652 = vmul.f32 %v3606, %v3644
    %v3653 = vmul.f32 %v3608, %v3645
    %v3654 = vmul.f32 %v3610, %v3646
    %v3655 = vmul.f32 %v3612, %v3647
    %v3656 = vmul.f32 %v3614, %v3648
    %v3657 = vmul.f32 %v3616, %v3649
    %v3658 = vmul.f32 %v3618, %v3650
    %v3659 = vpack.c.bf16 %v3652, %v3651
    %v3660 = vpack.c.bf16 %v3654, %v3653
    %v3661 = vpack.c.bf16 %v3656, %v3655
    %v3662 = vpack.c.bf16 %v3658, %v3657
    %v3664 = vsel %vm3570, %v3659, 0
    %v3667 = vsel %vm3570, %v3660, 0
    %v3670 = vsel %vm3570, %v3661, 0
    %v3673 = vsel %vm3570, %v3662, 0
    %3675 = vmatprep.subr.bf16.mxu0 0
    %3676 = vmatpush1.bf16.msra.mxu0 %v2123
    %3677 = vmatprep.subr.bf16.mxu0 0
    %3678 = vmatpush1.bf16.msra.mxu0 %v2124
    %3679 = vmatprep.subr.bf16.mxu0 0
    %3680 = vmatpush1.bf16.msra.mxu0 %v2125
    %3681 = vmatprep.subr.bf16.mxu0 0
    %3682 = vmatpush1.bf16.msra.mxu0 %v2126
    %3683 = vmatprep.subr.bf16.mxu0 0
    %3684 = vmatpush1.bf16.msra.mxu0 0
    %3685 = vmatprep.subr.bf16.mxu0 0
    %3686 = vmatpush1.bf16.msra.mxu0 0
    %3687 = vmatprep.subr.bf16.mxu0 0
    %3688 = vmatpush1.bf16.msra.mxu0 0
    %3689 = vmatprep.subr.bf16.mxu0 0
    %3690 = vmatpush1.bf16.msra.mxu0 0
    %3691 = vmatprep.subr.bf16.mxu0 0
    %3692 = vmatpush1.bf16.msra.mxu0 0
    %3693 = vmatprep.subr.bf16.mxu0 0
    %3694 = vmatpush1.bf16.msra.mxu0 0
    %3695 = vmatprep.subr.bf16.mxu0 0
    %3696 = vmatpush1.bf16.msra.mxu0 0
    %3697 = vmatprep.subr.bf16.mxu0 0
    %3698 = vmatpush1.bf16.msra.mxu0 0
    %3699 = vmatprep.subr.bf16.mxu0 0
    %3700 = vmatpush1.bf16.msra.mxu0 0
    %3701 = vmatprep.subr.bf16.mxu0 0
    %3702 = vmatpush1.bf16.msra.mxu0 0
    %3703 = vmatprep.subr.bf16.mxu0 0
    %3704 = vmatpush1.bf16.msra.mxu0 0
    %3705 = vmatprep.subr.bf16.mxu0 0
    %3706 = vmatpush1.bf16.msra.mxu0 0
    %3707 = vmatprep.mubr.bf16.mxu0 0
    %3708 = vmatmul.mubr.bf16.gmra.mrb[0].mxu0 %v3664
    %v3709 = vpop.f32.mrb[0].mxu0
    %v3710 = vadd.f32 0.0, %v3709
    %v3711 = vpop.f32.mrb[0].mxu0
    %v3712 = vpop.f32.mrb[0].mxu0
    %v3713 = vadd.f32 0.0, %v3712
    %v3714 = vpop.f32.mrb[0].mxu0
    %3715 = vmatprep.mubr.bf16.mxu0 0
    %3716 = vmatmul.mubr.bf16.gmra.mrb[0].mxu0 %v3667
    %v3717 = vpop.f32.mrb[0].mxu0
    %v3718 = vadd.f32 0.0, %v3717
    %v3719 = vpop.f32.mrb[0].mxu0
    %v3720 = vpop.f32.mrb[0].mxu0
    %v3721 = vadd.f32 0.0, %v3720
    %v3722 = vpop.f32.mrb[0].mxu0
    %3723 = vmatprep.mubr.bf16.mxu0 0
    %3724 = vmatmul.mubr.bf16.gmra.mrb[0].mxu0 %v3670
    %v3725 = vpop.f32.mrb[0].mxu0
    %v3726 = vadd.f32 0.0, %v3725
    %v3727 = vpop.f32.mrb[0].mxu0
    %v3728 = vpop.f32.mrb[0].mxu0
    %v3729 = vadd.f32 0.0, %v3728
    %v3730 = vpop.f32.mrb[0].mxu0
    %3731 = vmatprep.mubr.bf16.mxu0 0
    %3732 = vmatmul.mubr.bf16.gmra.mrb[0].mxu0 %v3673
    %v3733 = vpop.f32.mrb[0].mxu0
    %v3734 = vadd.f32 0.0, %v3733
    %v3735 = vpop.f32.mrb[0].mxu0
    %v3736 = vpop.f32.mrb[0].mxu0
    %v3737 = vadd.f32 0.0, %v3736
    %v3738 = vpop.f32.mrb[0].mxu0
    %3739 = vdwg.mxu0
    %v3740 = vpack.c.bf16 %v3713, %v3710
    %v3741 = vpack.c.bf16 %v3721, %v3718
    %v3742 = vpack.c.bf16 %v3729, %v3726
    %v3743 = vpack.c.bf16 %v3737, %v3734
    %v3744 = vld [vmem:[#allocation13] sm:$0xf]
    %v3745 = vld [vmem:[#allocation13 + $0x4] sm:$0xf]
    %v3746 = vld [vmem:[#allocation13 + $0x8] sm:$0xf]
    %v3747 = vld [vmem:[#allocation13 + $0xc] sm:$0xf]
    %v3748 = vld [vmem:[#allocation13 + $0x10] sm:$0xf]
    %v3749 = vld [vmem:[#allocation13 + $0x14] sm:$0xf]
    %v3750 = vld [vmem:[#allocation13 + $0x18] sm:$0xf]
    %v3751 = vld [vmem:[#allocation13 + $0x1c] sm:$0xf]
    %v3752 = vld [vmem:[#allocation13 + $0x20] sm:$0xf]
    %v3753 = vld [vmem:[#allocation13 + $0x24] sm:$0xf]
    %v3754 = vld [vmem:[#allocation13 + $0x28] sm:$0xf]
    %v3755 = vld [vmem:[#allocation13 + $0x2c] sm:$0xf]
    %v3756 = vld [vmem:[#allocation13 + $0x30] sm:$0xf]
    %v3757 = vld [vmem:[#allocation13 + $0x34] sm:$0xf]
    %v3758 = vld [vmem:[#allocation13 + $0x38] sm:$0xf]
    %v3759 = vld [vmem:[#allocation13 + $0x3c] sm:$0xf]
    %v3760 = vld [vmem:[#allocation13 + $0x40] sm:$0xf]
    %v3761 = vld [vmem:[#allocation13 + $0x44] sm:$0xf]
    %v3762 = vld [vmem:[#allocation13 + $0x48] sm:$0xf]
    %v3763 = vld [vmem:[#allocation13 + $0x4c] sm:$0xf]
    %v3764 = vld [vmem:[#allocation13 + $0x50] sm:$0xf]
    %v3765 = vld [vmem:[#allocation13 + $0x54] sm:$0xf]
    %v3766 = vld [vmem:[#allocation13 + $0x58] sm:$0xf]
    %v3767 = vld [vmem:[#allocation13 + $0x5c] sm:$0xf]
    %v3768 = vld [vmem:[#allocation13 + $0x60] sm:$0xf]
    %v3769 = vld [vmem:[#allocation13 + $0x64] sm:$0xf]
    %v3770 = vld [vmem:[#allocation13 + $0x68] sm:$0xf]
    %v3771 = vld [vmem:[#allocation13 + $0x6c] sm:$0xf]
    %v3772 = vld [vmem:[#allocation13 + $0x70] sm:$0xf]
    %v3773 = vld [vmem:[#allocation13 + $0x74] sm:$0xf]
    %v3774 = vld [vmem:[#allocation13 + $0x78] sm:$0xf]
    %v3775 = vld [vmem:[#allocation13 + $0x7c] sm:$0xf]
    %v3776 = vld [vmem:[%s13] sm:$0x1]
    %v3778 = vlaneseq
    %v3779 = vshrl.u32 %v3778, 7
    %v3780 = vsub.s32 0, %v3779
    %v3781 = vrot.slane %v3776, %v3780
    %v3815 = vunpack.c.l.b16 %v3744
    %v3816 = vunpack.c.l.b16 %v3745
    %v3817 = vunpack.c.l.b16 %v3746
    %v3818 = vunpack.c.l.b16 %v3747
    %v3819 = vunpack.c.l.b16 %v3748
    %v3820 = vunpack.c.l.b16 %v3749
    %v3821 = vunpack.c.l.b16 %v3750
    %v3822 = vunpack.c.l.b16 %v3751
    %v3823 = vunpack.c.l.b16 %v3752
    %v3824 = vunpack.c.l.b16 %v3753
    %v3825 = vunpack.c.l.b16 %v3754
    %v3826 = vunpack.c.l.b16 %v3755
    %v3827 = vunpack.c.l.b16 %v3756
    %v3828 = vunpack.c.l.b16 %v3757
    %v3829 = vunpack.c.l.b16 %v3758
    %v3830 = vunpack.c.l.b16 %v3759
    %v3831 = vunpack.c.l.b16 %v3760
    %v3832 = vunpack.c.l.b16 %v3761
    %v3833 = vunpack.c.l.b16 %v3762
    %v3834 = vunpack.c.l.b16 %v3763
    %v3835 = vunpack.c.l.b16 %v3764
    %v3836 = vunpack.c.l.b16 %v3765
    %v3837 = vunpack.c.l.b16 %v3766
    %v3838 = vunpack.c.l.b16 %v3767
    %v3839 = vunpack.c.l.b16 %v3768
    %v3840 = vunpack.c.l.b16 %v3769
    %v3841 = vunpack.c.l.b16 %v3770
    %v3842 = vunpack.c.l.b16 %v3771
    %v3843 = vunpack.c.l.b16 %v3772
    %v3844 = vunpack.c.l.b16 %v3773
    %v3845 = vunpack.c.l.b16 %v3774
    %v3846 = vunpack.c.l.b16 %v3775
    %v3847 = vpack.c.b16 %v3816, %v3815
    %v3848 = vpack.c.b16 %v3818, %v3817
    %v3849 = vpack.c.b16 %v3820, %v3819
    %v3850 = vpack.c.b16 %v3822, %v3821
    %v3851 = vpack.c.b16 %v3824, %v3823
    %v3852 = vpack.c.b16 %v3826, %v3825
    %v3853 = vpack.c.b16 %v3828, %v3827
    %v3854 = vpack.c.b16 %v3830, %v3829
    %v3855 = vpack.c.b16 %v3832, %v3831
    %v3856 = vpack.c.b16 %v3834, %v3833
    %v3857 = vpack.c.b16 %v3836, %v3835
    %v3858 = vpack.c.b16 %v3838, %v3837
    %v3859 = vpack.c.b16 %v3840, %v3839
    %v3860 = vpack.c.b16 %v3842, %v3841
    %v3861 = vpack.c.b16 %v3844, %v3843
    %v3862 = vpack.c.b16 %v3846, %v3845
    %3879 = vmatprep.subr.bf16.mxu0 0
    %3880 = vmatpush1.bf16.msra.mxu0 %v3847
    %3881 = vmatprep.subr.bf16.mxu0 0
    %3882 = vmatpush1.bf16.msra.mxu0 %v3848
    %3883 = vmatprep.subr.bf16.mxu0 0
    %3884 = vmatpush1.bf16.msra.mxu0 %v3849
    %3885 = vmatprep.subr.bf16.mxu0 0
    %3886 = vmatpush1.bf16.msra.mxu0 %v3850
    %3887 = vmatprep.subr.bf16.mxu0 0
    %3888 = vmatpush1.bf16.msra.mxu0 %v3851
    %3889 = vmatprep.subr.bf16.mxu0 0
    %3890 = vmatpush1.bf16.msra.mxu0 %v3852
    %3891 = vmatprep.subr.bf16.mxu0 0
    %3892 = vmatpush1.bf16.msra.mxu0 %v3853
    %3893 = vmatprep.subr.bf16.mxu0 0
    %3894 = vmatpush1.bf16.msra.mxu0 %v3854
    %3895 = vmatprep.subr.bf16.mxu0 0
    %3896 = vmatpush1.bf16.msra.mxu0 %v3855
    %3897 = vmatprep.subr.bf16.mxu0 0
    %3898 = vmatpush1.bf16.msra.mxu0 %v3856
    %3899 = vmatprep.subr.bf16.mxu0 0
    %3900 = vmatpush1.bf16.msra.mxu0 %v3857
    %3901 = vmatprep.subr.bf16.mxu0 0
    %3902 = vmatpush1.bf16.msra.mxu0 %v3858
    %3903 = vmatprep.subr.bf16.mxu0 0
    %3904 = vmatpush1.bf16.msra.mxu0 %v3859
    %3905 = vmatprep.subr.bf16.mxu0 0
    %3906 = vmatpush1.bf16.msra.mxu0 %v3860
    %3907 = vmatprep.subr.bf16.mxu0 0
    %3908 = vmatpush1.bf16.msra.mxu0 %v3861
    %3909 = vmatprep.subr.bf16.mxu0 0
    %3910 = vmatpush1.bf16.msra.mxu0 %v3862
    %3911 = vmatprep.mubr.bf16.mxu0 %v3740
    %3912 = vmatmul.mubr.bf16.gmra.mrb[0].mxu0 %v3467
    %v3913 = vpop.f32.mrb[0].mxu0
    %v3914 = vadd.f32 %v3781, %v3913
    %v3915 = vpop.f32.mrb[0].mxu0
    %v3916 = vpop.f32.mrb[0].mxu0
    %v3917 = vadd.f32 %v3781, %v3916
    %v3918 = vpop.f32.mrb[0].mxu0
    %3919 = vmatprep.mubr.bf16.mxu0 %v3741
    %3920 = vmatmul.mubr.bf16.gmra.mrb[0].mxu0 %v3468
    %v3921 = vpop.f32.mrb[0].mxu0
    %v3922 = vadd.f32 %v3781, %v3921
    %v3923 = vpop.f32.mrb[0].mxu0
    %v3924 = vpop.f32.mrb[0].mxu0
    %v3925 = vadd.f32 %v3781, %v3924
    %v3926 = vpop.f32.mrb[0].mxu0
    %3927 = vmatprep.mubr.bf16.mxu0 %v3742
    %3928 = vmatmul.mubr.bf16.gmra.mrb[0].mxu0 %v3469
    %v3929 = vpop.f32.mrb[0].mxu0
    %v3930 = vadd.f32 %v3781, %v3929
    %v3931 = vpop.f32.mrb[0].mxu0
    %v3932 = vpop.f32.mrb[0].mxu0
    %v3933 = vadd.f32 %v3781, %v3932
    %v3934 = vpop.f32.mrb[0].mxu0
    %3935 = vmatprep.mubr.bf16.mxu0 %v3743
    %3936 = vmatmul.mubr.bf16.gmra.mrb[0].mxu0 %v3470
    %v3937 = vpop.f32.mrb[0].mxu0
    %v3938 = vadd.f32 %v3781, %v3937
    %v3939 = vpop.f32.mrb[0].mxu0
    %v3940 = vpop.f32.mrb[0].mxu0
    %v3941 = vadd.f32 %v3781, %v3940
    %v3942 = vpop.f32.mrb[0].mxu0
    %3943 = vdwg.mxu0
    %3944 = vmax.xlane.f32.xlu0 %v3914
    %v3945 = vpop.xlane.xlu0 %3944
    %3946 = vmax.xlane.f32.xlu0 %v3917
    %v3947 = vpop.xlane.xlu0 %3946
    %3948 = vmax.xlane.f32.xlu0 %v3922
    %v3949 = vpop.xlane.xlu0 %3948
    %3950 = vmax.xlane.f32.xlu0 %v3925
    %v3951 = vpop.xlane.xlu0 %3950
    %3952 = vmax.xlane.f32.xlu0 %v3930
    %v3953 = vpop.xlane.xlu0 %3952
    %3954 = vmax.xlane.f32.xlu0 %v3933
    %v3955 = vpop.xlane.xlu0 %3954
    %3956 = vmax.xlane.f32.xlu0 %v3938
    %v3957 = vpop.xlane.xlu0 %3956
    %3958 = vmax.xlane.f32.xlu0 %v3941
    %v3959 = vpop.xlane.xlu0 %3958
    %v3960 = vsub.f32 %v3914, %v3945
    %v3961 = vsub.f32 %v3917, %v3947
    %v3962 = vsub.f32 %v3922, %v3949
    %v3963 = vsub.f32 %v3925, %v3951
    %v3964 = vsub.f32 %v3930, %v3953
    %v3965 = vsub.f32 %v3933, %v3955
    %v3966 = vsub.f32 %v3938, %v3957
    %v3967 = vsub.f32 %v3941, %v3959
    %v3968 = vmul.f32 %v3960, 1.442695
    %v3969 = vpow.pop %v3968
    %v3970 = vmul.f32 %v3961, 1.442695
    %v3971 = vpow.pop %v3970
    %v3972 = vmul.f32 %v3962, 1.442695
    %v3973 = vpow.pop %v3972
    %v3974 = vmul.f32 %v3963, 1.442695
    %v3975 = vpow.pop %v3974
    %v3976 = vmul.f32 %v3964, 1.442695
    %v3977 = vpow.pop %v3976
    %v3978 = vmul.f32 %v3965, 1.442695
    %v3979 = vpow.pop %v3978
    %v3980 = vmul.f32 %v3966, 1.442695
    %v3981 = vpow.pop %v3980
    %v3982 = vmul.f32 %v3967, 1.442695
    %v3983 = vpow.pop %v3982
    %3984 = vadd.xlane.f32.xlu0 %v3969
    %v3985 = vpop.xlane.xlu0 %3984
    %3986 = vadd.xlane.f32.xlu0 %v3971
    %v3987 = vpop.xlane.xlu0 %3986
    %3988 = vadd.xlane.f32.xlu0 %v3973
    %v3989 = vpop.xlane.xlu0 %3988
    %3990 = vadd.xlane.f32.xlu0 %v3975
    %v3991 = vpop.xlane.xlu0 %3990
    %3992 = vadd.xlane.f32.xlu0 %v3977
    %v3993 = vpop.xlane.xlu0 %3992
    %3994 = vadd.xlane.f32.xlu0 %v3979
    %v3995 = vpop.xlane.xlu0 %3994
    %3996 = vadd.xlane.f32.xlu0 %v3981
    %v3997 = vpop.xlane.xlu0 %3996
    %3998 = vadd.xlane.f32.xlu0 %v3983
    %v3999 = vpop.xlane.xlu0 %3998
    %v4000 = vlog2.pop %v3985
    %v4001 = vmul.f32 %v4000, 0.6931472
    %v4002 = vlog2.pop %v3987
    %v4003 = vmul.f32 %v4002, 0.6931472
    %v4004 = vlog2.pop %v3989
    %v4005 = vmul.f32 %v4004, 0.6931472
    %v4006 = vlog2.pop %v3991
    %v4007 = vmul.f32 %v4006, 0.6931472
    %v4008 = vlog2.pop %v3993
    %v4009 = vmul.f32 %v4008, 0.6931472
    %v4010 = vlog2.pop %v3995
    %v4011 = vmul.f32 %v4010, 0.6931472
    %v4012 = vlog2.pop %v3997
    %v4013 = vmul.f32 %v4012, 0.6931472
    %v4014 = vlog2.pop %v3999
    %v4015 = vmul.f32 %v4014, 0.6931472
    %v4016 = vsub.f32 %v3960, %v4001
    %v4017 = vsub.f32 %v3961, %v4003
    %v4018 = vsub.f32 %v3962, %v4005
    %v4019 = vsub.f32 %v3963, %v4007
    %v4020 = vsub.f32 %v3964, %v4009
    %v4021 = vsub.f32 %v3965, %v4011
    %v4022 = vsub.f32 %v3966, %v4013
    %v4023 = vsub.f32 %v3967, %v4015
    %v4032 = vrot.slane %v4017, 7
    %v4033 = vsel %vm926, %v4032, %v4016
    %v4034 = vrot.slane %v4018, 6
    %v4035 = vsel %vm928, %v4034, %v4033
    %v4036 = vrot.slane %v4019, 5
    %v4037 = vsel %vm930, %v4036, %v4035
    %v4038 = vrot.slane %v4020, 4
    %v4039 = vsel %vm932, %v4038, %v4037
    %v4040 = vrot.slane %v4021, 3
    %v4041 = vsel %vm934, %v4040, %v4039
    %v4042 = vrot.slane %v4022, 2
    %v4043 = vsel %vm936, %v4042, %v4041
    %v4044 = vrot.slane %v4023, 1
    %v4045 = vsel %vm938, %v4044, %v4043
    %4047 = vst [vmem:[#allocation14] sm:$0xff] %v4045
    %v4048 = vsel %vm928, %v4032, %v4016
    %v4049 = vsel %vm930, %v4034, %v4048
    %v4050 = vsel %vm932, %v4036, %v4049
    %v4051 = vsel %vm934, %v4038, %v4050
    %v4052 = vsel %vm936, %v4040, %v4051
    %v4053 = vsel %vm938, %v4042, %v4052
    %s4056 = scalar_lea.vmem [#allocation14], 8
    %4057 = vst [vmem:[%s4056 - $0x1] sm:$0xfe] %v4053
    %4058 = vst [vmem:[%s4056 + $0x7] sm:$0x1] %v4044
    %v4059 = vsel %vm930, %v4032, %v4016
    %v4060 = vsel %vm932, %v4034, %v4059
    %v4061 = vsel %vm934, %v4036, %v4060
    %v4062 = vsel %vm936, %v4038, %v4061
    %v4063 = vsel %vm938, %v4040, %v4062
    %v4064 = vsel %vm926, %v4044, %v4042
    %s4067 = scalar_lea.vmem [#allocation14], 16
    %4068 = vst [vmem:[%s4067 - $0x2] sm:$0xfc] %v4063
    %4069 = vst [vmem:[%s4067 + $0x6] sm:$0x3] %v4064
    %v4070 = vsel %vm932, %v4032, %v4016
    %v4071 = vsel %vm934, %v4034, %v4070
    %v4072 = vsel %vm936, %v4036, %v4071
    %v4073 = vsel %vm938, %v4038, %v4072
    %v4074 = vsel %vm926, %v4042, %v4040
    %v4075 = vsel %vm928, %v4044, %v4074
    %s4078 = scalar_lea.vmem [#allocation14], 24
    %4079 = vst [vmem:[%s4078 - $0x3] sm:$0xf8] %v4073
    %4080 = vst [vmem:[%s4078 + $0x5] sm:$0x7] %v4075
    %v4081 = vsel %vm934, %v4032, %v4016
    %v4082 = vsel %vm936, %v4034, %v4081
    %v4083 = vsel %vm938, %v4036, %v4082
    %v4084 = vsel %vm926, %v4040, %v4038
    %v4085 = vsel %vm928, %v4042, %v4084
    %v4086 = vsel %vm930, %v4044, %v4085
    %s4089 = scalar_lea.vmem [#allocation14], 32
    %4090 = vst [vmem:[%s4089 - $0x4] sm:$0xf0] %v4083
    %4091 = vst [vmem:[%s4089 + $0x4] sm:$0xf] %v4086
    %v4092 = vsel %vm936, %v4032, %v4016
    %v4093 = vsel %vm938, %v4034, %v4092
    %v4094 = vsel %vm926, %v4038, %v4036
    %v4095 = vsel %vm928, %v4040, %v4094
    %v4096 = vsel %vm930, %v4042, %v4095
    %v4097 = vsel %vm932, %v4044, %v4096
    %s4100 = scalar_lea.vmem [#allocation14], 40
    %4101 = vst [vmem:[%s4100 - $0x5] sm:$0xe0] %v4093
    %4102 = vst [vmem:[%s4100 + $0x3] sm:$0x1f] %v4097
    %v4103 = vsel %vm938, %v4032, %v4016
    %v4104 = vsel %vm926, %v4036, %v4034
    %v4105 = vsel %vm928, %v4038, %v4104
    %v4106 = vsel %vm930, %v4040, %v4105
    %v4107 = vsel %vm932, %v4042, %v4106
    %v4108 = vsel %vm934, %v4044, %v4107
    %s4111 = scalar_lea.vmem [#allocation14], 48
    %4112 = vst [vmem:[%s4111 - $0x6] sm:$0xc0] %v4103
    %4113 = vst [vmem:[%s4111 + $0x2] sm:$0x3f] %v4108
    %v4114 = vsel %vm926, %v4034, %v4032
    %v4115 = vsel %vm928, %v4036, %v4114
    %v4116 = vsel %vm930, %v4038, %v4115
    %v4117 = vsel %vm932, %v4040, %v4116
    %v4118 = vsel %vm934, %v4042, %v4117
    %v4119 = vsel %vm936, %v4044, %v4118
    %s4122 = scalar_lea.vmem [#allocation14], 56
    %4123 = vst [vmem:[%s4122 - $0x7] sm:$0x80] %v4016
    %4124 = vst [vmem:[%s4122 + $0x1] sm:$0x7f] %v4119
    // Predicated region
    $region86: #{seq2seq_gnn_forward.1} parent=1 // pred_check
      _
    $region87: #{seq2seq_gnn_forward.1} parent=1 // pred_check_branch
      %4126 = sbr.rel (0) target = $region89
    $region88: #{seq2seq_gnn_forward.1} parent=1 // pred_region
      %s4128 = ssub.s32 1024, 1024
      %4129 = vsyncadd [#allocation4], %s4128
      %s4130 = sshll.u32 [#allocation14], 4
      %s4131 = int_to_ptr.vmem [resolvable:$true] %s4130
      %4136 = dma.vmem_to_hbm [thread:$0]  %s4131, 1024, %s14, [#allocation4], 128, 128, 8
    $region89: #{seq2seq_gnn_forward.1} parent=1 // pred_fallthru
      _
    // Predicated region
    $region90: #{seq2seq_gnn_forward.1} parent=1 // pred_check
      _
    $region91: #{seq2seq_gnn_forward.1} parent=1 // pred_check_branch
      %4138 = sbr.rel (0) target = $region93
    $region92: #{seq2seq_gnn_forward.1} parent=1 // pred_region
      %4139 = dma.done [#allocation4], 1024
    $region93: #{seq2seq_gnn_forward.1} parent=1 // pred_fallthru
      _
    %4140 = vsyncpa [#allocation3], 1
    %4141 = vsyncpa [#allocation6], 1
    %4142 = vsyncpa [#allocation9], 1
    %4143 = vsyncpa [#allocation12], 1
    %4144 = vsyncpa [#allocation4], 1

</llo_original>
